<compile_context>
chip_gen: v5e
topology: v5e:2x2
jax: 0.10.0
libtpu: 0.0.40
codegen_flags: <defaults>
</compile_context>

<pallas_src>
import functools

import jax
import jax.numpy as jnp
from jax import lax
from jax.experimental import pallas as pl
from jax.experimental.pallas import tpu as pltpu


K = 5  # ConvTranspose2d kernel size (fixed by the module: k=5, s=2, p=2, op=1)


# --------------------------- parameter handling -------------------------------
def init_rn_params(key, input_dims, output_dim):
    """Parameters in PyTorch layout (Linear: [Dout, Din]; ConvT: [Cin, Cout, K, K])."""
    com_height = input_dims[0] // 4
    com_width = input_dims[1] // 4
    c_out = input_dims[2]
    k1, k2, k3, k4, k5, k6 = jax.random.split(key, 6)
    return {
        "com_height": com_height,
        "com_width": com_width,
        "fc1_w": 0.1 * jax.random.normal(
            k1, (6 * com_height * com_width, output_dim), jnp.float32),
        "fc1_b": 0.1 * jax.random.normal(
            k2, (6 * com_height * com_width,), jnp.float32),
        "conv1_w": 0.1 * jax.random.normal(k3, (6, 16, K, K), jnp.float32),
        "conv1_b": 0.1 * jax.random.normal(k4, (16,), jnp.float32),
        "conv2_w": 0.1 * jax.random.normal(k5, (16, c_out, K, K), jnp.float32),
        "conv2_b": 0.1 * jax.random.normal(k6, (c_out,), jnp.float32),
    }


def prepare_rn_params(params, batch):
    """One-time transformation of the weights into kernel-ready layout.

    Lane ordering everywhere is (channel, batch): lane index = c * B + b.
    """
    B = batch
    cw, ch = params["com_width"], params["com_height"]
    c1i, c1o = 6, 16
    c_out = params["conv2_w"].shape[1]
    din = params["fc1_w"].shape[1]

    # fc1 weight -> rows = zero-padded (cw+2, ch+2) spatial grid, cols = (c, d),
    # so the single fc matmul directly produces the padded conv1 input.
    w1 = params["fc1_w"].reshape(c1i, cw, ch, din)            # [c, i, j, d]
    w1 = jnp.transpose(w1, (1, 2, 0, 3)).reshape(cw, ch, c1i * din)
    l1p = jnp.zeros((cw + 2, ch + 2, c1i * din), jnp.float32)
    l1p = l1p.at[1:cw + 1, 1:ch + 1, :].set(w1)
    l1p = l1p.reshape((cw + 2) * (ch + 2), c1i * din)

    b1 = params["fc1_b"].reshape(c1i, cw, ch)
    b1 = jnp.repeat(jnp.transpose(b1, (1, 2, 0)), B, axis=-1)  # [i, j, (c,b)]
    b1p = jnp.zeros((cw + 2, ch + 2, c1i * B), jnp.float32)
    b1p = b1p.at[1:cw + 1, 1:ch + 1, :].set(b1)
    b1p = b1p.reshape((cw + 2) * (ch + 2), c1i * B)

    # ConvTranspose weights -> per-(kh,kw) block-diagonal taps kron(W, I_B),
    # shape [K, K, Cin*B, Cout*B]; batch rides along in the lane dimension.
    eye_b = jnp.eye(B, dtype=jnp.float32)

    def block_diag_taps(w):                                    # w: [Cin, Cout, K, K]
        cin, cout = w.shape[0], w.shape[1]
        blk = jnp.einsum("cokl,ab->klcaob", w, eye_b)
        return blk.reshape(K, K, cin * B, cout * B)

    return {
        "l1p": l1p,
        "b1p": b1p,
        "w1blk": block_diag_taps(params["conv1_w"]),
        "b1c": jnp.repeat(params["conv1_b"], B)[None, :],      # [1, 16*B]
        "w2blk": block_diag_taps(params["conv2_w"]),
        "b2c": jnp.repeat(params["conv2_b"], B)[None, :],      # [1, C*B]
    }


# ------------------------------ fused kernel ----------------------------------
def _phase_deconv(xp, w_ref, bias, h, w, cin_b, cout_b, act):
    """ConvTranspose2d(k=5, s=2, p=2, op=1) via the 4-phase decomposition.

    xp    : [h+2, w+2, cin_b]   input zero-padded by 1, lanes = (channel, batch)
    w_ref : [K, K, cin_b, cout_b] block-diagonal tap weights (PyTorch kh/kw order)
    returns [2h, 2w, cout_b]
    """
    phase = {}
    for r in (0, 1):
        for s in (0, 1):
            acc = jnp.zeros((h * w, cout_b), jnp.float32)
            for th in ((0, 1, 2) if r == 0 else (1, 2)):
                for tw in ((0, 1, 2) if s == 0 else (1, 2)):
                    patch = xp[th:th + h, tw:tw + w, :].reshape(h * w, cin_b)
                    acc = acc + jnp.dot(
                        patch, w_ref[K - 1 - 2 * th + r, K - 1 - 2 * tw + s],
                        preferred_element_type=jnp.float32)
            phase[(r, s)] = act(acc + bias).reshape(h, w, cout_b)
    # Interleave the four phases: y[2i+r, 2j+s, :] = phase[(r,s)][i, j, :].
    row0 = jnp.stack([phase[(0, 0)], phase[(0, 1)]], axis=2).reshape(h, 2 * w, cout_b)
    row1 = jnp.stack([phase[(1, 0)], phase[(1, 1)]], axis=2).reshape(h, 2 * w, cout_b)
    return jnp.stack([row0, row1], axis=1).reshape(2 * h, 2 * w, cout_b)


def _rn_fused_kernel(r_ref, l1_ref, b1p_ref, w1_ref, b1c_ref, w2_ref, b2c_ref,
                     o_ref, *, cw, ch, nb, c1i, c1o, c_out):
    # fc1 + relu: lands directly on the zero-padded (cw+2, ch+2) grid,
    # lanes = (conv1 input channel, batch).
    xp1 = jnp.dot(l1_ref[...], r_ref[...], preferred_element_type=jnp.float32)
    xp1 = jnp.maximum(xp1 + b1p_ref[...], 0.0)
    xp1 = xp1.reshape(cw + 2, ch + 2, c1i * nb)

    # conv1 (ConvTranspose2d(6,16)) + relu, fully on-chip.
    y1 = _phase_deconv(xp1, w1_ref, b1c_ref[...], cw, ch, c1i * nb, c1o * nb,
                       lambda v: jnp.maximum(v, 0.0))          # [2cw, 2ch, 16*nb]

    # zero-pad by 1 for conv2 (no HBM round trip).
    zr = jnp.zeros((1, 2 * ch, c1o * nb), jnp.float32)
    y1p = jnp.concatenate([zr, y1, zr], axis=0)
    zc = jnp.zeros((2 * cw + 2, 1, c1o * nb), jnp.float32)
    y1p = jnp.concatenate([zc, y1p, zc], axis=1)               # [2cw+2, 2ch+2, 16*nb]

    # conv2 (ConvTranspose2d(16, C)) + sigmoid.
    y2 = _phase_deconv(y1p, w2_ref, b2c_ref[...], 2 * cw, 2 * ch,
                       c1o * nb, c_out * nb, jax.nn.sigmoid)   # [4cw, 4ch, C*nb]

    o_ref[...] = y2.astype(o_ref.dtype)


def rn_forward(prep, x, *, cw, ch, c1i=6, c1o=16, c_out=3):
    nb, din = x.shape
    ho, wo = 4 * cw, 4 * ch
    np1 = (cw + 2) * (ch + 2)

    # kron(I_6, x^T): lets a single matmul produce the fc1 output with lanes
    # ordered (channel, batch).  Only per-call glue besides the final
    # un-permute of the 6 KiB output.
    r_exp = jnp.kron(jnp.eye(c1i, dtype=x.dtype), x.T)          # [6*din, 6*nb]

    kern = functools.partial(_rn_fused_kernel, cw=cw, ch=ch, nb=nb,
                             c1i=c1i, c1o=c1o, c_out=c_out)
    out = pl.pallas_call(
        kern,
        out_shape=jax.ShapeDtypeStruct((ho, wo, c_out * nb), jnp.float32),
        grid=(1,),
        in_specs=[
            pl.BlockSpec((c1i * din, c1i * nb), lambda i: (0, 0)),
            pl.BlockSpec((np1, c1i * din), lambda i: (0, 0)),
            pl.BlockSpec((np1, c1i * nb), lambda i: (0, 0)),
            pl.BlockSpec((K, K, c1i * nb, c1o * nb), lambda i: (0, 0, 0, 0)),
            pl.BlockSpec((1, c1o * nb), lambda i: (0, 0)),
            pl.BlockSpec((K, K, c1o * nb, c_out * nb), lambda i: (0, 0, 0, 0)),
            pl.BlockSpec((1, c_out * nb), lambda i: (0, 0)),
        ],
        out_specs=pl.BlockSpec((ho, wo, c_out * nb), lambda i: (0, 0, 0)),
        compiler_params=pltpu.CompilerParams(dimension_semantics=("arbitrary",)),
    )(r_exp, prep["l1p"], prep["b1p"], prep["w1blk"], prep["b1c"],
      prep["w2blk"], prep["b2c"])

    # lanes are (channel, batch): un-permute the tiny output to NCHW.
    out = out.reshape(ho, wo, c_out, nb)
    return jnp.transpose(out, (3, 2, 0, 1))                    # [B, C, 4*cw, 4*ch]


# --------------------------- pure-JAX reference --------------------------------
def _ref_conv_transpose(x_nhwc, w_t, bias):
    w_conv = jnp.flip(w_t, axis=(2, 3)).transpose(2, 3, 0, 1)  # HWIO
    y = lax.conv_general_dilated(
        x_nhwc, w_conv, window_strides=(1, 1), padding=((2, 3), (2, 3)),
        lhs_dilation=(2, 2), dimension_numbers=("NHWC", "HWIO", "NHWC"))
    return y + bias.reshape(1, 1, 1, -1)


def rn_forward_ref(params, x):
    B = x.shape[0]
    ch, cw = params["com_height"], params["com_width"]
    h = jnp.maximum(x @ params["fc1_w"].T + params["fc1_b"], 0.0)
    h = h.reshape(B, 6, cw, ch)
    h = jnp.transpose(h, (0, 2, 3, 1))                         # NHWC
    h = jnp.maximum(_ref_conv_transpose(h, params["conv1_w"], params["conv1_b"]), 0.0)
    h = jax.nn.sigmoid(_ref_conv_transpose(h, params["conv2_w"], params["conv2_b"]))
    return jnp.transpose(h, (0, 3, 1, 2))                      # NCHW


# --------------------------------- main -----------------------------------------
if __name__ == "__main__":
    input_dims = (16, 16, 3)   # (H, W, C) of the target image
    output_dim = 32            # latent dim fed to fc1
    batch = 2

    params = init_rn_params(jax.random.PRNGKey(42), input_dims, output_dim)
    prep = prepare_rn_params(params, batch)    # one-time weight preparation
    x = jax.random.normal(jax.random.PRNGKey(0), (batch, output_dim), jnp.float32)

    fwd = jax.jit(functools.partial(
        rn_forward,
        cw=params["com_width"], ch=params["com_height"],
        c1i=6, c1o=16, c_out=input_dims[2]))

    out = jax.block_until_ready(fwd(prep, x))
    ref = jax.block_until_ready(rn_forward_ref(params, x))

    assert out.shape == (batch, input_dims[2],
                         4 * (input_dims[1] // 4), 4 * (input_dims[0] // 4)), out.shape
    assert jnp.allclose(out, ref, atol=2e-5, rtol=2e-5), \
        float(jnp.max(jnp.abs(out - ref)))

    print("KERNEL_OK")
</pallas_src>

<mosaic_0001>
module attributes {stable_mosaic.version = 11 : i64} {
  func.func @_rn_fused_kernel(%arg0: i32, %arg1: memref<192x12xf32, #tpu.memory_space<vmem>>, %arg2: memref<36x192xf32, #tpu.memory_space<vmem>>, %arg3: memref<36x12xf32, #tpu.memory_space<vmem>>, %arg4: memref<5x5x12x32xf32, #tpu.memory_space<vmem>>, %arg5: memref<1x32xf32, #tpu.memory_space<vmem>>, %arg6: memref<5x5x32x6xf32, #tpu.memory_space<vmem>>, %arg7: memref<1x6xf32, #tpu.memory_space<vmem>>, %arg8: memref<16x16x6xf32, #tpu.memory_space<vmem>>) attributes {dimension_semantics = [#tpu.dimension_semantics<arbitrary>], iteration_bounds = array<i64: 1>, scalar_prefetch = 0 : i64, scratch_operands = 0 : i64, tpu.core_type = #tpu.core_type<tc>, window_params = [{pipeline_mode = #tpu.pipeline_mode<synchronous>, transform_indices = @transform_0, window_bounds = array<i64: 192, 12>}, {pipeline_mode = #tpu.pipeline_mode<synchronous>, transform_indices = @transform_1, window_bounds = array<i64: 36, 192>}, {pipeline_mode = #tpu.pipeline_mode<synchronous>, transform_indices = @transform_2, window_bounds = array<i64: 36, 12>}, {pipeline_mode = #tpu.pipeline_mode<synchronous>, transform_indices = @transform_3, window_bounds = array<i64: 5, 5, 12, 32>}, {pipeline_mode = #tpu.pipeline_mode<synchronous>, transform_indices = @transform_4, window_bounds = array<i64: 1, 32>}, {pipeline_mode = #tpu.pipeline_mode<synchronous>, transform_indices = @transform_5, window_bounds = array<i64: 5, 5, 32, 6>}, {pipeline_mode = #tpu.pipeline_mode<synchronous>, transform_indices = @transform_6, window_bounds = array<i64: 1, 6>}, {pipeline_mode = #tpu.pipeline_mode<synchronous>, transform_indices = @transform_7, window_bounds = array<i64: 16, 16, 6>}]} {
    %c0 = arith.constant 0 : index
    %c0_0 = arith.constant 0 : index
    %0 = vector.load %arg2[%c0, %c0_0] : memref<36x192xf32, #tpu.memory_space<vmem>>, vector<36x192xf32>
    %c0_1 = arith.constant 0 : index
    %c0_2 = arith.constant 0 : index
    %1 = vector.load %arg1[%c0_1, %c0_2] : memref<192x12xf32, #tpu.memory_space<vmem>>, vector<192x12xf32>
    %cst = arith.constant dense<0.000000e+00> : vector<36x12xf32>
    %2 = tpu.matmul %0, %1, %cst {dimension_numbers = #tpu.dot_dimension_numbers<[1], [0], [0], [1], [0, 0, 1, 1], [], []>} : vector<36x192xf32>, vector<192x12xf32>, vector<36x12xf32> -> vector<36x12xf32>
    %c0_3 = arith.constant 0 : index
    %c0_4 = arith.constant 0 : index
    %3 = vector.load %arg3[%c0_3, %c0_4] : memref<36x12xf32, #tpu.memory_space<vmem>>, vector<36x12xf32>
    %4 = arith.addf %2, %3 : vector<36x12xf32>
    %cst_5 = arith.constant 0.000000e+00 : f32
    %5 = vector.broadcast %cst_5 : f32 to vector<36x12xf32>
    %6 = arith.maximumf %4, %5 : vector<36x12xf32>
    %7 = vector.shape_cast %6 : vector<36x12xf32> to vector<6x6x12xf32>
    %c0_6 = arith.constant 0 : index
    %c0_7 = arith.constant 0 : index
    %8 = vector.load %arg5[%c0_6, %c0_7] : memref<1x32xf32, #tpu.memory_space<vmem>>, vector<1x32xf32>
    %cst_8 = arith.constant 0.000000e+00 : f32
    %9 = vector.broadcast %cst_8 : f32 to vector<16x32xf32>
    %10 = vector.extract_strided_slice %7 {offsets = [0, 0, 0], sizes = [4, 4, 12], strides = [1, 1, 1]} : vector<6x6x12xf32> to vector<4x4x12xf32>
    %11 = vector.shape_cast %10 : vector<4x4x12xf32> to vector<16x12xf32>
    %c4 = arith.constant 4 : index
    %c4_9 = arith.constant 4 : index
    %c0_10 = arith.constant 0 : index
    %c0_11 = arith.constant 0 : index
    %12 = vector.load %arg4[%c4, %c4_9, %c0_10, %c0_11] : memref<5x5x12x32xf32, #tpu.memory_space<vmem>>, vector<1x1x12x32xf32>
    %13 = vector.shape_cast %12 : vector<1x1x12x32xf32> to vector<12x32xf32>
    %cst_12 = arith.constant dense<0.000000e+00> : vector<16x32xf32>
    %14 = tpu.matmul %11, %13, %cst_12 {dimension_numbers = #tpu.dot_dimension_numbers<[1], [0], [0], [1], [0, 0, 1, 1], [], []>} : vector<16x12xf32>, vector<12x32xf32>, vector<16x32xf32> -> vector<16x32xf32>
    %15 = arith.addf %9, %14 : vector<16x32xf32>
    %16 = vector.extract_strided_slice %7 {offsets = [0, 1, 0], sizes = [4, 4, 12], strides = [1, 1, 1]} : vector<6x6x12xf32> to vector<4x4x12xf32>
    %17 = vector.shape_cast %16 : vector<4x4x12xf32> to vector<16x12xf32>
    %c4_13 = arith.constant 4 : index
    %c2 = arith.constant 2 : index
    %c0_14 = arith.constant 0 : index
    %c0_15 = arith.constant 0 : index
    %18 = vector.load %arg4[%c4_13, %c2, %c0_14, %c0_15] : memref<5x5x12x32xf32, #tpu.memory_space<vmem>>, vector<1x1x12x32xf32>
    %19 = vector.shape_cast %18 : vector<1x1x12x32xf32> to vector<12x32xf32>
    %cst_16 = arith.constant dense<0.000000e+00> : vector<16x32xf32>
    %20 = tpu.matmul %17, %19, %cst_16 {dimension_numbers = #tpu.dot_dimension_numbers<[1], [0], [0], [1], [0, 0, 1, 1], [], []>} : vector<16x12xf32>, vector<12x32xf32>, vector<16x32xf32> -> vector<16x32xf32>
    %21 = arith.addf %15, %20 : vector<16x32xf32>
    %22 = vector.extract_strided_slice %7 {offsets = [0, 2, 0], sizes = [4, 4, 12], strides = [1, 1, 1]} : vector<6x6x12xf32> to vector<4x4x12xf32>
    %23 = vector.shape_cast %22 : vector<4x4x12xf32> to vector<16x12xf32>
    %c4_17 = arith.constant 4 : index
    %c0_18 = arith.constant 0 : index
    %c0_19 = arith.constant 0 : index
    %c0_20 = arith.constant 0 : index
    %24 = vector.load %arg4[%c4_17, %c0_18, %c0_19, %c0_20] : memref<5x5x12x32xf32, #tpu.memory_space<vmem>>, vector<1x1x12x32xf32>
    %25 = vector.shape_cast %24 : vector<1x1x12x32xf32> to vector<12x32xf32>
    %cst_21 = arith.constant dense<0.000000e+00> : vector<16x32xf32>
    %26 = tpu.matmul %23, %25, %cst_21 {dimension_numbers = #tpu.dot_dimension_numbers<[1], [0], [0], [1], [0, 0, 1, 1], [], []>} : vector<16x12xf32>, vector<12x32xf32>, vector<16x32xf32> -> vector<16x32xf32>
    %27 = arith.addf %21, %26 : vector<16x32xf32>
    %28 = vector.extract_strided_slice %7 {offsets = [1, 0, 0], sizes = [4, 4, 12], strides = [1, 1, 1]} : vector<6x6x12xf32> to vector<4x4x12xf32>
    %29 = vector.shape_cast %28 : vector<4x4x12xf32> to vector<16x12xf32>
    %c2_22 = arith.constant 2 : index
    %c4_23 = arith.constant 4 : index
    %c0_24 = arith.constant 0 : index
    %c0_25 = arith.constant 0 : index
    %30 = vector.load %arg4[%c2_22, %c4_23, %c0_24, %c0_25] : memref<5x5x12x32xf32, #tpu.memory_space<vmem>>, vector<1x1x12x32xf32>
    %31 = vector.shape_cast %30 : vector<1x1x12x32xf32> to vector<12x32xf32>
    %cst_26 = arith.constant dense<0.000000e+00> : vector<16x32xf32>
    %32 = tpu.matmul %29, %31, %cst_26 {dimension_numbers = #tpu.dot_dimension_numbers<[1], [0], [0], [1], [0, 0, 1, 1], [], []>} : vector<16x12xf32>, vector<12x32xf32>, vector<16x32xf32> -> vector<16x32xf32>
    %33 = arith.addf %27, %32 : vector<16x32xf32>
    %34 = vector.extract_strided_slice %7 {offsets = [1, 1, 0], sizes = [4, 4, 12], strides = [1, 1, 1]} : vector<6x6x12xf32> to vector<4x4x12xf32>
    %35 = vector.shape_cast %34 : vector<4x4x12xf32> to vector<16x12xf32>
    %c2_27 = arith.constant 2 : index
    %c2_28 = arith.constant 2 : index
    %c0_29 = arith.constant 0 : index
    %c0_30 = arith.constant 0 : index
    %36 = vector.load %arg4[%c2_27, %c2_28, %c0_29, %c0_30] : memref<5x5x12x32xf32, #tpu.memory_space<vmem>>, vector<1x1x12x32xf32>
    %37 = vector.shape_cast %36 : vector<1x1x12x32xf32> to vector<12x32xf32>
    %cst_31 = arith.constant dense<0.000000e+00> : vector<16x32xf32>
    %38 = tpu.matmul %35, %37, %cst_31 {dimension_numbers = #tpu.dot_dimension_numbers<[1], [0], [0], [1], [0, 0, 1, 1], [], []>} : vector<16x12xf32>, vector<12x32xf32>, vector<16x32xf32> -> vector<16x32xf32>
    %39 = arith.addf %33, %38 : vector<16x32xf32>
    %40 = vector.extract_strided_slice %7 {offsets = [1, 2, 0], sizes = [4, 4, 12], strides = [1, 1, 1]} : vector<6x6x12xf32> to vector<4x4x12xf32>
    %41 = vector.shape_cast %40 : vector<4x4x12xf32> to vector<16x12xf32>
    %c2_32 = arith.constant 2 : index
    %c0_33 = arith.constant 0 : index
    %c0_34 = arith.constant 0 : index
    %c0_35 = arith.constant 0 : index
    %42 = vector.load %arg4[%c2_32, %c0_33, %c0_34, %c0_35] : memref<5x5x12x32xf32, #tpu.memory_space<vmem>>, vector<1x1x12x32xf32>
    %43 = vector.shape_cast %42 : vector<1x1x12x32xf32> to vector<12x32xf32>
    %cst_36 = arith.constant dense<0.000000e+00> : vector<16x32xf32>
    %44 = tpu.matmul %41, %43, %cst_36 {dimension_numbers = #tpu.dot_dimension_numbers<[1], [0], [0], [1], [0, 0, 1, 1], [], []>} : vector<16x12xf32>, vector<12x32xf32>, vector<16x32xf32> -> vector<16x32xf32>
    %45 = arith.addf %39, %44 : vector<16x32xf32>
    %46 = vector.extract_strided_slice %7 {offsets = [2, 0, 0], sizes = [4, 4, 12], strides = [1, 1, 1]} : vector<6x6x12xf32> to vector<4x4x12xf32>
    %47 = vector.shape_cast %46 : vector<4x4x12xf32> to vector<16x12xf32>
    %c0_37 = arith.constant 0 : index
    %c4_38 = arith.constant 4 : index
    %c0_39 = arith.constant 0 : index
    %c0_40 = arith.constant 0 : index
    %48 = vector.load %arg4[%c0_37, %c4_38, %c0_39, %c0_40] : memref<5x5x12x32xf32, #tpu.memory_space<vmem>>, vector<1x1x12x32xf32>
    %49 = vector.shape_cast %48 : vector<1x1x12x32xf32> to vector<12x32xf32>
    %cst_41 = arith.constant dense<0.000000e+00> : vector<16x32xf32>
    %50 = tpu.matmul %47, %49, %cst_41 {dimension_numbers = #tpu.dot_dimension_numbers<[1], [0], [0], [1], [0, 0, 1, 1], [], []>} : vector<16x12xf32>, vector<12x32xf32>, vector<16x32xf32> -> vector<16x32xf32>
    %51 = arith.addf %45, %50 : vector<16x32xf32>
    %52 = vector.extract_strided_slice %7 {offsets = [2, 1, 0], sizes = [4, 4, 12], strides = [1, 1, 1]} : vector<6x6x12xf32> to vector<4x4x12xf32>
    %53 = vector.shape_cast %52 : vector<4x4x12xf32> to vector<16x12xf32>
    %c0_42 = arith.constant 0 : index
    %c2_43 = arith.constant 2 : index
    %c0_44 = arith.constant 0 : index
    %c0_45 = arith.constant 0 : index
    %54 = vector.load %arg4[%c0_42, %c2_43, %c0_44, %c0_45] : memref<5x5x12x32xf32, #tpu.memory_space<vmem>>, vector<1x1x12x32xf32>
    %55 = vector.shape_cast %54 : vector<1x1x12x32xf32> to vector<12x32xf32>
    %cst_46 = arith.constant dense<0.000000e+00> : vector<16x32xf32>
    %56 = tpu.matmul %53, %55, %cst_46 {dimension_numbers = #tpu.dot_dimension_numbers<[1], [0], [0], [1], [0, 0, 1, 1], [], []>} : vector<16x12xf32>, vector<12x32xf32>, vector<16x32xf32> -> vector<16x32xf32>
    %57 = arith.addf %51, %56 : vector<16x32xf32>
    %58 = vector.extract_strided_slice %7 {offsets = [2, 2, 0], sizes = [4, 4, 12], strides = [1, 1, 1]} : vector<6x6x12xf32> to vector<4x4x12xf32>
    %59 = vector.shape_cast %58 : vector<4x4x12xf32> to vector<16x12xf32>
    %c0_47 = arith.constant 0 : index
    %c0_48 = arith.constant 0 : index
    %c0_49 = arith.constant 0 : index
    %c0_50 = arith.constant 0 : index
    %60 = vector.load %arg4[%c0_47, %c0_48, %c0_49, %c0_50] : memref<5x5x12x32xf32, #tpu.memory_space<vmem>>, vector<1x1x12x32xf32>
    %61 = vector.shape_cast %60 : vector<1x1x12x32xf32> to vector<12x32xf32>
    %cst_51 = arith.constant dense<0.000000e+00> : vector<16x32xf32>
    %62 = tpu.matmul %59, %61, %cst_51 {dimension_numbers = #tpu.dot_dimension_numbers<[1], [0], [0], [1], [0, 0, 1, 1], [], []>} : vector<16x12xf32>, vector<12x32xf32>, vector<16x32xf32> -> vector<16x32xf32>
    %63 = arith.addf %57, %62 : vector<16x32xf32>
    %64 = vector.broadcast %8 : vector<1x32xf32> to vector<16x32xf32>
    %65 = arith.addf %63, %64 : vector<16x32xf32>
    %cst_52 = arith.constant 0.000000e+00 : f32
    %66 = vector.broadcast %cst_52 : f32 to vector<16x32xf32>
    %67 = arith.maximumf %65, %66 : vector<16x32xf32>
    %68 = vector.shape_cast %67 : vector<16x32xf32> to vector<4x4x32xf32>
    %cst_53 = arith.constant 0.000000e+00 : f32
    %69 = vector.broadcast %cst_53 : f32 to vector<16x32xf32>
    %70 = vector.extract_strided_slice %7 {offsets = [0, 1, 0], sizes = [4, 4, 12], strides = [1, 1, 1]} : vector<6x6x12xf32> to vector<4x4x12xf32>
    %71 = vector.shape_cast %70 : vector<4x4x12xf32> to vector<16x12xf32>
    %c4_54 = arith.constant 4 : index
    %c3 = arith.constant 3 : index
    %c0_55 = arith.constant 0 : index
    %c0_56 = arith.constant 0 : index
    %72 = vector.load %arg4[%c4_54, %c3, %c0_55, %c0_56] : memref<5x5x12x32xf32, #tpu.memory_space<vmem>>, vector<1x1x12x32xf32>
    %73 = vector.shape_cast %72 : vector<1x1x12x32xf32> to vector<12x32xf32>
    %cst_57 = arith.constant dense<0.000000e+00> : vector<16x32xf32>
    %74 = tpu.matmul %71, %73, %cst_57 {dimension_numbers = #tpu.dot_dimension_numbers<[1], [0], [0], [1], [0, 0, 1, 1], [], []>} : vector<16x12xf32>, vector<12x32xf32>, vector<16x32xf32> -> vector<16x32xf32>
    %75 = arith.addf %69, %74 : vector<16x32xf32>
    %76 = vector.extract_strided_slice %7 {offsets = [0, 2, 0], sizes = [4, 4, 12], strides = [1, 1, 1]} : vector<6x6x12xf32> to vector<4x4x12xf32>
    %77 = vector.shape_cast %76 : vector<4x4x12xf32> to vector<16x12xf32>
    %c4_58 = arith.constant 4 : index
    %c1 = arith.constant 1 : index
    %c0_59 = arith.constant 0 : index
    %c0_60 = arith.constant 0 : index
    %78 = vector.load %arg4[%c4_58, %c1, %c0_59, %c0_60] : memref<5x5x12x32xf32, #tpu.memory_space<vmem>>, vector<1x1x12x32xf32>
    %79 = vector.shape_cast %78 : vector<1x1x12x32xf32> to vector<12x32xf32>
    %cst_61 = arith.constant dense<0.000000e+00> : vector<16x32xf32>
    %80 = tpu.matmul %77, %79, %cst_61 {dimension_numbers = #tpu.dot_dimension_numbers<[1], [0], [0], [1], [0, 0, 1, 1], [], []>} : vector<16x12xf32>, vector<12x32xf32>, vector<16x32xf32> -> vector<16x32xf32>
    %81 = arith.addf %75, %80 : vector<16x32xf32>
    %82 = vector.extract_strided_slice %7 {offsets = [1, 1, 0], sizes = [4, 4, 12], strides = [1, 1, 1]} : vector<6x6x12xf32> to vector<4x4x12xf32>
    %83 = vector.shape_cast %82 : vector<4x4x12xf32> to vector<16x12xf32>
    %c2_62 = arith.constant 2 : index
    %c3_63 = arith.constant 3 : index
    %c0_64 = arith.constant 0 : index
    %c0_65 = arith.constant 0 : index
    %84 = vector.load %arg4[%c2_62, %c3_63, %c0_64, %c0_65] : memref<5x5x12x32xf32, #tpu.memory_space<vmem>>, vector<1x1x12x32xf32>
    %85 = vector.shape_cast %84 : vector<1x1x12x32xf32> to vector<12x32xf32>
    %cst_66 = arith.constant dense<0.000000e+00> : vector<16x32xf32>
    %86 = tpu.matmul %83, %85, %cst_66 {dimension_numbers = #tpu.dot_dimension_numbers<[1], [0], [0], [1], [0, 0, 1, 1], [], []>} : vector<16x12xf32>, vector<12x32xf32>, vector<16x32xf32> -> vector<16x32xf32>
    %87 = arith.addf %81, %86 : vector<16x32xf32>
    %88 = vector.extract_strided_slice %7 {offsets = [1, 2, 0], sizes = [4, 4, 12], strides = [1, 1, 1]} : vector<6x6x12xf32> to vector<4x4x12xf32>
    %89 = vector.shape_cast %88 : vector<4x4x12xf32> to vector<16x12xf32>
    %c2_67 = arith.constant 2 : index
    %c1_68 = arith.constant 1 : index
    %c0_69 = arith.constant 0 : index
    %c0_70 = arith.constant 0 : index
    %90 = vector.load %arg4[%c2_67, %c1_68, %c0_69, %c0_70] : memref<5x5x12x32xf32, #tpu.memory_space<vmem>>, vector<1x1x12x32xf32>
    %91 = vector.shape_cast %90 : vector<1x1x12x32xf32> to vector<12x32xf32>
    %cst_71 = arith.constant dense<0.000000e+00> : vector<16x32xf32>
    %92 = tpu.matmul %89, %91, %cst_71 {dimension_numbers = #tpu.dot_dimension_numbers<[1], [0], [0], [1], [0, 0, 1, 1], [], []>} : vector<16x12xf32>, vector<12x32xf32>, vector<16x32xf32> -> vector<16x32xf32>
    %93 = arith.addf %87, %92 : vector<16x32xf32>
    %94 = vector.extract_strided_slice %7 {offsets = [2, 1, 0], sizes = [4, 4, 12], strides = [1, 1, 1]} : vector<6x6x12xf32> to vector<4x4x12xf32>
    %95 = vector.shape_cast %94 : vector<4x4x12xf32> to vector<16x12xf32>
    %c0_72 = arith.constant 0 : index
    %c3_73 = arith.constant 3 : index
    %c0_74 = arith.constant 0 : index
    %c0_75 = arith.constant 0 : index
    %96 = vector.load %arg4[%c0_72, %c3_73, %c0_74, %c0_75] : memref<5x5x12x32xf32, #tpu.memory_space<vmem>>, vector<1x1x12x32xf32>
    %97 = vector.shape_cast %96 : vector<1x1x12x32xf32> to vector<12x32xf32>
    %cst_76 = arith.constant dense<0.000000e+00> : vector<16x32xf32>
    %98 = tpu.matmul %95, %97, %cst_76 {dimension_numbers = #tpu.dot_dimension_numbers<[1], [0], [0], [1], [0, 0, 1, 1], [], []>} : vector<16x12xf32>, vector<12x32xf32>, vector<16x32xf32> -> vector<16x32xf32>
    %99 = arith.addf %93, %98 : vector<16x32xf32>
    %100 = vector.extract_strided_slice %7 {offsets = [2, 2, 0], sizes = [4, 4, 12], strides = [1, 1, 1]} : vector<6x6x12xf32> to vector<4x4x12xf32>
    %101 = vector.shape_cast %100 : vector<4x4x12xf32> to vector<16x12xf32>
    %c0_77 = arith.constant 0 : index
    %c1_78 = arith.constant 1 : index
    %c0_79 = arith.constant 0 : index
    %c0_80 = arith.constant 0 : index
    %102 = vector.load %arg4[%c0_77, %c1_78, %c0_79, %c0_80] : memref<5x5x12x32xf32, #tpu.memory_space<vmem>>, vector<1x1x12x32xf32>
    %103 = vector.shape_cast %102 : vector<1x1x12x32xf32> to vector<12x32xf32>
    %cst_81 = arith.constant dense<0.000000e+00> : vector<16x32xf32>
    %104 = tpu.matmul %101, %103, %cst_81 {dimension_numbers = #tpu.dot_dimension_numbers<[1], [0], [0], [1], [0, 0, 1, 1], [], []>} : vector<16x12xf32>, vector<12x32xf32>, vector<16x32xf32> -> vector<16x32xf32>
    %105 = arith.addf %99, %104 : vector<16x32xf32>
    %106 = vector.broadcast %8 : vector<1x32xf32> to vector<16x32xf32>
    %107 = arith.addf %105, %106 : vector<16x32xf32>
    %cst_82 = arith.constant 0.000000e+00 : f32
    %108 = vector.broadcast %cst_82 : f32 to vector<16x32xf32>
    %109 = arith.maximumf %107, %108 : vector<16x32xf32>
    %110 = vector.shape_cast %109 : vector<16x32xf32> to vector<4x4x32xf32>
    %cst_83 = arith.constant 0.000000e+00 : f32
    %111 = vector.broadcast %cst_83 : f32 to vector<16x32xf32>
    %112 = vector.extract_strided_slice %7 {offsets = [1, 0, 0], sizes = [4, 4, 12], strides = [1, 1, 1]} : vector<6x6x12xf32> to vector<4x4x12xf32>
    %113 = vector.shape_cast %112 : vector<4x4x12xf32> to vector<16x12xf32>
    %c3_84 = arith.constant 3 : index
    %c4_85 = arith.constant 4 : index
    %c0_86 = arith.constant 0 : index
    %c0_87 = arith.constant 0 : index
    %114 = vector.load %arg4[%c3_84, %c4_85, %c0_86, %c0_87] : memref<5x5x12x32xf32, #tpu.memory_space<vmem>>, vector<1x1x12x32xf32>
    %115 = vector.shape_cast %114 : vector<1x1x12x32xf32> to vector<12x32xf32>
    %cst_88 = arith.constant dense<0.000000e+00> : vector<16x32xf32>
    %116 = tpu.matmul %113, %115, %cst_88 {dimension_numbers = #tpu.dot_dimension_numbers<[1], [0], [0], [1], [0, 0, 1, 1], [], []>} : vector<16x12xf32>, vector<12x32xf32>, vector<16x32xf32> -> vector<16x32xf32>
    %117 = arith.addf %111, %116 : vector<16x32xf32>
    %118 = vector.extract_strided_slice %7 {offsets = [1, 1, 0], sizes = [4, 4, 12], strides = [1, 1, 1]} : vector<6x6x12xf32> to vector<4x4x12xf32>
    %119 = vector.shape_cast %118 : vector<4x4x12xf32> to vector<16x12xf32>
    %c3_89 = arith.constant 3 : index
    %c2_90 = arith.constant 2 : index
    %c0_91 = arith.constant 0 : index
    %c0_92 = arith.constant 0 : index
    %120 = vector.load %arg4[%c3_89, %c2_90, %c0_91, %c0_92] : memref<5x5x12x32xf32, #tpu.memory_space<vmem>>, vector<1x1x12x32xf32>
    %121 = vector.shape_cast %120 : vector<1x1x12x32xf32> to vector<12x32xf32>
    %cst_93 = arith.constant dense<0.000000e+00> : vector<16x32xf32>
    %122 = tpu.matmul %119, %121, %cst_93 {dimension_numbers = #tpu.dot_dimension_numbers<[1], [0], [0], [1], [0, 0, 1, 1], [], []>} : vector<16x12xf32>, vector<12x32xf32>, vector<16x32xf32> -> vector<16x32xf32>
    %123 = arith.addf %117, %122 : vector<16x32xf32>
    %124 = vector.extract_strided_slice %7 {offsets = [1, 2, 0], sizes = [4, 4, 12], strides = [1, 1, 1]} : vector<6x6x12xf32> to vector<4x4x12xf32>
    %125 = vector.shape_cast %124 : vector<4x4x12xf32> to vector<16x12xf32>
    %c3_94 = arith.constant 3 : index
    %c0_95 = arith.constant 0 : index
    %c0_96 = arith.constant 0 : index
    %c0_97 = arith.constant 0 : index
    %126 = vector.load %arg4[%c3_94, %c0_95, %c0_96, %c0_97] : memref<5x5x12x32xf32, #tpu.memory_space<vmem>>, vector<1x1x12x32xf32>
    %127 = vector.shape_cast %126 : vector<1x1x12x32xf32> to vector<12x32xf32>
    %cst_98 = arith.constant dense<0.000000e+00> : vector<16x32xf32>
    %128 = tpu.matmul %125, %127, %cst_98 {dimension_numbers = #tpu.dot_dimension_numbers<[1], [0], [0], [1], [0, 0, 1, 1], [], []>} : vector<16x12xf32>, vector<12x32xf32>, vector<16x32xf32> -> vector<16x32xf32>
    %129 = arith.addf %123, %128 : vector<16x32xf32>
    %130 = vector.extract_strided_slice %7 {offsets = [2, 0, 0], sizes = [4, 4, 12], strides = [1, 1, 1]} : vector<6x6x12xf32> to vector<4x4x12xf32>
    %131 = vector.shape_cast %130 : vector<4x4x12xf32> to vector<16x12xf32>
    %c1_99 = arith.constant 1 : index
    %c4_100 = arith.constant 4 : index
    %c0_101 = arith.constant 0 : index
    %c0_102 = arith.constant 0 : index
    %132 = vector.load %arg4[%c1_99, %c4_100, %c0_101, %c0_102] : memref<5x5x12x32xf32, #tpu.memory_space<vmem>>, vector<1x1x12x32xf32>
    %133 = vector.shape_cast %132 : vector<1x1x12x32xf32> to vector<12x32xf32>
    %cst_103 = arith.constant dense<0.000000e+00> : vector<16x32xf32>
    %134 = tpu.matmul %131, %133, %cst_103 {dimension_numbers = #tpu.dot_dimension_numbers<[1], [0], [0], [1], [0, 0, 1, 1], [], []>} : vector<16x12xf32>, vector<12x32xf32>, vector<16x32xf32> -> vector<16x32xf32>
    %135 = arith.addf %129, %134 : vector<16x32xf32>
    %136 = vector.extract_strided_slice %7 {offsets = [2, 1, 0], sizes = [4, 4, 12], strides = [1, 1, 1]} : vector<6x6x12xf32> to vector<4x4x12xf32>
    %137 = vector.shape_cast %136 : vector<4x4x12xf32> to vector<16x12xf32>
    %c1_104 = arith.constant 1 : index
    %c2_105 = arith.constant 2 : index
    %c0_106 = arith.constant 0 : index
    %c0_107 = arith.constant 0 : index
    %138 = vector.load %arg4[%c1_104, %c2_105, %c0_106, %c0_107] : memref<5x5x12x32xf32, #tpu.memory_space<vmem>>, vector<1x1x12x32xf32>
    %139 = vector.shape_cast %138 : vector<1x1x12x32xf32> to vector<12x32xf32>
    %cst_108 = arith.constant dense<0.000000e+00> : vector<16x32xf32>
    %140 = tpu.matmul %137, %139, %cst_108 {dimension_numbers = #tpu.dot_dimension_numbers<[1], [0], [0], [1], [0, 0, 1, 1], [], []>} : vector<16x12xf32>, vector<12x32xf32>, vector<16x32xf32> -> vector<16x32xf32>
    %141 = arith.addf %135, %140 : vector<16x32xf32>
    %142 = vector.extract_strided_slice %7 {offsets = [2, 2, 0], sizes = [4, 4, 12], strides = [1, 1, 1]} : vector<6x6x12xf32> to vector<4x4x12xf32>
    %143 = vector.shape_cast %142 : vector<4x4x12xf32> to vector<16x12xf32>
    %c1_109 = arith.constant 1 : index
    %c0_110 = arith.constant 0 : index
    %c0_111 = arith.constant 0 : index
    %c0_112 = arith.constant 0 : index
    %144 = vector.load %arg4[%c1_109, %c0_110, %c0_111, %c0_112] : memref<5x5x12x32xf32, #tpu.memory_space<vmem>>, vector<1x1x12x32xf32>
    %145 = vector.shape_cast %144 : vector<1x1x12x32xf32> to vector<12x32xf32>
    %cst_113 = arith.constant dense<0.000000e+00> : vector<16x32xf32>
    %146 = tpu.matmul %143, %145, %cst_113 {dimension_numbers = #tpu.dot_dimension_numbers<[1], [0], [0], [1], [0, 0, 1, 1], [], []>} : vector<16x12xf32>, vector<12x32xf32>, vector<16x32xf32> -> vector<16x32xf32>
    %147 = arith.addf %141, %146 : vector<16x32xf32>
    %148 = vector.broadcast %8 : vector<1x32xf32> to vector<16x32xf32>
    %149 = arith.addf %147, %148 : vector<16x32xf32>
    %cst_114 = arith.constant 0.000000e+00 : f32
    %150 = vector.broadcast %cst_114 : f32 to vector<16x32xf32>
    %151 = arith.maximumf %149, %150 : vector<16x32xf32>
    %152 = vector.shape_cast %151 : vector<16x32xf32> to vector<4x4x32xf32>
    %cst_115 = arith.constant 0.000000e+00 : f32
    %153 = vector.broadcast %cst_115 : f32 to vector<16x32xf32>
    %154 = vector.extract_strided_slice %7 {offsets = [1, 1, 0], sizes = [4, 4, 12], strides = [1, 1, 1]} : vector<6x6x12xf32> to vector<4x4x12xf32>
    %155 = vector.shape_cast %154 : vector<4x4x12xf32> to vector<16x12xf32>
    %c3_116 = arith.constant 3 : index
    %c3_117 = arith.constant 3 : index
    %c0_118 = arith.constant 0 : index
    %c0_119 = arith.constant 0 : index
    %156 = vector.load %arg4[%c3_116, %c3_117, %c0_118, %c0_119] : memref<5x5x12x32xf32, #tpu.memory_space<vmem>>, vector<1x1x12x32xf32>
    %157 = vector.shape_cast %156 : vector<1x1x12x32xf32> to vector<12x32xf32>
    %cst_120 = arith.constant dense<0.000000e+00> : vector<16x32xf32>
    %158 = tpu.matmul %155, %157, %cst_120 {dimension_numbers = #tpu.dot_dimension_numbers<[1], [0], [0], [1], [0, 0, 1, 1], [], []>} : vector<16x12xf32>, vector<12x32xf32>, vector<16x32xf32> -> vector<16x32xf32>
    %159 = arith.addf %153, %158 : vector<16x32xf32>
    %160 = vector.extract_strided_slice %7 {offsets = [1, 2, 0], sizes = [4, 4, 12], strides = [1, 1, 1]} : vector<6x6x12xf32> to vector<4x4x12xf32>
    %161 = vector.shape_cast %160 : vector<4x4x12xf32> to vector<16x12xf32>
    %c3_121 = arith.constant 3 : index
    %c1_122 = arith.constant 1 : index
    %c0_123 = arith.constant 0 : index
    %c0_124 = arith.constant 0 : index
    %162 = vector.load %arg4[%c3_121, %c1_122, %c0_123, %c0_124] : memref<5x5x12x32xf32, #tpu.memory_space<vmem>>, vector<1x1x12x32xf32>
    %163 = vector.shape_cast %162 : vector<1x1x12x32xf32> to vector<12x32xf32>
    %cst_125 = arith.constant dense<0.000000e+00> : vector<16x32xf32>
    %164 = tpu.matmul %161, %163, %cst_125 {dimension_numbers = #tpu.dot_dimension_numbers<[1], [0], [0], [1], [0, 0, 1, 1], [], []>} : vector<16x12xf32>, vector<12x32xf32>, vector<16x32xf32> -> vector<16x32xf32>
    %165 = arith.addf %159, %164 : vector<16x32xf32>
    %166 = vector.extract_strided_slice %7 {offsets = [2, 1, 0], sizes = [4, 4, 12], strides = [1, 1, 1]} : vector<6x6x12xf32> to vector<4x4x12xf32>
    %167 = vector.shape_cast %166 : vector<4x4x12xf32> to vector<16x12xf32>
    %c1_126 = arith.constant 1 : index
    %c3_127 = arith.constant 3 : index
    %c0_128 = arith.constant 0 : index
    %c0_129 = arith.constant 0 : index
    %168 = vector.load %arg4[%c1_126, %c3_127, %c0_128, %c0_129] : memref<5x5x12x32xf32, #tpu.memory_space<vmem>>, vector<1x1x12x32xf32>
    %169 = vector.shape_cast %168 : vector<1x1x12x32xf32> to vector<12x32xf32>
    %cst_130 = arith.constant dense<0.000000e+00> : vector<16x32xf32>
    %170 = tpu.matmul %167, %169, %cst_130 {dimension_numbers = #tpu.dot_dimension_numbers<[1], [0], [0], [1], [0, 0, 1, 1], [], []>} : vector<16x12xf32>, vector<12x32xf32>, vector<16x32xf32> -> vector<16x32xf32>
    %171 = arith.addf %165, %170 : vector<16x32xf32>
    %172 = vector.extract_strided_slice %7 {offsets = [2, 2, 0], sizes = [4, 4, 12], strides = [1, 1, 1]} : vector<6x6x12xf32> to vector<4x4x12xf32>
    %173 = vector.shape_cast %172 : vector<4x4x12xf32> to vector<16x12xf32>
    %c1_131 = arith.constant 1 : index
    %c1_132 = arith.constant 1 : index
    %c0_133 = arith.constant 0 : index
    %c0_134 = arith.constant 0 : index
    %174 = vector.load %arg4[%c1_131, %c1_132, %c0_133, %c0_134] : memref<5x5x12x32xf32, #tpu.memory_space<vmem>>, vector<1x1x12x32xf32>
    %175 = vector.shape_cast %174 : vector<1x1x12x32xf32> to vector<12x32xf32>
    %cst_135 = arith.constant dense<0.000000e+00> : vector<16x32xf32>
    %176 = tpu.matmul %173, %175, %cst_135 {dimension_numbers = #tpu.dot_dimension_numbers<[1], [0], [0], [1], [0, 0, 1, 1], [], []>} : vector<16x12xf32>, vector<12x32xf32>, vector<16x32xf32> -> vector<16x32xf32>
    %177 = arith.addf %171, %176 : vector<16x32xf32>
    %178 = vector.broadcast %8 : vector<1x32xf32> to vector<16x32xf32>
    %179 = arith.addf %177, %178 : vector<16x32xf32>
    %cst_136 = arith.constant 0.000000e+00 : f32
    %180 = vector.broadcast %cst_136 : f32 to vector<16x32xf32>
    %181 = arith.maximumf %179, %180 : vector<16x32xf32>
    %182 = vector.shape_cast %181 : vector<16x32xf32> to vector<4x4x32xf32>
    %183 = vector.shape_cast %68 : vector<4x4x32xf32> to vector<4x4x1x32xf32>
    %184 = vector.shape_cast %110 : vector<4x4x32xf32> to vector<4x4x1x32xf32>
    %185 = tpu.concatenate %183, %184 in 2 : vector<4x4x1x32xf32>, vector<4x4x1x32xf32> -> vector<4x4x2x32xf32>
    %186 = vector.shape_cast %185 : vector<4x4x2x32xf32> to vector<4x8x32xf32>
    %187 = vector.shape_cast %152 : vector<4x4x32xf32> to vector<4x4x1x32xf32>
    %188 = vector.shape_cast %182 : vector<4x4x32xf32> to vector<4x4x1x32xf32>
    %189 = tpu.concatenate %187, %188 in 2 : vector<4x4x1x32xf32>, vector<4x4x1x32xf32> -> vector<4x4x2x32xf32>
    %190 = vector.shape_cast %189 : vector<4x4x2x32xf32> to vector<4x8x32xf32>
    %191 = vector.shape_cast %186 : vector<4x8x32xf32> to vector<4x1x8x32xf32>
    %192 = vector.shape_cast %190 : vector<4x8x32xf32> to vector<4x1x8x32xf32>
    %193 = tpu.concatenate %191, %192 in 1 : vector<4x1x8x32xf32>, vector<4x1x8x32xf32> -> vector<4x2x8x32xf32>
    %194 = vector.shape_cast %193 : vector<4x2x8x32xf32> to vector<8x8x32xf32>
    %cst_137 = arith.constant 0.000000e+00 : f32
    %195 = vector.broadcast %cst_137 : f32 to vector<1x8x32xf32>
    %196 = tpu.concatenate %195, %194, %195 in 0 : vector<1x8x32xf32>, vector<8x8x32xf32>, vector<1x8x32xf32> -> vector<10x8x32xf32>
    %cst_138 = arith.constant 0.000000e+00 : f32
    %197 = vector.broadcast %cst_138 : f32 to vector<10x1x32xf32>
    %198 = tpu.concatenate %197, %196, %197 in 1 : vector<10x1x32xf32>, vector<10x8x32xf32>, vector<10x1x32xf32> -> vector<10x10x32xf32>
    %c0_139 = arith.constant 0 : index
    %c0_140 = arith.constant 0 : index
    %199 = vector.load %arg7[%c0_139, %c0_140] : memref<1x6xf32, #tpu.memory_space<vmem>>, vector<1x6xf32>
    %cst_141 = arith.constant 0.000000e+00 : f32
    %200 = vector.broadcast %cst_141 : f32 to vector<64x6xf32>
    %201 = vector.extract_strided_slice %198 {offsets = [0, 0, 0], sizes = [8, 8, 32], strides = [1, 1, 1]} : vector<10x10x32xf32> to vector<8x8x32xf32>
    %202 = vector.shape_cast %201 : vector<8x8x32xf32> to vector<64x32xf32>
    %c4_142 = arith.constant 4 : index
    %c4_143 = arith.constant 4 : index
    %c0_144 = arith.constant 0 : index
    %c0_145 = arith.constant 0 : index
    %203 = vector.load %arg6[%c4_142, %c4_143, %c0_144, %c0_145] : memref<5x5x32x6xf32, #tpu.memory_space<vmem>>, vector<1x1x32x6xf32>
    %204 = vector.shape_cast %203 : vector<1x1x32x6xf32> to vector<32x6xf32>
    %cst_146 = arith.constant dense<0.000000e+00> : vector<64x6xf32>
    %205 = tpu.matmul %202, %204, %cst_146 {dimension_numbers = #tpu.dot_dimension_numbers<[1], [0], [0], [1], [0, 0, 1, 1], [], []>} : vector<64x32xf32>, vector<32x6xf32>, vector<64x6xf32> -> vector<64x6xf32>
    %206 = arith.addf %200, %205 : vector<64x6xf32>
    %207 = vector.extract_strided_slice %198 {offsets = [0, 1, 0], sizes = [8, 8, 32], strides = [1, 1, 1]} : vector<10x10x32xf32> to vector<8x8x32xf32>
    %208 = vector.shape_cast %207 : vector<8x8x32xf32> to vector<64x32xf32>
    %c4_147 = arith.constant 4 : index
    %c2_148 = arith.constant 2 : index
    %c0_149 = arith.constant 0 : index
    %c0_150 = arith.constant 0 : index
    %209 = vector.load %arg6[%c4_147, %c2_148, %c0_149, %c0_150] : memref<5x5x32x6xf32, #tpu.memory_space<vmem>>, vector<1x1x32x6xf32>
    %210 = vector.shape_cast %209 : vector<1x1x32x6xf32> to vector<32x6xf32>
    %cst_151 = arith.constant dense<0.000000e+00> : vector<64x6xf32>
    %211 = tpu.matmul %208, %210, %cst_151 {dimension_numbers = #tpu.dot_dimension_numbers<[1], [0], [0], [1], [0, 0, 1, 1], [], []>} : vector<64x32xf32>, vector<32x6xf32>, vector<64x6xf32> -> vector<64x6xf32>
    %212 = arith.addf %206, %211 : vector<64x6xf32>
    %213 = vector.extract_strided_slice %198 {offsets = [0, 2, 0], sizes = [8, 8, 32], strides = [1, 1, 1]} : vector<10x10x32xf32> to vector<8x8x32xf32>
    %214 = vector.shape_cast %213 : vector<8x8x32xf32> to vector<64x32xf32>
    %c4_152 = arith.constant 4 : index
    %c0_153 = arith.constant 0 : index
    %c0_154 = arith.constant 0 : index
    %c0_155 = arith.constant 0 : index
    %215 = vector.load %arg6[%c4_152, %c0_153, %c0_154, %c0_155] : memref<5x5x32x6xf32, #tpu.memory_space<vmem>>, vector<1x1x32x6xf32>
    %216 = vector.shape_cast %215 : vector<1x1x32x6xf32> to vector<32x6xf32>
    %cst_156 = arith.constant dense<0.000000e+00> : vector<64x6xf32>
    %217 = tpu.matmul %214, %216, %cst_156 {dimension_numbers = #tpu.dot_dimension_numbers<[1], [0], [0], [1], [0, 0, 1, 1], [], []>} : vector<64x32xf32>, vector<32x6xf32>, vector<64x6xf32> -> vector<64x6xf32>
    %218 = arith.addf %212, %217 : vector<64x6xf32>
    %219 = vector.extract_strided_slice %198 {offsets = [1, 0, 0], sizes = [8, 8, 32], strides = [1, 1, 1]} : vector<10x10x32xf32> to vector<8x8x32xf32>
    %220 = vector.shape_cast %219 : vector<8x8x32xf32> to vector<64x32xf32>
    %c2_157 = arith.constant 2 : index
    %c4_158 = arith.constant 4 : index
    %c0_159 = arith.constant 0 : index
    %c0_160 = arith.constant 0 : index
    %221 = vector.load %arg6[%c2_157, %c4_158, %c0_159, %c0_160] : memref<5x5x32x6xf32, #tpu.memory_space<vmem>>, vector<1x1x32x6xf32>
    %222 = vector.shape_cast %221 : vector<1x1x32x6xf32> to vector<32x6xf32>
    %cst_161 = arith.constant dense<0.000000e+00> : vector<64x6xf32>
    %223 = tpu.matmul %220, %222, %cst_161 {dimension_numbers = #tpu.dot_dimension_numbers<[1], [0], [0], [1], [0, 0, 1, 1], [], []>} : vector<64x32xf32>, vector<32x6xf32>, vector<64x6xf32> -> vector<64x6xf32>
    %224 = arith.addf %218, %223 : vector<64x6xf32>
    %225 = vector.extract_strided_slice %198 {offsets = [1, 1, 0], sizes = [8, 8, 32], strides = [1, 1, 1]} : vector<10x10x32xf32> to vector<8x8x32xf32>
    %226 = vector.shape_cast %225 : vector<8x8x32xf32> to vector<64x32xf32>
    %c2_162 = arith.constant 2 : index
    %c2_163 = arith.constant 2 : index
    %c0_164 = arith.constant 0 : index
    %c0_165 = arith.constant 0 : index
    %227 = vector.load %arg6[%c2_162, %c2_163, %c0_164, %c0_165] : memref<5x5x32x6xf32, #tpu.memory_space<vmem>>, vector<1x1x32x6xf32>
    %228 = vector.shape_cast %227 : vector<1x1x32x6xf32> to vector<32x6xf32>
    %cst_166 = arith.constant dense<0.000000e+00> : vector<64x6xf32>
    %229 = tpu.matmul %226, %228, %cst_166 {dimension_numbers = #tpu.dot_dimension_numbers<[1], [0], [0], [1], [0, 0, 1, 1], [], []>} : vector<64x32xf32>, vector<32x6xf32>, vector<64x6xf32> -> vector<64x6xf32>
    %230 = arith.addf %224, %229 : vector<64x6xf32>
    %231 = vector.extract_strided_slice %198 {offsets = [1, 2, 0], sizes = [8, 8, 32], strides = [1, 1, 1]} : vector<10x10x32xf32> to vector<8x8x32xf32>
    %232 = vector.shape_cast %231 : vector<8x8x32xf32> to vector<64x32xf32>
    %c2_167 = arith.constant 2 : index
    %c0_168 = arith.constant 0 : index
    %c0_169 = arith.constant 0 : index
    %c0_170 = arith.constant 0 : index
    %233 = vector.load %arg6[%c2_167, %c0_168, %c0_169, %c0_170] : memref<5x5x32x6xf32, #tpu.memory_space<vmem>>, vector<1x1x32x6xf32>
    %234 = vector.shape_cast %233 : vector<1x1x32x6xf32> to vector<32x6xf32>
    %cst_171 = arith.constant dense<0.000000e+00> : vector<64x6xf32>
    %235 = tpu.matmul %232, %234, %cst_171 {dimension_numbers = #tpu.dot_dimension_numbers<[1], [0], [0], [1], [0, 0, 1, 1], [], []>} : vector<64x32xf32>, vector<32x6xf32>, vector<64x6xf32> -> vector<64x6xf32>
    %236 = arith.addf %230, %235 : vector<64x6xf32>
    %237 = vector.extract_strided_slice %198 {offsets = [2, 0, 0], sizes = [8, 8, 32], strides = [1, 1, 1]} : vector<10x10x32xf32> to vector<8x8x32xf32>
    %238 = vector.shape_cast %237 : vector<8x8x32xf32> to vector<64x32xf32>
    %c0_172 = arith.constant 0 : index
    %c4_173 = arith.constant 4 : index
    %c0_174 = arith.constant 0 : index
    %c0_175 = arith.constant 0 : index
    %239 = vector.load %arg6[%c0_172, %c4_173, %c0_174, %c0_175] : memref<5x5x32x6xf32, #tpu.memory_space<vmem>>, vector<1x1x32x6xf32>
    %240 = vector.shape_cast %239 : vector<1x1x32x6xf32> to vector<32x6xf32>
    %cst_176 = arith.constant dense<0.000000e+00> : vector<64x6xf32>
    %241 = tpu.matmul %238, %240, %cst_176 {dimension_numbers = #tpu.dot_dimension_numbers<[1], [0], [0], [1], [0, 0, 1, 1], [], []>} : vector<64x32xf32>, vector<32x6xf32>, vector<64x6xf32> -> vector<64x6xf32>
    %242 = arith.addf %236, %241 : vector<64x6xf32>
    %243 = vector.extract_strided_slice %198 {offsets = [2, 1, 0], sizes = [8, 8, 32], strides = [1, 1, 1]} : vector<10x10x32xf32> to vector<8x8x32xf32>
    %244 = vector.shape_cast %243 : vector<8x8x32xf32> to vector<64x32xf32>
    %c0_177 = arith.constant 0 : index
    %c2_178 = arith.constant 2 : index
    %c0_179 = arith.constant 0 : index
    %c0_180 = arith.constant 0 : index
    %245 = vector.load %arg6[%c0_177, %c2_178, %c0_179, %c0_180] : memref<5x5x32x6xf32, #tpu.memory_space<vmem>>, vector<1x1x32x6xf32>
    %246 = vector.shape_cast %245 : vector<1x1x32x6xf32> to vector<32x6xf32>
    %cst_181 = arith.constant dense<0.000000e+00> : vector<64x6xf32>
    %247 = tpu.matmul %244, %246, %cst_181 {dimension_numbers = #tpu.dot_dimension_numbers<[1], [0], [0], [1], [0, 0, 1, 1], [], []>} : vector<64x32xf32>, vector<32x6xf32>, vector<64x6xf32> -> vector<64x6xf32>
    %248 = arith.addf %242, %247 : vector<64x6xf32>
    %249 = vector.extract_strided_slice %198 {offsets = [2, 2, 0], sizes = [8, 8, 32], strides = [1, 1, 1]} : vector<10x10x32xf32> to vector<8x8x32xf32>
    %250 = vector.shape_cast %249 : vector<8x8x32xf32> to vector<64x32xf32>
    %c0_182 = arith.constant 0 : index
    %c0_183 = arith.constant 0 : index
    %c0_184 = arith.constant 0 : index
    %c0_185 = arith.constant 0 : index
    %251 = vector.load %arg6[%c0_182, %c0_183, %c0_184, %c0_185] : memref<5x5x32x6xf32, #tpu.memory_space<vmem>>, vector<1x1x32x6xf32>
    %252 = vector.shape_cast %251 : vector<1x1x32x6xf32> to vector<32x6xf32>
    %cst_186 = arith.constant dense<0.000000e+00> : vector<64x6xf32>
    %253 = tpu.matmul %250, %252, %cst_186 {dimension_numbers = #tpu.dot_dimension_numbers<[1], [0], [0], [1], [0, 0, 1, 1], [], []>} : vector<64x32xf32>, vector<32x6xf32>, vector<64x6xf32> -> vector<64x6xf32>
    %254 = arith.addf %248, %253 : vector<64x6xf32>
    %255 = vector.broadcast %199 : vector<1x6xf32> to vector<64x6xf32>
    %256 = arith.addf %254, %255 : vector<64x6xf32>
    %257 = arith.negf %256 : vector<64x6xf32>
    %258 = math.exp %257 : vector<64x6xf32>
    %cst_187 = arith.constant 1.000000e+00 : f32
    %259 = vector.broadcast %cst_187 : f32 to vector<64x6xf32>
    %260 = arith.addf %259, %258 : vector<64x6xf32>
    %261 = arith.divf %259, %260 : vector<64x6xf32>
    %262 = vector.shape_cast %261 : vector<64x6xf32> to vector<8x8x6xf32>
    %cst_188 = arith.constant 0.000000e+00 : f32
    %263 = vector.broadcast %cst_188 : f32 to vector<64x6xf32>
    %264 = vector.extract_strided_slice %198 {offsets = [0, 1, 0], sizes = [8, 8, 32], strides = [1, 1, 1]} : vector<10x10x32xf32> to vector<8x8x32xf32>
    %265 = vector.shape_cast %264 : vector<8x8x32xf32> to vector<64x32xf32>
    %c4_189 = arith.constant 4 : index
    %c3_190 = arith.constant 3 : index
    %c0_191 = arith.constant 0 : index
    %c0_192 = arith.constant 0 : index
    %266 = vector.load %arg6[%c4_189, %c3_190, %c0_191, %c0_192] : memref<5x5x32x6xf32, #tpu.memory_space<vmem>>, vector<1x1x32x6xf32>
    %267 = vector.shape_cast %266 : vector<1x1x32x6xf32> to vector<32x6xf32>
    %cst_193 = arith.constant dense<0.000000e+00> : vector<64x6xf32>
    %268 = tpu.matmul %265, %267, %cst_193 {dimension_numbers = #tpu.dot_dimension_numbers<[1], [0], [0], [1], [0, 0, 1, 1], [], []>} : vector<64x32xf32>, vector<32x6xf32>, vector<64x6xf32> -> vector<64x6xf32>
    %269 = arith.addf %263, %268 : vector<64x6xf32>
    %270 = vector.extract_strided_slice %198 {offsets = [0, 2, 0], sizes = [8, 8, 32], strides = [1, 1, 1]} : vector<10x10x32xf32> to vector<8x8x32xf32>
    %271 = vector.shape_cast %270 : vector<8x8x32xf32> to vector<64x32xf32>
    %c4_194 = arith.constant 4 : index
    %c1_195 = arith.constant 1 : index
    %c0_196 = arith.constant 0 : index
    %c0_197 = arith.constant 0 : index
    %272 = vector.load %arg6[%c4_194, %c1_195, %c0_196, %c0_197] : memref<5x5x32x6xf32, #tpu.memory_space<vmem>>, vector<1x1x32x6xf32>
    %273 = vector.shape_cast %272 : vector<1x1x32x6xf32> to vector<32x6xf32>
    %cst_198 = arith.constant dense<0.000000e+00> : vector<64x6xf32>
    %274 = tpu.matmul %271, %273, %cst_198 {dimension_numbers = #tpu.dot_dimension_numbers<[1], [0], [0], [1], [0, 0, 1, 1], [], []>} : vector<64x32xf32>, vector<32x6xf32>, vector<64x6xf32> -> vector<64x6xf32>
    %275 = arith.addf %269, %274 : vector<64x6xf32>
    %276 = vector.extract_strided_slice %198 {offsets = [1, 1, 0], sizes = [8, 8, 32], strides = [1, 1, 1]} : vector<10x10x32xf32> to vector<8x8x32xf32>
    %277 = vector.shape_cast %276 : vector<8x8x32xf32> to vector<64x32xf32>
    %c2_199 = arith.constant 2 : index
    %c3_200 = arith.constant 3 : index
    %c0_201 = arith.constant 0 : index
    %c0_202 = arith.constant 0 : index
    %278 = vector.load %arg6[%c2_199, %c3_200, %c0_201, %c0_202] : memref<5x5x32x6xf32, #tpu.memory_space<vmem>>, vector<1x1x32x6xf32>
    %279 = vector.shape_cast %278 : vector<1x1x32x6xf32> to vector<32x6xf32>
    %cst_203 = arith.constant dense<0.000000e+00> : vector<64x6xf32>
    %280 = tpu.matmul %277, %279, %cst_203 {dimension_numbers = #tpu.dot_dimension_numbers<[1], [0], [0], [1], [0, 0, 1, 1], [], []>} : vector<64x32xf32>, vector<32x6xf32>, vector<64x6xf32> -> vector<64x6xf32>
    %281 = arith.addf %275, %280 : vector<64x6xf32>
    %282 = vector.extract_strided_slice %198 {offsets = [1, 2, 0], sizes = [8, 8, 32], strides = [1, 1, 1]} : vector<10x10x32xf32> to vector<8x8x32xf32>
    %283 = vector.shape_cast %282 : vector<8x8x32xf32> to vector<64x32xf32>
    %c2_204 = arith.constant 2 : index
    %c1_205 = arith.constant 1 : index
    %c0_206 = arith.constant 0 : index
    %c0_207 = arith.constant 0 : index
    %284 = vector.load %arg6[%c2_204, %c1_205, %c0_206, %c0_207] : memref<5x5x32x6xf32, #tpu.memory_space<vmem>>, vector<1x1x32x6xf32>
    %285 = vector.shape_cast %284 : vector<1x1x32x6xf32> to vector<32x6xf32>
    %cst_208 = arith.constant dense<0.000000e+00> : vector<64x6xf32>
    %286 = tpu.matmul %283, %285, %cst_208 {dimension_numbers = #tpu.dot_dimension_numbers<[1], [0], [0], [1], [0, 0, 1, 1], [], []>} : vector<64x32xf32>, vector<32x6xf32>, vector<64x6xf32> -> vector<64x6xf32>
    %287 = arith.addf %281, %286 : vector<64x6xf32>
    %288 = vector.extract_strided_slice %198 {offsets = [2, 1, 0], sizes = [8, 8, 32], strides = [1, 1, 1]} : vector<10x10x32xf32> to vector<8x8x32xf32>
    %289 = vector.shape_cast %288 : vector<8x8x32xf32> to vector<64x32xf32>
    %c0_209 = arith.constant 0 : index
    %c3_210 = arith.constant 3 : index
    %c0_211 = arith.constant 0 : index
    %c0_212 = arith.constant 0 : index
    %290 = vector.load %arg6[%c0_209, %c3_210, %c0_211, %c0_212] : memref<5x5x32x6xf32, #tpu.memory_space<vmem>>, vector<1x1x32x6xf32>
    %291 = vector.shape_cast %290 : vector<1x1x32x6xf32> to vector<32x6xf32>
    %cst_213 = arith.constant dense<0.000000e+00> : vector<64x6xf32>
    %292 = tpu.matmul %289, %291, %cst_213 {dimension_numbers = #tpu.dot_dimension_numbers<[1], [0], [0], [1], [0, 0, 1, 1], [], []>} : vector<64x32xf32>, vector<32x6xf32>, vector<64x6xf32> -> vector<64x6xf32>
    %293 = arith.addf %287, %292 : vector<64x6xf32>
    %294 = vector.extract_strided_slice %198 {offsets = [2, 2, 0], sizes = [8, 8, 32], strides = [1, 1, 1]} : vector<10x10x32xf32> to vector<8x8x32xf32>
    %295 = vector.shape_cast %294 : vector<8x8x32xf32> to vector<64x32xf32>
    %c0_214 = arith.constant 0 : index
    %c1_215 = arith.constant 1 : index
    %c0_216 = arith.constant 0 : index
    %c0_217 = arith.constant 0 : index
    %296 = vector.load %arg6[%c0_214, %c1_215, %c0_216, %c0_217] : memref<5x5x32x6xf32, #tpu.memory_space<vmem>>, vector<1x1x32x6xf32>
    %297 = vector.shape_cast %296 : vector<1x1x32x6xf32> to vector<32x6xf32>
    %cst_218 = arith.constant dense<0.000000e+00> : vector<64x6xf32>
    %298 = tpu.matmul %295, %297, %cst_218 {dimension_numbers = #tpu.dot_dimension_numbers<[1], [0], [0], [1], [0, 0, 1, 1], [], []>} : vector<64x32xf32>, vector<32x6xf32>, vector<64x6xf32> -> vector<64x6xf32>
    %299 = arith.addf %293, %298 : vector<64x6xf32>
    %300 = vector.broadcast %199 : vector<1x6xf32> to vector<64x6xf32>
    %301 = arith.addf %299, %300 : vector<64x6xf32>
    %302 = arith.negf %301 : vector<64x6xf32>
    %303 = math.exp %302 : vector<64x6xf32>
    %cst_219 = arith.constant 1.000000e+00 : f32
    %304 = vector.broadcast %cst_219 : f32 to vector<64x6xf32>
    %305 = arith.addf %304, %303 : vector<64x6xf32>
    %306 = arith.divf %304, %305 : vector<64x6xf32>
    %307 = vector.shape_cast %306 : vector<64x6xf32> to vector<8x8x6xf32>
    %cst_220 = arith.constant 0.000000e+00 : f32
    %308 = vector.broadcast %cst_220 : f32 to vector<64x6xf32>
    %309 = vector.extract_strided_slice %198 {offsets = [1, 0, 0], sizes = [8, 8, 32], strides = [1, 1, 1]} : vector<10x10x32xf32> to vector<8x8x32xf32>
    %310 = vector.shape_cast %309 : vector<8x8x32xf32> to vector<64x32xf32>
    %c3_221 = arith.constant 3 : index
    %c4_222 = arith.constant 4 : index
    %c0_223 = arith.constant 0 : index
    %c0_224 = arith.constant 0 : index
    %311 = vector.load %arg6[%c3_221, %c4_222, %c0_223, %c0_224] : memref<5x5x32x6xf32, #tpu.memory_space<vmem>>, vector<1x1x32x6xf32>
    %312 = vector.shape_cast %311 : vector<1x1x32x6xf32> to vector<32x6xf32>
    %cst_225 = arith.constant dense<0.000000e+00> : vector<64x6xf32>
    %313 = tpu.matmul %310, %312, %cst_225 {dimension_numbers = #tpu.dot_dimension_numbers<[1], [0], [0], [1], [0, 0, 1, 1], [], []>} : vector<64x32xf32>, vector<32x6xf32>, vector<64x6xf32> -> vector<64x6xf32>
    %314 = arith.addf %308, %313 : vector<64x6xf32>
    %315 = vector.extract_strided_slice %198 {offsets = [1, 1, 0], sizes = [8, 8, 32], strides = [1, 1, 1]} : vector<10x10x32xf32> to vector<8x8x32xf32>
    %316 = vector.shape_cast %315 : vector<8x8x32xf32> to vector<64x32xf32>
    %c3_226 = arith.constant 3 : index
    %c2_227 = arith.constant 2 : index
    %c0_228 = arith.constant 0 : index
    %c0_229 = arith.constant 0 : index
    %317 = vector.load %arg6[%c3_226, %c2_227, %c0_228, %c0_229] : memref<5x5x32x6xf32, #tpu.memory_space<vmem>>, vector<1x1x32x6xf32>
    %318 = vector.shape_cast %317 : vector<1x1x32x6xf32> to vector<32x6xf32>
    %cst_230 = arith.constant dense<0.000000e+00> : vector<64x6xf32>
    %319 = tpu.matmul %316, %318, %cst_230 {dimension_numbers = #tpu.dot_dimension_numbers<[1], [0], [0], [1], [0, 0, 1, 1], [], []>} : vector<64x32xf32>, vector<32x6xf32>, vector<64x6xf32> -> vector<64x6xf32>
    %320 = arith.addf %314, %319 : vector<64x6xf32>
    %321 = vector.extract_strided_slice %198 {offsets = [1, 2, 0], sizes = [8, 8, 32], strides = [1, 1, 1]} : vector<10x10x32xf32> to vector<8x8x32xf32>
    %322 = vector.shape_cast %321 : vector<8x8x32xf32> to vector<64x32xf32>
    %c3_231 = arith.constant 3 : index
    %c0_232 = arith.constant 0 : index
    %c0_233 = arith.constant 0 : index
    %c0_234 = arith.constant 0 : index
    %323 = vector.load %arg6[%c3_231, %c0_232, %c0_233, %c0_234] : memref<5x5x32x6xf32, #tpu.memory_space<vmem>>, vector<1x1x32x6xf32>
    %324 = vector.shape_cast %323 : vector<1x1x32x6xf32> to vector<32x6xf32>
    %cst_235 = arith.constant dense<0.000000e+00> : vector<64x6xf32>
    %325 = tpu.matmul %322, %324, %cst_235 {dimension_numbers = #tpu.dot_dimension_numbers<[1], [0], [0], [1], [0, 0, 1, 1], [], []>} : vector<64x32xf32>, vector<32x6xf32>, vector<64x6xf32> -> vector<64x6xf32>
    %326 = arith.addf %320, %325 : vector<64x6xf32>
    %327 = vector.extract_strided_slice %198 {offsets = [2, 0, 0], sizes = [8, 8, 32], strides = [1, 1, 1]} : vector<10x10x32xf32> to vector<8x8x32xf32>
    %328 = vector.shape_cast %327 : vector<8x8x32xf32> to vector<64x32xf32>
    %c1_236 = arith.constant 1 : index
    %c4_237 = arith.constant 4 : index
    %c0_238 = arith.constant 0 : index
    %c0_239 = arith.constant 0 : index
    %329 = vector.load %arg6[%c1_236, %c4_237, %c0_238, %c0_239] : memref<5x5x32x6xf32, #tpu.memory_space<vmem>>, vector<1x1x32x6xf32>
    %330 = vector.shape_cast %329 : vector<1x1x32x6xf32> to vector<32x6xf32>
    %cst_240 = arith.constant dense<0.000000e+00> : vector<64x6xf32>
    %331 = tpu.matmul %328, %330, %cst_240 {dimension_numbers = #tpu.dot_dimension_numbers<[1], [0], [0], [1], [0, 0, 1, 1], [], []>} : vector<64x32xf32>, vector<32x6xf32>, vector<64x6xf32> -> vector<64x6xf32>
    %332 = arith.addf %326, %331 : vector<64x6xf32>
    %333 = vector.extract_strided_slice %198 {offsets = [2, 1, 0], sizes = [8, 8, 32], strides = [1, 1, 1]} : vector<10x10x32xf32> to vector<8x8x32xf32>
    %334 = vector.shape_cast %333 : vector<8x8x32xf32> to vector<64x32xf32>
    %c1_241 = arith.constant 1 : index
    %c2_242 = arith.constant 2 : index
    %c0_243 = arith.constant 0 : index
    %c0_244 = arith.constant 0 : index
    %335 = vector.load %arg6[%c1_241, %c2_242, %c0_243, %c0_244] : memref<5x5x32x6xf32, #tpu.memory_space<vmem>>, vector<1x1x32x6xf32>
    %336 = vector.shape_cast %335 : vector<1x1x32x6xf32> to vector<32x6xf32>
    %cst_245 = arith.constant dense<0.000000e+00> : vector<64x6xf32>
    %337 = tpu.matmul %334, %336, %cst_245 {dimension_numbers = #tpu.dot_dimension_numbers<[1], [0], [0], [1], [0, 0, 1, 1], [], []>} : vector<64x32xf32>, vector<32x6xf32>, vector<64x6xf32> -> vector<64x6xf32>
    %338 = arith.addf %332, %337 : vector<64x6xf32>
    %339 = vector.extract_strided_slice %198 {offsets = [2, 2, 0], sizes = [8, 8, 32], strides = [1, 1, 1]} : vector<10x10x32xf32> to vector<8x8x32xf32>
    %340 = vector.shape_cast %339 : vector<8x8x32xf32> to vector<64x32xf32>
    %c1_246 = arith.constant 1 : index
    %c0_247 = arith.constant 0 : index
    %c0_248 = arith.constant 0 : index
    %c0_249 = arith.constant 0 : index
    %341 = vector.load %arg6[%c1_246, %c0_247, %c0_248, %c0_249] : memref<5x5x32x6xf32, #tpu.memory_space<vmem>>, vector<1x1x32x6xf32>
    %342 = vector.shape_cast %341 : vector<1x1x32x6xf32> to vector<32x6xf32>
    %cst_250 = arith.constant dense<0.000000e+00> : vector<64x6xf32>
    %343 = tpu.matmul %340, %342, %cst_250 {dimension_numbers = #tpu.dot_dimension_numbers<[1], [0], [0], [1], [0, 0, 1, 1], [], []>} : vector<64x32xf32>, vector<32x6xf32>, vector<64x6xf32> -> vector<64x6xf32>
    %344 = arith.addf %338, %343 : vector<64x6xf32>
    %345 = vector.broadcast %199 : vector<1x6xf32> to vector<64x6xf32>
    %346 = arith.addf %344, %345 : vector<64x6xf32>
    %347 = arith.negf %346 : vector<64x6xf32>
    %348 = math.exp %347 : vector<64x6xf32>
    %cst_251 = arith.constant 1.000000e+00 : f32
    %349 = vector.broadcast %cst_251 : f32 to vector<64x6xf32>
    %350 = arith.addf %349, %348 : vector<64x6xf32>
    %351 = arith.divf %349, %350 : vector<64x6xf32>
    %352 = vector.shape_cast %351 : vector<64x6xf32> to vector<8x8x6xf32>
    %cst_252 = arith.constant 0.000000e+00 : f32
    %353 = vector.broadcast %cst_252 : f32 to vector<64x6xf32>
    %354 = vector.extract_strided_slice %198 {offsets = [1, 1, 0], sizes = [8, 8, 32], strides = [1, 1, 1]} : vector<10x10x32xf32> to vector<8x8x32xf32>
    %355 = vector.shape_cast %354 : vector<8x8x32xf32> to vector<64x32xf32>
    %c3_253 = arith.constant 3 : index
    %c3_254 = arith.constant 3 : index
    %c0_255 = arith.constant 0 : index
    %c0_256 = arith.constant 0 : index
    %356 = vector.load %arg6[%c3_253, %c3_254, %c0_255, %c0_256] : memref<5x5x32x6xf32, #tpu.memory_space<vmem>>, vector<1x1x32x6xf32>
    %357 = vector.shape_cast %356 : vector<1x1x32x6xf32> to vector<32x6xf32>
    %cst_257 = arith.constant dense<0.000000e+00> : vector<64x6xf32>
    %358 = tpu.matmul %355, %357, %cst_257 {dimension_numbers = #tpu.dot_dimension_numbers<[1], [0], [0], [1], [0, 0, 1, 1], [], []>} : vector<64x32xf32>, vector<32x6xf32>, vector<64x6xf32> -> vector<64x6xf32>
    %359 = arith.addf %353, %358 : vector<64x6xf32>
    %360 = vector.extract_strided_slice %198 {offsets = [1, 2, 0], sizes = [8, 8, 32], strides = [1, 1, 1]} : vector<10x10x32xf32> to vector<8x8x32xf32>
    %361 = vector.shape_cast %360 : vector<8x8x32xf32> to vector<64x32xf32>
    %c3_258 = arith.constant 3 : index
    %c1_259 = arith.constant 1 : index
    %c0_260 = arith.constant 0 : index
    %c0_261 = arith.constant 0 : index
    %362 = vector.load %arg6[%c3_258, %c1_259, %c0_260, %c0_261] : memref<5x5x32x6xf32, #tpu.memory_space<vmem>>, vector<1x1x32x6xf32>
    %363 = vector.shape_cast %362 : vector<1x1x32x6xf32> to vector<32x6xf32>
    %cst_262 = arith.constant dense<0.000000e+00> : vector<64x6xf32>
    %364 = tpu.matmul %361, %363, %cst_262 {dimension_numbers = #tpu.dot_dimension_numbers<[1], [0], [0], [1], [0, 0, 1, 1], [], []>} : vector<64x32xf32>, vector<32x6xf32>, vector<64x6xf32> -> vector<64x6xf32>
    %365 = arith.addf %359, %364 : vector<64x6xf32>
    %366 = vector.extract_strided_slice %198 {offsets = [2, 1, 0], sizes = [8, 8, 32], strides = [1, 1, 1]} : vector<10x10x32xf32> to vector<8x8x32xf32>
    %367 = vector.shape_cast %366 : vector<8x8x32xf32> to vector<64x32xf32>
    %c1_263 = arith.constant 1 : index
    %c3_264 = arith.constant 3 : index
    %c0_265 = arith.constant 0 : index
    %c0_266 = arith.constant 0 : index
    %368 = vector.load %arg6[%c1_263, %c3_264, %c0_265, %c0_266] : memref<5x5x32x6xf32, #tpu.memory_space<vmem>>, vector<1x1x32x6xf32>
    %369 = vector.shape_cast %368 : vector<1x1x32x6xf32> to vector<32x6xf32>
    %cst_267 = arith.constant dense<0.000000e+00> : vector<64x6xf32>
    %370 = tpu.matmul %367, %369, %cst_267 {dimension_numbers = #tpu.dot_dimension_numbers<[1], [0], [0], [1], [0, 0, 1, 1], [], []>} : vector<64x32xf32>, vector<32x6xf32>, vector<64x6xf32> -> vector<64x6xf32>
    %371 = arith.addf %365, %370 : vector<64x6xf32>
    %372 = vector.extract_strided_slice %198 {offsets = [2, 2, 0], sizes = [8, 8, 32], strides = [1, 1, 1]} : vector<10x10x32xf32> to vector<8x8x32xf32>
    %373 = vector.shape_cast %372 : vector<8x8x32xf32> to vector<64x32xf32>
    %c1_268 = arith.constant 1 : index
    %c1_269 = arith.constant 1 : index
    %c0_270 = arith.constant 0 : index
    %c0_271 = arith.constant 0 : index
    %374 = vector.load %arg6[%c1_268, %c1_269, %c0_270, %c0_271] : memref<5x5x32x6xf32, #tpu.memory_space<vmem>>, vector<1x1x32x6xf32>
    %375 = vector.shape_cast %374 : vector<1x1x32x6xf32> to vector<32x6xf32>
    %cst_272 = arith.constant dense<0.000000e+00> : vector<64x6xf32>
    %376 = tpu.matmul %373, %375, %cst_272 {dimension_numbers = #tpu.dot_dimension_numbers<[1], [0], [0], [1], [0, 0, 1, 1], [], []>} : vector<64x32xf32>, vector<32x6xf32>, vector<64x6xf32> -> vector<64x6xf32>
    %377 = arith.addf %371, %376 : vector<64x6xf32>
    %378 = vector.broadcast %199 : vector<1x6xf32> to vector<64x6xf32>
    %379 = arith.addf %377, %378 : vector<64x6xf32>
    %380 = arith.negf %379 : vector<64x6xf32>
    %381 = math.exp %380 : vector<64x6xf32>
    %cst_273 = arith.constant 1.000000e+00 : f32
    %382 = vector.broadcast %cst_273 : f32 to vector<64x6xf32>
    %383 = arith.addf %382, %381 : vector<64x6xf32>
    %384 = arith.divf %382, %383 : vector<64x6xf32>
    %385 = vector.shape_cast %384 : vector<64x6xf32> to vector<8x8x6xf32>
    %386 = vector.shape_cast %262 : vector<8x8x6xf32> to vector<8x8x1x6xf32>
    %387 = vector.shape_cast %307 : vector<8x8x6xf32> to vector<8x8x1x6xf32>
    %388 = tpu.concatenate %386, %387 in 2 : vector<8x8x1x6xf32>, vector<8x8x1x6xf32> -> vector<8x8x2x6xf32>
    %389 = vector.shape_cast %388 : vector<8x8x2x6xf32> to vector<8x16x6xf32>
    %390 = vector.shape_cast %352 : vector<8x8x6xf32> to vector<8x8x1x6xf32>
    %391 = vector.shape_cast %385 : vector<8x8x6xf32> to vector<8x8x1x6xf32>
    %392 = tpu.concatenate %390, %391 in 2 : vector<8x8x1x6xf32>, vector<8x8x1x6xf32> -> vector<8x8x2x6xf32>
    %393 = vector.shape_cast %392 : vector<8x8x2x6xf32> to vector<8x16x6xf32>
    %394 = vector.shape_cast %389 : vector<8x16x6xf32> to vector<8x1x16x6xf32>
    %395 = vector.shape_cast %393 : vector<8x16x6xf32> to vector<8x1x16x6xf32>
    %396 = tpu.concatenate %394, %395 in 1 : vector<8x1x16x6xf32>, vector<8x1x16x6xf32> -> vector<8x2x16x6xf32>
    %397 = vector.shape_cast %396 : vector<8x2x16x6xf32> to vector<16x16x6xf32>
    %c0_274 = arith.constant 0 : index
    %c0_275 = arith.constant 0 : index
    %c0_276 = arith.constant 0 : index
    %398 = vector.load %arg8[%c0_274, %c0_275, %c0_276] : memref<16x16x6xf32, #tpu.memory_space<vmem>>, vector<16x16x6xf32>
    tpu.vector_store %arg8[%c0_274, %c0_275, %c0_276], %397 {strides = array<i32>} : memref<16x16x6xf32, #tpu.memory_space<vmem>>, vector<16x16x6xf32>,
    return
  }
  func.func @transform_0(%arg0: i32) -> (i32, i32) {
    %c0_i32 = arith.constant 0 : i32
    %c0_i32_0 = arith.constant 0 : i32
    %c0_i32_1 = arith.constant 0 : i32
    return %c0_i32, %c0_i32_0 : i32, i32
  }
  func.func @transform_1(%arg0: i32) -> (i32, i32) {
    %c0_i32 = arith.constant 0 : i32
    %c0_i32_0 = arith.constant 0 : i32
    %c0_i32_1 = arith.constant 0 : i32
    return %c0_i32, %c0_i32_0 : i32, i32
  }
  func.func @transform_2(%arg0: i32) -> (i32, i32) {
    %c0_i32 = arith.constant 0 : i32
    %c0_i32_0 = arith.constant 0 : i32
    %c0_i32_1 = arith.constant 0 : i32
    return %c0_i32, %c0_i32_0 : i32, i32
  }
  func.func @transform_3(%arg0: i32) -> (i32, i32, i32, i32) {
    %c0_i32 = arith.constant 0 : i32
    %c0_i32_0 = arith.constant 0 : i32
    %c0_i32_1 = arith.constant 0 : i32
    %c0_i32_2 = arith.constant 0 : i32
    %c0_i32_3 = arith.constant 0 : i32
    return %c0_i32, %c0_i32_0, %c0_i32_1, %c0_i32_2 : i32, i32, i32, i32
  }
  func.func @transform_4(%arg0: i32) -> (i32, i32) {
    %c0_i32 = arith.constant 0 : i32
    %c0_i32_0 = arith.constant 0 : i32
    %c0_i32_1 = arith.constant 0 : i32
    return %c0_i32, %c0_i32_0 : i32, i32
  }
  func.func @transform_5(%arg0: i32) -> (i32, i32, i32, i32) {
    %c0_i32 = arith.constant 0 : i32
    %c0_i32_0 = arith.constant 0 : i32
    %c0_i32_1 = arith.constant 0 : i32
    %c0_i32_2 = arith.constant 0 : i32
    %c0_i32_3 = arith.constant 0 : i32
    return %c0_i32, %c0_i32_0, %c0_i32_1, %c0_i32_2 : i32, i32, i32, i32
  }
  func.func @transform_6(%arg0: i32) -> (i32, i32) {
    %c0_i32 = arith.constant 0 : i32
    %c0_i32_0 = arith.constant 0 : i32
    %c0_i32_1 = arith.constant 0 : i32
    return %c0_i32, %c0_i32_0 : i32, i32
  }
  func.func @transform_7(%arg0: i32) -> (i32, i32, i32) {
    %c0_i32 = arith.constant 0 : i32
    %c0_i32_0 = arith.constant 0 : i32
    %c0_i32_1 = arith.constant 0 : i32
    %c0_i32_2 = arith.constant 0 : i32
    return %c0_i32, %c0_i32_0, %c0_i32_1 : i32, i32, i32
  }
}

</mosaic_0001>

<llo_original>
// kernel: rn_forward.1
$region0: #{rn_forward.1}
  #allocation0 [shape = 'u32[]', space=smem, size = 0x4, offset = 0x4, fixed_abs, tag = 'smem constant byte address 0x4 - core index']
  #allocation1 [shape = 'u32[72,128]{1,0:T(1,128)}', space=vmem, size = 0x9000, scoped, tag = 'internal scratch']
  %s0 = inlined_call_operand.vmem [shape: f32[192,12], index: 0, kind: input, shape index: {}]
  %s1 = inlined_call_operand.vmem [shape: f32[36,192], index: 1, kind: input, shape index: {}]
  %s2 = inlined_call_operand.vmem [shape: f32[36,12], index: 2, kind: input, shape index: {}]
  %s3 = inlined_call_operand.vmem [shape: f32[5,5,12,32], index: 3, kind: input, shape index: {}]
  %s4 = inlined_call_operand.vmem [shape: f32[1,32], index: 4, kind: input, shape index: {}]
  %s5 = inlined_call_operand.vmem [shape: f32[5,5,32,6], index: 5, kind: input, shape index: {}]
  %s6 = inlined_call_operand.vmem [shape: f32[1,6], index: 6, kind: input, shape index: {}]
  %s7 = inlined_call_operand.vmem [shape: f32[16,16,6], index: 7, kind: output, shape index: {}]
  %s8 = sld [smem:[#allocation0]]
  $region38: #{rn_forward.1} parent=0
    _
  %s10 = ssub.s32 1, %s8
  %s11 = scalar_select 0, %s10, %s8
  // Predicated region
  $region2: #{rn_forward.1} parent=0 // pred_check
    _
  $region3: #{rn_forward.1} parent=0 // pred_check_branch
    %13 = sbr.rel (0) target = $region5
  $region4: #{rn_forward.1} parent=0 // pred_region
    _
  $region5: #{rn_forward.1} parent=0 // pred_fallthru
    _
  // Predicated region
  $region6: #{rn_forward.1} parent=0 // pred_check
    _
  $region7: #{rn_forward.1} parent=0 // pred_check_branch
    %15 = sbr.rel (0) target = $region9
  $region8: #{rn_forward.1} parent=0 // pred_region
    _
  $region9: #{rn_forward.1} parent=0 // pred_fallthru
    _
  // Predicated region
  $region10: #{rn_forward.1} parent=0 // pred_check
    _
  $region11: #{rn_forward.1} parent=0 // pred_check_branch
    %17 = sbr.rel (0) target = $region13
  $region12: #{rn_forward.1} parent=0 // pred_region
    _
  $region13: #{rn_forward.1} parent=0 // pred_fallthru
    _
  // Predicated region
  $region14: #{rn_forward.1} parent=0 // pred_check
    _
  $region15: #{rn_forward.1} parent=0 // pred_check_branch
    %19 = sbr.rel (0) target = $region17
  $region16: #{rn_forward.1} parent=0 // pred_region
    _
  $region17: #{rn_forward.1} parent=0 // pred_fallthru
    _
  // Predicated region
  $region18: #{rn_forward.1} parent=0 // pred_check
    _
  $region19: #{rn_forward.1} parent=0 // pred_check_branch
    %21 = sbr.rel (0) target = $region21
  $region20: #{rn_forward.1} parent=0 // pred_region
    _
  $region21: #{rn_forward.1} parent=0 // pred_fallthru
    _
  // Predicated region
  $region22: #{rn_forward.1} parent=0 // pred_check
    _
  $region23: #{rn_forward.1} parent=0 // pred_check_branch
    %23 = sbr.rel (0) target = $region25
  $region24: #{rn_forward.1} parent=0 // pred_region
    _
  $region25: #{rn_forward.1} parent=0 // pred_fallthru
    _
  // Predicated region
  $region26: #{rn_forward.1} parent=0 // pred_check
    _
  $region27: #{rn_forward.1} parent=0 // pred_check_branch
    %25 = sbr.rel (0) target = $region29
  $region28: #{rn_forward.1} parent=0 // pred_region
    _
  $region29: #{rn_forward.1} parent=0 // pred_fallthru
    _
  %v26 = vld [vmem:[%s1] sm:$0xff]
  %v27 = vld [vmem:[%s1 + $0x8] sm:$0xff]
  %v28 = vld [vmem:[%s1 + $0x10] sm:$0xff]
  %v29 = vld [vmem:[%s1 + $0x18] sm:$0xff]
  %v30 = vld [vmem:[%s1 + $0x20] sm:$0xff]
  %v31 = vld [vmem:[%s1 + $0x28] sm:$0xff]
  %v32 = vld [vmem:[%s1 + $0x30] sm:$0xff]
  %v33 = vld [vmem:[%s1 + $0x38] sm:$0xff]
  %v34 = vld [vmem:[%s1 + $0x40] sm:$0xf]
  %v35 = vld [vmem:[%s1 + $0x48] sm:$0xf]
  %v36 = vld [vmem:[%s0] sm:$0xff]
  %v37 = vld [vmem:[%s0 + $0x8] sm:$0xff]
  %v38 = vld [vmem:[%s0 + $0x10] sm:$0xff]
  %v39 = vld [vmem:[%s0 + $0x18] sm:$0xff]
  %v40 = vld [vmem:[%s0 + $0x20] sm:$0xff]
  %v41 = vld [vmem:[%s0 + $0x28] sm:$0xff]
  %v42 = vld [vmem:[%s0 + $0x30] sm:$0xff]
  %v43 = vld [vmem:[%s0 + $0x38] sm:$0xff]
  %v44 = vld [vmem:[%s0 + $0x40] sm:$0xff]
  %v45 = vld [vmem:[%s0 + $0x48] sm:$0xff]
  %v46 = vld [vmem:[%s0 + $0x50] sm:$0xff]
  %v47 = vld [vmem:[%s0 + $0x58] sm:$0xff]
  %v48 = vld [vmem:[%s0 + $0x60] sm:$0xff]
  %v49 = vld [vmem:[%s0 + $0x68] sm:$0xff]
  %v50 = vld [vmem:[%s0 + $0x70] sm:$0xff]
  %v51 = vld [vmem:[%s0 + $0x78] sm:$0xff]
  %v52 = vld [vmem:[%s0 + $0x80] sm:$0xff]
  %v53 = vld [vmem:[%s0 + $0x88] sm:$0xff]
  %v54 = vld [vmem:[%s0 + $0x90] sm:$0xff]
  %v55 = vld [vmem:[%s0 + $0x98] sm:$0xff]
  %v56 = vld [vmem:[%s0 + $0xa0] sm:$0xff]
  %v57 = vld [vmem:[%s0 + $0xa8] sm:$0xff]
  %v58 = vld [vmem:[%s0 + $0xb0] sm:$0xff]
  %v59 = vld [vmem:[%s0 + $0xb8] sm:$0xff]
  %v60 = vld [vmem:[%s2] sm:$0xff]
  %v61 = vld [vmem:[%s2 + $0x8] sm:$0xff]
  %v62 = vld [vmem:[%s2 + $0x10] sm:$0xff]
  %v63 = vld [vmem:[%s2 + $0x18] sm:$0xff]
  %v64 = vld [vmem:[%s2 + $0x20] sm:$0xf]
  %vm65 = vcmask 523264
  %v67 = vsel %vm65, %v27, 0
  %v70 = vsel %vm65, %v29, 0
  %v73 = vsel %vm65, %v31, 0
  %v76 = vsel %vm65, %v33, 0
  %v79 = vsel %vm65, %v35, 0
  %81 = vmatpush.msra.mxu0 %v51
  %82 = vmatpush.msra.mxu0 %v50
  %83 = vmatpush.msra.mxu0 %v49
  %84 = vmatpush.msra.mxu0 %v48
  %85 = vmatpush.msra.mxu0 %v47
  %86 = vmatpush.msra.mxu0 %v46
  %87 = vmatpush.msra.mxu0 %v45
  %88 = vmatpush.msra.mxu0 %v44
  %89 = vmatpush.msra.mxu0 %v43
  %90 = vmatpush.msra.mxu0 %v42
  %91 = vmatpush.msra.mxu0 %v41
  %92 = vmatpush.msra.mxu0 %v40
  %93 = vmatpush.msra.mxu0 %v39
  %94 = vmatpush.msra.mxu0 %v38
  %95 = vmatpush.msra.mxu0 %v37
  %96 = vmatpush.msra.mxu0 %v36
  %97 = vmatmul.f32.gmra.mxu0 %v26
  %v98 = vpop.f32.mrf.mxu0
  %v99 = vadd.f32 %v60, %v98
  %100 = vmatmul.f32.gmra.mxu0 %v28
  %v101 = vpop.f32.mrf.mxu0
  %v102 = vadd.f32 %v61, %v101
  %103 = vmatmul.f32.gmra.mxu0 %v30
  %v104 = vpop.f32.mrf.mxu0
  %v105 = vadd.f32 %v62, %v104
  %106 = vmatmul.f32.gmra.mxu0 %v32
  %v107 = vpop.f32.mrf.mxu0
  %v108 = vadd.f32 %v63, %v107
  %109 = vmatmul.f32.gmra.mxu0 %v34
  %v110 = vpop.f32.mrf.mxu0
  %v111 = vadd.f32 %v64, %v110
  %112 = vdwg.mxu0
  %113 = vmatpush.msra.mxu0 0.0
  %114 = vmatpush.msra.mxu0 0.0
  %115 = vmatpush.msra.mxu0 0.0
  %116 = vmatpush.msra.mxu0 0.0
  %117 = vmatpush.msra.mxu0 0.0
  %118 = vmatpush.msra.mxu0 0.0
  %119 = vmatpush.msra.mxu0 0.0
  %120 = vmatpush.msra.mxu0 0.0
  %121 = vmatpush.msra.mxu0 %v59
  %122 = vmatpush.msra.mxu0 %v58
  %123 = vmatpush.msra.mxu0 %v57
  %124 = vmatpush.msra.mxu0 %v56
  %125 = vmatpush.msra.mxu0 %v55
  %126 = vmatpush.msra.mxu0 %v54
  %127 = vmatpush.msra.mxu0 %v53
  %128 = vmatpush.msra.mxu0 %v52
  %129 = vmatmul.f32.gmra.mxu0 %v67
  %v130 = vpop.f32.mrf.mxu0
  %v131 = vadd.f32 %v99, %v130
  %132 = vmatmul.f32.gmra.mxu0 %v70
  %v133 = vpop.f32.mrf.mxu0
  %v134 = vadd.f32 %v102, %v133
  %135 = vmatmul.f32.gmra.mxu0 %v73
  %v136 = vpop.f32.mrf.mxu0
  %v137 = vadd.f32 %v105, %v136
  %138 = vmatmul.f32.gmra.mxu0 %v76
  %v139 = vpop.f32.mrf.mxu0
  %v140 = vadd.f32 %v108, %v139
  %141 = vmatmul.f32.gmra.mxu0 %v79
  %v142 = vpop.f32.mrf.mxu0
  %v143 = vadd.f32 %v111, %v142
  %144 = vdwg.mxu0
  %v145 = vmax.f32 %v131, 0.0
  %v146 = vmax.f32 %v134, 0.0
  %v147 = vmax.f32 %v137, 0.0
  %v148 = vmax.f32 %v140, 0.0
  %v149 = vmax.f32 %v143, 0.0
  %v155 = vrot.slane %v145, 2
  %v156 = vrot.slane %v145, 4
  %v157 = vrot.slane %v145, 6
  %v158 = vrot.slane %v146, 2
  %v159 = vrot.slane %v146, 4
  %v160 = vrot.slane %v146, 6
  %v161 = vrot.slane %v147, 2
  %v162 = vrot.slane %v147, 4
  %v163 = vrot.slane %v147, 6
  %v164 = vrot.slane %v148, 2
  %v165 = vrot.slane %v148, 4
  %v166 = vrot.slane %v148, 6
  %v167 = vrot.slane %v149, 2
  %v168 = vld [vmem:[%s4] sm:$0x1]
  %s169 = scalar_lea.vmem %s3, 384
  %v170 = vld [vmem:[%s169] sm:$0xff]
  %v171 = vld [vmem:[%s169 + $0x8] sm:$0xf]
  %vm172 = vcmask 1040384
  %vm173 = vcmask 1042434
  %vm174 = vmor %vm172, %vm173
  %vm175 = vcmask 1044484
  %vm176 = vmor %vm174, %vm175
  %vm177 = vcmask 1046534
  %vm178 = vmor %vm176, %vm177
  %v179 = vrot.slane %v145, 7
  %v180 = vrot.slane %v179, 2
  %v181 = vrot.slane %v155, 7
  %v182 = vsel %vm178, %v180, %v181
  %v183 = vrot.slane %v181, 2
  %v184 = vrot.slane %v156, 7
  %v185 = vsel %vm178, %v183, %v184
  %v186 = vrot.slane %v157, 7
  %v187 = vrot.slane %v186, 2
  %v188 = vrot.slane %v146, 7
  %v189 = vsel %vm178, %v187, %v188
  %v190 = vrot.slane %v188, 2
  %v191 = vrot.slane %v158, 7
  %v192 = vsel %vm178, %v190, %v191
  %v193 = vrot.slane %v159, 7
  %v194 = vrot.slane %v193, 2
  %v195 = vrot.slane %v160, 7
  %v196 = vsel %vm178, %v194, %v195
  %v197 = vrot.slane %v195, 2
  %v198 = vrot.slane %v147, 7
  %v199 = vsel %vm178, %v197, %v198
  %v200 = vrot.slane %v161, 7
  %v201 = vrot.slane %v200, 2
  %v202 = vrot.slane %v162, 7
  %v203 = vsel %vm178, %v201, %v202
  %v204 = vrot.slane %v202, 2
  %v205 = vrot.slane %v163, 7
  %v206 = vsel %vm178, %v204, %v205
  %s207 = scalar_lea.vmem %s3, 352
  %v208 = vld [vmem:[%s207] sm:$0xff]
  %v209 = vld [vmem:[%s207 + $0x8] sm:$0xf]
  %210 = vst [vmem:[#allocation1] ss:$4 sm:$0xff] %v182
  %s211 = scalar_lea.vmem [#allocation1], 1
  %212 = vst [vmem:[%s211] ss:$4 sm:$0xff] %v185
  %s213 = scalar_lea.vmem [#allocation1], 2
  %214 = vst [vmem:[%s213] ss:$4 sm:$0xff] %v189
  %s215 = scalar_lea.vmem [#allocation1], 3
  %216 = vst [vmem:[%s215] ss:$4 sm:$0xff] %v192
  %s217 = scalar_lea.vmem [#allocation1], 32
  %218 = vst [vmem:[%s217] ss:$4 sm:$0xff] %v196
  %s219 = scalar_lea.vmem [#allocation1], 33
  %220 = vst [vmem:[%s219] ss:$4 sm:$0xff] %v199
  %s221 = scalar_lea.vmem [#allocation1], 34
  %222 = vst [vmem:[%s221] ss:$4 sm:$0xff] %v203
  %s223 = scalar_lea.vmem [#allocation1], 35
  %224 = vst [vmem:[%s223] ss:$4 sm:$0xff] %v206
  %v225 = vld.sshfl [vmem:[#allocation1] sm:$0xff pattern:$0x73625140]
  %v226 = vld.sshfl [vmem:[#allocation1 + $0x20] sm:$0xff pattern:$0x73625140]
  %vm227 = vcmask 97280
  %v228 = vsel %vm227, %v225, 0
  %v230 = vsel %vm227, %v226, 0
  %vm232 = vcmask 1043456
  %v234 = vsel %vm232, %v209, 0
  %236 = vmatpush.msra.mxu0 0.0
  %237 = vmatpush.msra.mxu0 0.0
  %238 = vmatpush.msra.mxu0 0.0
  %239 = vmatpush.msra.mxu0 0.0
  %240 = vmatpush.msra.mxu0 0.0
  %241 = vmatpush.msra.mxu0 0.0
  %242 = vmatpush.msra.mxu0 0.0
  %243 = vmatpush.msra.mxu0 0.0
  %244 = vmatpush.msra.mxu0 0.0
  %245 = vmatpush.msra.mxu0 0.0
  %246 = vmatpush.msra.mxu0 0.0
  %247 = vmatpush.msra.mxu0 0.0
  %248 = vmatpush.msra.mxu0 0.0
  %249 = vmatpush.msra.mxu0 0.0
  %250 = vmatpush.msra.mxu0 %v234
  %251 = vmatpush.msra.mxu0 %v208
  %252 = vmatmul.f32.gmra.mxu0 %v228
  %v253 = vpop.f32.mrf.mxu0
  %v254 = vadd.f32 0.0, %v253
  %255 = vmatmul.f32.gmra.mxu0 %v230
  %v256 = vpop.f32.mrf.mxu0
  %v257 = vadd.f32 0.0, %v256
  %258 = vdwg.mxu0
  %259 = vst [vmem:[#allocation1] ss:$4 sm:$0xff] %v145
  %s260 = scalar_lea.vmem [#allocation1], 1
  %261 = vst [vmem:[%s260] ss:$4 sm:$0xff] %v155
  %s262 = scalar_lea.vmem [#allocation1], 2
  %263 = vst [vmem:[%s262] ss:$4 sm:$0xff] %v157
  %s264 = scalar_lea.vmem [#allocation1], 3
  %265 = vst [vmem:[%s264] ss:$4 sm:$0xff] %v146
  %s266 = scalar_lea.vmem [#allocation1], 32
  %267 = vst [vmem:[%s266] ss:$4 sm:$0xff] %v159
  %s268 = scalar_lea.vmem [#allocation1], 33
  %269 = vst [vmem:[%s268] ss:$4 sm:$0xff] %v160
  %s270 = scalar_lea.vmem [#allocation1], 34
  %271 = vst [vmem:[%s270] ss:$4 sm:$0xff] %v161
  %s272 = scalar_lea.vmem [#allocation1], 35
  %273 = vst [vmem:[%s272] ss:$4 sm:$0xff] %v162
  %v274 = vld.sshfl [vmem:[#allocation1] sm:$0xff pattern:$0x73625140]
  %v275 = vld.sshfl [vmem:[#allocation1 + $0x20] sm:$0xff pattern:$0x73625140]
  %v276 = vsel %vm227, %v274, 0
  %v278 = vsel %vm227, %v275, 0
  %v281 = vsel %vm232, %v171, 0
  %283 = vmatpush.msra.mxu0 0.0
  %284 = vmatpush.msra.mxu0 0.0
  %285 = vmatpush.msra.mxu0 0.0
  %286 = vmatpush.msra.mxu0 0.0
  %287 = vmatpush.msra.mxu0 0.0
  %288 = vmatpush.msra.mxu0 0.0
  %289 = vmatpush.msra.mxu0 0.0
  %290 = vmatpush.msra.mxu0 0.0
  %291 = vmatpush.msra.mxu0 0.0
  %292 = vmatpush.msra.mxu0 0.0
  %293 = vmatpush.msra.mxu0 0.0
  %294 = vmatpush.msra.mxu0 0.0
  %295 = vmatpush.msra.mxu0 0.0
  %296 = vmatpush.msra.mxu0 0.0
  %297 = vmatpush.msra.mxu0 %v281
  %298 = vmatpush.msra.mxu0 %v170
  %299 = vmatmul.f32.gmra.mxu0 %v276
  %v300 = vpop.f32.mrf.mxu0
  %v301 = vadd.f32 %v254, %v300
  %302 = vmatmul.f32.gmra.mxu0 %v278
  %v303 = vpop.f32.mrf.mxu0
  %v304 = vadd.f32 %v257, %v303
  %305 = vdwg.mxu0
  %s306 = scalar_lea.vmem %s3, 320
  %v307 = vld [vmem:[%s306] sm:$0xff]
  %v308 = vld [vmem:[%s306 + $0x8] sm:$0xf]
  %309 = vst [vmem:[#allocation1] ss:$4 sm:$0xff] %v155
  %s310 = scalar_lea.vmem [#allocation1], 1
  %311 = vst [vmem:[%s310] ss:$4 sm:$0xff] %v156
  %s312 = scalar_lea.vmem [#allocation1], 2
  %313 = vst [vmem:[%s312] ss:$4 sm:$0xff] %v146
  %s314 = scalar_lea.vmem [#allocation1], 3
  %315 = vst [vmem:[%s314] ss:$4 sm:$0xff] %v158
  %s316 = scalar_lea.vmem [#allocation1], 32
  %317 = vst [vmem:[%s316] ss:$4 sm:$0xff] %v160
  %s318 = scalar_lea.vmem [#allocation1], 33
  %319 = vst [vmem:[%s318] ss:$4 sm:$0xff] %v147
  %s320 = scalar_lea.vmem [#allocation1], 34
  %321 = vst [vmem:[%s320] ss:$4 sm:$0xff] %v162
  %s322 = scalar_lea.vmem [#allocation1], 35
  %323 = vst [vmem:[%s322] ss:$4 sm:$0xff] %v163
  %v324 = vld.sshfl [vmem:[#allocation1] sm:$0xff pattern:$0x73625140]
  %v325 = vld.sshfl [vmem:[#allocation1 + $0x20] sm:$0xff pattern:$0x73625140]
  %v326 = vsel %vm227, %v324, 0
  %v328 = vsel %vm227, %v325, 0
  %v331 = vsel %vm232, %v308, 0
  %333 = vmatpush.msra.mxu0 0.0
  %334 = vmatpush.msra.mxu0 0.0
  %335 = vmatpush.msra.mxu0 0.0
  %336 = vmatpush.msra.mxu0 0.0
  %337 = vmatpush.msra.mxu0 0.0
  %338 = vmatpush.msra.mxu0 0.0
  %339 = vmatpush.msra.mxu0 0.0
  %340 = vmatpush.msra.mxu0 0.0
  %341 = vmatpush.msra.mxu0 0.0
  %342 = vmatpush.msra.mxu0 0.0
  %343 = vmatpush.msra.mxu0 0.0
  %344 = vmatpush.msra.mxu0 0.0
  %345 = vmatpush.msra.mxu0 0.0
  %346 = vmatpush.msra.mxu0 0.0
  %347 = vmatpush.msra.mxu0 %v331
  %348 = vmatpush.msra.mxu0 %v307
  %349 = vmatmul.f32.gmra.mxu0 %v326
  %v350 = vpop.f32.mrf.mxu0
  %v351 = vadd.f32 0.0, %v350
  %352 = vmatmul.f32.gmra.mxu0 %v328
  %v353 = vpop.f32.mrf.mxu0
  %v354 = vadd.f32 0.0, %v353
  %355 = vdwg.mxu0
  %v356 = vadd.f32 %v301, %v351
  %v357 = vadd.f32 %v304, %v354
  %s358 = scalar_lea.vmem %s3, 224
  %v359 = vld [vmem:[%s358] sm:$0xff]
  %v360 = vld [vmem:[%s358 + $0x8] sm:$0xf]
  %361 = vst [vmem:[#allocation1] ss:$4 sm:$0xff] %v157
  %s362 = scalar_lea.vmem [#allocation1], 1
  %363 = vst [vmem:[%s362] ss:$4 sm:$0xff] %v146
  %s364 = scalar_lea.vmem [#allocation1], 2
  %365 = vst [vmem:[%s364] ss:$4 sm:$0xff] %v159
  %s366 = scalar_lea.vmem [#allocation1], 3
  %367 = vst [vmem:[%s366] ss:$4 sm:$0xff] %v160
  %s368 = scalar_lea.vmem [#allocation1], 32
  %369 = vst [vmem:[%s368] ss:$4 sm:$0xff] %v161
  %s370 = scalar_lea.vmem [#allocation1], 33
  %371 = vst [vmem:[%s370] ss:$4 sm:$0xff] %v162
  %s372 = scalar_lea.vmem [#allocation1], 34
  %373 = vst [vmem:[%s372] ss:$4 sm:$0xff] %v148
  %s374 = scalar_lea.vmem [#allocation1], 35
  %375 = vst [vmem:[%s374] ss:$4 sm:$0xff] %v164
  %v376 = vld.sshfl [vmem:[#allocation1] sm:$0xff pattern:$0x73625140]
  %v377 = vld.sshfl [vmem:[#allocation1 + $0x20] sm:$0xff pattern:$0x73625140]
  %v378 = vsel %vm227, %v376, 0
  %v380 = vsel %vm227, %v377, 0
  %v383 = vsel %vm232, %v360, 0
  %385 = vmatpush.msra.mxu0 0.0
  %386 = vmatpush.msra.mxu0 0.0
  %387 = vmatpush.msra.mxu0 0.0
  %388 = vmatpush.msra.mxu0 0.0
  %389 = vmatpush.msra.mxu0 0.0
  %390 = vmatpush.msra.mxu0 0.0
  %391 = vmatpush.msra.mxu0 0.0
  %392 = vmatpush.msra.mxu0 0.0
  %393 = vmatpush.msra.mxu0 0.0
  %394 = vmatpush.msra.mxu0 0.0
  %395 = vmatpush.msra.mxu0 0.0
  %396 = vmatpush.msra.mxu0 0.0
  %397 = vmatpush.msra.mxu0 0.0
  %398 = vmatpush.msra.mxu0 0.0
  %399 = vmatpush.msra.mxu0 %v383
  %400 = vmatpush.msra.mxu0 %v359
  %401 = vmatmul.f32.gmra.mxu0 %v378
  %v402 = vpop.f32.mrf.mxu0
  %v403 = vadd.f32 0.0, %v402
  %404 = vmatmul.f32.gmra.mxu0 %v380
  %v405 = vpop.f32.mrf.mxu0
  %v406 = vadd.f32 0.0, %v405
  %407 = vdwg.mxu0
  %v408 = vadd.f32 %v356, %v403
  %v409 = vadd.f32 %v357, %v406
  %v410 = vrot.slane %v148, 7
  %v411 = vrot.slane %v410, 2
  %v412 = vrot.slane %v164, 7
  %v413 = vsel %vm178, %v411, %v412
  %v414 = vrot.slane %v412, 2
  %v415 = vrot.slane %v165, 7
  %v416 = vsel %vm178, %v414, %v415
  %s417 = scalar_lea.vmem %s3, 192
  %v418 = vld [vmem:[%s417] sm:$0xff]
  %v419 = vld [vmem:[%s417 + $0x8] sm:$0xf]
  %420 = vst [vmem:[#allocation1] ss:$4 sm:$0xff] %v189
  %s421 = scalar_lea.vmem [#allocation1], 1
  %422 = vst [vmem:[%s421] ss:$4 sm:$0xff] %v192
  %s423 = scalar_lea.vmem [#allocation1], 2
  %424 = vst [vmem:[%s423] ss:$4 sm:$0xff] %v196
  %s425 = scalar_lea.vmem [#allocation1], 3
  %426 = vst [vmem:[%s425] ss:$4 sm:$0xff] %v199
  %s427 = scalar_lea.vmem [#allocation1], 32
  %428 = vst [vmem:[%s427] ss:$4 sm:$0xff] %v203
  %s429 = scalar_lea.vmem [#allocation1], 33
  %430 = vst [vmem:[%s429] ss:$4 sm:$0xff] %v206
  %s431 = scalar_lea.vmem [#allocation1], 34
  %432 = vst [vmem:[%s431] ss:$4 sm:$0xff] %v413
  %s433 = scalar_lea.vmem [#allocation1], 35
  %434 = vst [vmem:[%s433] ss:$4 sm:$0xff] %v416
  %v435 = vld.sshfl [vmem:[#allocation1] sm:$0xff pattern:$0x73625140]
  %v436 = vld.sshfl [vmem:[#allocation1 + $0x20] sm:$0xff pattern:$0x73625140]
  %v437 = vsel %vm227, %v435, 0
  %v439 = vsel %vm227, %v436, 0
  %v442 = vsel %vm232, %v419, 0
  %444 = vmatpush.msra.mxu0 0.0
  %445 = vmatpush.msra.mxu0 0.0
  %446 = vmatpush.msra.mxu0 0.0
  %447 = vmatpush.msra.mxu0 0.0
  %448 = vmatpush.msra.mxu0 0.0
  %449 = vmatpush.msra.mxu0 0.0
  %450 = vmatpush.msra.mxu0 0.0
  %451 = vmatpush.msra.mxu0 0.0
  %452 = vmatpush.msra.mxu0 0.0
  %453 = vmatpush.msra.mxu0 0.0
  %454 = vmatpush.msra.mxu0 0.0
  %455 = vmatpush.msra.mxu0 0.0
  %456 = vmatpush.msra.mxu0 0.0
  %457 = vmatpush.msra.mxu0 0.0
  %458 = vmatpush.msra.mxu0 %v442
  %459 = vmatpush.msra.mxu0 %v418
  %460 = vmatmul.f32.gmra.mxu0 %v437
  %v461 = vpop.f32.mrf.mxu0
  %v462 = vadd.f32 0.0, %v461
  %463 = vmatmul.f32.gmra.mxu0 %v439
  %v464 = vpop.f32.mrf.mxu0
  %v465 = vadd.f32 0.0, %v464
  %466 = vdwg.mxu0
  %v467 = vadd.f32 %v408, %v462
  %v468 = vadd.f32 %v409, %v465
  %s469 = scalar_lea.vmem %s3, 160
  %v470 = vld [vmem:[%s469] sm:$0xff]
  %v471 = vld [vmem:[%s469 + $0x8] sm:$0xf]
  %472 = vst [vmem:[#allocation1] ss:$4 sm:$0xff] %v146
  %s473 = scalar_lea.vmem [#allocation1], 1
  %474 = vst [vmem:[%s473] ss:$4 sm:$0xff] %v158
  %s475 = scalar_lea.vmem [#allocation1], 2
  %476 = vst [vmem:[%s475] ss:$4 sm:$0xff] %v160
  %s477 = scalar_lea.vmem [#allocation1], 3
  %478 = vst [vmem:[%s477] ss:$4 sm:$0xff] %v147
  %s479 = scalar_lea.vmem [#allocation1], 32
  %480 = vst [vmem:[%s479] ss:$4 sm:$0xff] %v162
  %s481 = scalar_lea.vmem [#allocation1], 33
  %482 = vst [vmem:[%s481] ss:$4 sm:$0xff] %v163
  %s483 = scalar_lea.vmem [#allocation1], 34
  %484 = vst [vmem:[%s483] ss:$4 sm:$0xff] %v164
  %s485 = scalar_lea.vmem [#allocation1], 35
  %486 = vst [vmem:[%s485] ss:$4 sm:$0xff] %v165
  %v487 = vld.sshfl [vmem:[#allocation1] sm:$0xff pattern:$0x73625140]
  %v488 = vld.sshfl [vmem:[#allocation1 + $0x20] sm:$0xff pattern:$0x73625140]
  %v489 = vsel %vm227, %v487, 0
  %v491 = vsel %vm227, %v488, 0
  %v494 = vsel %vm232, %v471, 0
  %496 = vmatpush.msra.mxu0 0.0
  %497 = vmatpush.msra.mxu0 0.0
  %498 = vmatpush.msra.mxu0 0.0
  %499 = vmatpush.msra.mxu0 0.0
  %500 = vmatpush.msra.mxu0 0.0
  %501 = vmatpush.msra.mxu0 0.0
  %502 = vmatpush.msra.mxu0 0.0
  %503 = vmatpush.msra.mxu0 0.0
  %504 = vmatpush.msra.mxu0 0.0
  %505 = vmatpush.msra.mxu0 0.0
  %506 = vmatpush.msra.mxu0 0.0
  %507 = vmatpush.msra.mxu0 0.0
  %508 = vmatpush.msra.mxu0 0.0
  %509 = vmatpush.msra.mxu0 0.0
  %510 = vmatpush.msra.mxu0 %v494
  %511 = vmatpush.msra.mxu0 %v470
  %512 = vmatmul.f32.gmra.mxu0 %v489
  %v513 = vpop.f32.mrf.mxu0
  %v514 = vadd.f32 0.0, %v513
  %515 = vmatmul.f32.gmra.mxu0 %v491
  %v516 = vpop.f32.mrf.mxu0
  %v517 = vadd.f32 0.0, %v516
  %518 = vdwg.mxu0
  %v519 = vadd.f32 %v467, %v514
  %v520 = vadd.f32 %v468, %v517
  %s521 = scalar_lea.vmem %s3, 64
  %v522 = vld [vmem:[%s521] sm:$0xff]
  %v523 = vld [vmem:[%s521 + $0x8] sm:$0xf]
  %524 = vst [vmem:[#allocation1] ss:$4 sm:$0xff] %v159
  %s525 = scalar_lea.vmem [#allocation1], 1
  %526 = vst [vmem:[%s525] ss:$4 sm:$0xff] %v160
  %s527 = scalar_lea.vmem [#allocation1], 2
  %528 = vst [vmem:[%s527] ss:$4 sm:$0xff] %v161
  %s529 = scalar_lea.vmem [#allocation1], 3
  %530 = vst [vmem:[%s529] ss:$4 sm:$0xff] %v162
  %s531 = scalar_lea.vmem [#allocation1], 32
  %532 = vst [vmem:[%s531] ss:$4 sm:$0xff] %v148
  %s533 = scalar_lea.vmem [#allocation1], 33
  %534 = vst [vmem:[%s533] ss:$4 sm:$0xff] %v164
  %s535 = scalar_lea.vmem [#allocation1], 34
  %536 = vst [vmem:[%s535] ss:$4 sm:$0xff] %v166
  %s537 = scalar_lea.vmem [#allocation1], 35
  %538 = vst [vmem:[%s537] ss:$4 sm:$0xff] %v149
  %v539 = vld.sshfl [vmem:[#allocation1] sm:$0xff pattern:$0x73625140]
  %v540 = vld.sshfl [vmem:[#allocation1 + $0x20] sm:$0xff pattern:$0x73625140]
  %v541 = vsel %vm227, %v539, 0
  %v543 = vsel %vm227, %v540, 0
  %v546 = vsel %vm232, %v523, 0
  %548 = vmatpush.msra.mxu0 0.0
  %549 = vmatpush.msra.mxu0 0.0
  %550 = vmatpush.msra.mxu0 0.0
  %551 = vmatpush.msra.mxu0 0.0
  %552 = vmatpush.msra.mxu0 0.0
  %553 = vmatpush.msra.mxu0 0.0
  %554 = vmatpush.msra.mxu0 0.0
  %555 = vmatpush.msra.mxu0 0.0
  %556 = vmatpush.msra.mxu0 0.0
  %557 = vmatpush.msra.mxu0 0.0
  %558 = vmatpush.msra.mxu0 0.0
  %559 = vmatpush.msra.mxu0 0.0
  %560 = vmatpush.msra.mxu0 0.0
  %561 = vmatpush.msra.mxu0 0.0
  %562 = vmatpush.msra.mxu0 %v546
  %563 = vmatpush.msra.mxu0 %v522
  %564 = vmatmul.f32.gmra.mxu0 %v541
  %v565 = vpop.f32.mrf.mxu0
  %v566 = vadd.f32 0.0, %v565
  %567 = vmatmul.f32.gmra.mxu0 %v543
  %v568 = vpop.f32.mrf.mxu0
  %v569 = vadd.f32 0.0, %v568
  %570 = vdwg.mxu0
  %v571 = vadd.f32 %v519, %v566
  %v572 = vadd.f32 %v520, %v569
  %v573 = vrot.slane %v166, 7
  %v574 = vrot.slane %v573, 2
  %v575 = vrot.slane %v149, 7
  %v576 = vsel %vm178, %v574, %v575
  %v577 = vrot.slane %v575, 2
  %v578 = vrot.slane %v167, 7
  %v579 = vsel %vm178, %v577, %v578
  %s580 = scalar_lea.vmem %s3, 32
  %v581 = vld [vmem:[%s580] sm:$0xff]
  %v582 = vld [vmem:[%s580 + $0x8] sm:$0xf]
  %583 = vst [vmem:[#allocation1] ss:$4 sm:$0xff] %v196
  %s584 = scalar_lea.vmem [#allocation1], 1
  %585 = vst [vmem:[%s584] ss:$4 sm:$0xff] %v199
  %s586 = scalar_lea.vmem [#allocation1], 2
  %587 = vst [vmem:[%s586] ss:$4 sm:$0xff] %v203
  %s588 = scalar_lea.vmem [#allocation1], 3
  %589 = vst [vmem:[%s588] ss:$4 sm:$0xff] %v206
  %s590 = scalar_lea.vmem [#allocation1], 32
  %591 = vst [vmem:[%s590] ss:$4 sm:$0xff] %v413
  %s592 = scalar_lea.vmem [#allocation1], 33
  %593 = vst [vmem:[%s592] ss:$4 sm:$0xff] %v416
  %s594 = scalar_lea.vmem [#allocation1], 34
  %595 = vst [vmem:[%s594] ss:$4 sm:$0xff] %v576
  %s596 = scalar_lea.vmem [#allocation1], 35
  %597 = vst [vmem:[%s596] ss:$4 sm:$0xff] %v579
  %v598 = vld.sshfl [vmem:[#allocation1] sm:$0xff pattern:$0x73625140]
  %v599 = vld.sshfl [vmem:[#allocation1 + $0x20] sm:$0xff pattern:$0x73625140]
  %v600 = vsel %vm227, %v598, 0
  %v602 = vsel %vm227, %v599, 0
  %v605 = vsel %vm232, %v582, 0
  %607 = vmatpush.msra.mxu0 0.0
  %608 = vmatpush.msra.mxu0 0.0
  %609 = vmatpush.msra.mxu0 0.0
  %610 = vmatpush.msra.mxu0 0.0
  %611 = vmatpush.msra.mxu0 0.0
  %612 = vmatpush.msra.mxu0 0.0
  %613 = vmatpush.msra.mxu0 0.0
  %614 = vmatpush.msra.mxu0 0.0
  %615 = vmatpush.msra.mxu0 0.0
  %616 = vmatpush.msra.mxu0 0.0
  %617 = vmatpush.msra.mxu0 0.0
  %618 = vmatpush.msra.mxu0 0.0
  %619 = vmatpush.msra.mxu0 0.0
  %620 = vmatpush.msra.mxu0 0.0
  %621 = vmatpush.msra.mxu0 %v605
  %622 = vmatpush.msra.mxu0 %v581
  %623 = vmatmul.f32.gmra.mxu0 %v600
  %v624 = vpop.f32.mrf.mxu0
  %v625 = vadd.f32 0.0, %v624
  %626 = vmatmul.f32.gmra.mxu0 %v602
  %v627 = vpop.f32.mrf.mxu0
  %v628 = vadd.f32 0.0, %v627
  %629 = vdwg.mxu0
  %v630 = vadd.f32 %v571, %v625
  %v631 = vadd.f32 %v572, %v628
  %v632 = vld [vmem:[%s3] sm:$0xff]
  %v633 = vld [vmem:[%s3 + $0x8] sm:$0xf]
  %634 = vst [vmem:[#allocation1] ss:$4 sm:$0xff] %v160
  %s635 = scalar_lea.vmem [#allocation1], 1
  %636 = vst [vmem:[%s635] ss:$4 sm:$0xff] %v147
  %s637 = scalar_lea.vmem [#allocation1], 2
  %638 = vst [vmem:[%s637] ss:$4 sm:$0xff] %v162
  %s639 = scalar_lea.vmem [#allocation1], 3
  %640 = vst [vmem:[%s639] ss:$4 sm:$0xff] %v163
  %s641 = scalar_lea.vmem [#allocation1], 32
  %642 = vst [vmem:[%s641] ss:$4 sm:$0xff] %v164
  %s643 = scalar_lea.vmem [#allocation1], 33
  %644 = vst [vmem:[%s643] ss:$4 sm:$0xff] %v165
  %s645 = scalar_lea.vmem [#allocation1], 34
  %646 = vst [vmem:[%s645] ss:$4 sm:$0xff] %v149
  %s647 = scalar_lea.vmem [#allocation1], 35
  %648 = vst [vmem:[%s647] ss:$4 sm:$0xff] %v167
  %v649 = vld.sshfl [vmem:[#allocation1] sm:$0xff pattern:$0x73625140]
  %v650 = vld.sshfl [vmem:[#allocation1 + $0x20] sm:$0xff pattern:$0x73625140]
  %v651 = vsel %vm227, %v649, 0
  %v653 = vsel %vm227, %v650, 0
  %v656 = vsel %vm232, %v633, 0
  %658 = vmatpush.msra.mxu0 0.0
  %659 = vmatpush.msra.mxu0 0.0
  %660 = vmatpush.msra.mxu0 0.0
  %661 = vmatpush.msra.mxu0 0.0
  %662 = vmatpush.msra.mxu0 0.0
  %663 = vmatpush.msra.mxu0 0.0
  %664 = vmatpush.msra.mxu0 0.0
  %665 = vmatpush.msra.mxu0 0.0
  %666 = vmatpush.msra.mxu0 0.0
  %667 = vmatpush.msra.mxu0 0.0
  %668 = vmatpush.msra.mxu0 0.0
  %669 = vmatpush.msra.mxu0 0.0
  %670 = vmatpush.msra.mxu0 0.0
  %671 = vmatpush.msra.mxu0 0.0
  %672 = vmatpush.msra.mxu0 %v656
  %673 = vmatpush.msra.mxu0 %v632
  %674 = vmatmul.f32.gmra.mxu0 %v651
  %v675 = vpop.f32.mrf.mxu0
  %v676 = vadd.f32 0.0, %v675
  %677 = vmatmul.f32.gmra.mxu0 %v653
  %v678 = vpop.f32.mrf.mxu0
  %v679 = vadd.f32 0.0, %v678
  %680 = vdwg.mxu0
  %v681 = vadd.f32 %v630, %v676
  %v682 = vadd.f32 %v631, %v679
  %v684 = vperm.slane %v168, 0
  %v686 = vadd.f32 %v681, %v684
  %v687 = vadd.f32 %v682, %v684
  %v688 = vmax.f32 %v686, 0.0
  %v689 = vmax.f32 %v687, 0.0
  %s690 = scalar_lea.vmem %s3, 368
  %v691 = vld [vmem:[%s690] sm:$0xff]
  %v692 = vld [vmem:[%s690 + $0x8] sm:$0xf]
  %s693 = scalar_lea.vmem %s3, 336
  %v694 = vld [vmem:[%s693] sm:$0xff]
  %v695 = vld [vmem:[%s693 + $0x8] sm:$0xf]
  %696 = vst [vmem:[#allocation1] ss:$4 sm:$0xff] %v155
  %s697 = scalar_lea.vmem [#allocation1], 1
  %698 = vst [vmem:[%s697] ss:$4 sm:$0xff] %v156
  %s699 = scalar_lea.vmem [#allocation1], 2
  %700 = vst [vmem:[%s699] ss:$4 sm:$0xff] %v146
  %s701 = scalar_lea.vmem [#allocation1], 3
  %702 = vst [vmem:[%s701] ss:$4 sm:$0xff] %v158
  %s703 = scalar_lea.vmem [#allocation1], 32
  %704 = vst [vmem:[%s703] ss:$4 sm:$0xff] %v160
  %s705 = scalar_lea.vmem [#allocation1], 33
  %706 = vst [vmem:[%s705] ss:$4 sm:$0xff] %v147
  %s707 = scalar_lea.vmem [#allocation1], 34
  %708 = vst [vmem:[%s707] ss:$4 sm:$0xff] %v162
  %s709 = scalar_lea.vmem [#allocation1], 35
  %710 = vst [vmem:[%s709] ss:$4 sm:$0xff] %v163
  %v711 = vld.sshfl [vmem:[#allocation1] sm:$0xff pattern:$0x73625140]
  %v712 = vld.sshfl [vmem:[#allocation1 + $0x20] sm:$0xff pattern:$0x73625140]
  %v713 = vsel %vm227, %v711, 0
  %v715 = vsel %vm227, %v712, 0
  %v718 = vsel %vm232, %v695, 0
  %720 = vmatpush.msra.mxu0 0.0
  %721 = vmatpush.msra.mxu0 0.0
  %722 = vmatpush.msra.mxu0 0.0
  %723 = vmatpush.msra.mxu0 0.0
  %724 = vmatpush.msra.mxu0 0.0
  %725 = vmatpush.msra.mxu0 0.0
  %726 = vmatpush.msra.mxu0 0.0
  %727 = vmatpush.msra.mxu0 0.0
  %728 = vmatpush.msra.mxu0 0.0
  %729 = vmatpush.msra.mxu0 0.0
  %730 = vmatpush.msra.mxu0 0.0
  %731 = vmatpush.msra.mxu0 0.0
  %732 = vmatpush.msra.mxu0 0.0
  %733 = vmatpush.msra.mxu0 0.0
  %734 = vmatpush.msra.mxu0 %v718
  %735 = vmatpush.msra.mxu0 %v694
  %736 = vmatmul.f32.gmra.mxu0 %v713
  %v737 = vpop.f32.mrf.mxu0
  %v738 = vadd.f32 0.0, %v737
  %739 = vmatmul.f32.gmra.mxu0 %v715
  %v740 = vpop.f32.mrf.mxu0
  %v741 = vadd.f32 0.0, %v740
  %742 = vdwg.mxu0
  %743 = vst [vmem:[#allocation1] ss:$4 sm:$0xff] %v182
  %s744 = scalar_lea.vmem [#allocation1], 1
  %745 = vst [vmem:[%s744] ss:$4 sm:$0xff] %v185
  %s746 = scalar_lea.vmem [#allocation1], 2
  %747 = vst [vmem:[%s746] ss:$4 sm:$0xff] %v189
  %s748 = scalar_lea.vmem [#allocation1], 3
  %749 = vst [vmem:[%s748] ss:$4 sm:$0xff] %v192
  %s750 = scalar_lea.vmem [#allocation1], 32
  %751 = vst [vmem:[%s750] ss:$4 sm:$0xff] %v196
  %s752 = scalar_lea.vmem [#allocation1], 33
  %753 = vst [vmem:[%s752] ss:$4 sm:$0xff] %v199
  %s754 = scalar_lea.vmem [#allocation1], 34
  %755 = vst [vmem:[%s754] ss:$4 sm:$0xff] %v203
  %s756 = scalar_lea.vmem [#allocation1], 35
  %757 = vst [vmem:[%s756] ss:$4 sm:$0xff] %v206
  %v758 = vld.sshfl [vmem:[#allocation1] sm:$0xff pattern:$0x73625140]
  %v759 = vld.sshfl [vmem:[#allocation1 + $0x20] sm:$0xff pattern:$0x73625140]
  %v760 = vsel %vm227, %v758, 0
  %v762 = vsel %vm227, %v759, 0
  %v765 = vsel %vm232, %v692, 0
  %767 = vmatpush.msra.mxu0 0.0
  %768 = vmatpush.msra.mxu0 0.0
  %769 = vmatpush.msra.mxu0 0.0
  %770 = vmatpush.msra.mxu0 0.0
  %771 = vmatpush.msra.mxu0 0.0
  %772 = vmatpush.msra.mxu0 0.0
  %773 = vmatpush.msra.mxu0 0.0
  %774 = vmatpush.msra.mxu0 0.0
  %775 = vmatpush.msra.mxu0 0.0
  %776 = vmatpush.msra.mxu0 0.0
  %777 = vmatpush.msra.mxu0 0.0
  %778 = vmatpush.msra.mxu0 0.0
  %779 = vmatpush.msra.mxu0 0.0
  %780 = vmatpush.msra.mxu0 0.0
  %781 = vmatpush.msra.mxu0 %v765
  %782 = vmatpush.msra.mxu0 %v691
  %783 = vmatmul.f32.gmra.mxu0 %v760
  %v784 = vpop.f32.mrf.mxu0
  %v785 = vadd.f32 %v738, %v784
  %786 = vmatmul.f32.gmra.mxu0 %v762
  %v787 = vpop.f32.mrf.mxu0
  %v788 = vadd.f32 %v741, %v787
  %789 = vdwg.mxu0
  %s790 = scalar_lea.vmem %s3, 208
  %v791 = vld [vmem:[%s790] sm:$0xff]
  %v792 = vld [vmem:[%s790 + $0x8] sm:$0xf]
  %793 = vst [vmem:[#allocation1] ss:$4 sm:$0xff] %v189
  %s794 = scalar_lea.vmem [#allocation1], 1
  %795 = vst [vmem:[%s794] ss:$4 sm:$0xff] %v192
  %s796 = scalar_lea.vmem [#allocation1], 2
  %797 = vst [vmem:[%s796] ss:$4 sm:$0xff] %v196
  %s798 = scalar_lea.vmem [#allocation1], 3
  %799 = vst [vmem:[%s798] ss:$4 sm:$0xff] %v199
  %s800 = scalar_lea.vmem [#allocation1], 32
  %801 = vst [vmem:[%s800] ss:$4 sm:$0xff] %v203
  %s802 = scalar_lea.vmem [#allocation1], 33
  %803 = vst [vmem:[%s802] ss:$4 sm:$0xff] %v206
  %s804 = scalar_lea.vmem [#allocation1], 34
  %805 = vst [vmem:[%s804] ss:$4 sm:$0xff] %v413
  %s806 = scalar_lea.vmem [#allocation1], 35
  %807 = vst [vmem:[%s806] ss:$4 sm:$0xff] %v416
  %v808 = vld.sshfl [vmem:[#allocation1] sm:$0xff pattern:$0x73625140]
  %v809 = vld.sshfl [vmem:[#allocation1 + $0x20] sm:$0xff pattern:$0x73625140]
  %v810 = vsel %vm227, %v808, 0
  %v812 = vsel %vm227, %v809, 0
  %v815 = vsel %vm232, %v792, 0
  %817 = vmatpush.msra.mxu0 0.0
  %818 = vmatpush.msra.mxu0 0.0
  %819 = vmatpush.msra.mxu0 0.0
  %820 = vmatpush.msra.mxu0 0.0
  %821 = vmatpush.msra.mxu0 0.0
  %822 = vmatpush.msra.mxu0 0.0
  %823 = vmatpush.msra.mxu0 0.0
  %824 = vmatpush.msra.mxu0 0.0
  %825 = vmatpush.msra.mxu0 0.0
  %826 = vmatpush.msra.mxu0 0.0
  %827 = vmatpush.msra.mxu0 0.0
  %828 = vmatpush.msra.mxu0 0.0
  %829 = vmatpush.msra.mxu0 0.0
  %830 = vmatpush.msra.mxu0 0.0
  %831 = vmatpush.msra.mxu0 %v815
  %832 = vmatpush.msra.mxu0 %v791
  %833 = vmatmul.f32.gmra.mxu0 %v810
  %v834 = vpop.f32.mrf.mxu0
  %v835 = vadd.f32 0.0, %v834
  %836 = vmatmul.f32.gmra.mxu0 %v812
  %v837 = vpop.f32.mrf.mxu0
  %v838 = vadd.f32 0.0, %v837
  %839 = vdwg.mxu0
  %v840 = vadd.f32 %v785, %v835
  %v841 = vadd.f32 %v788, %v838
  %s842 = scalar_lea.vmem %s3, 176
  %v843 = vld [vmem:[%s842] sm:$0xff]
  %v844 = vld [vmem:[%s842 + $0x8] sm:$0xf]
  %845 = vst [vmem:[#allocation1] ss:$4 sm:$0xff] %v146
  %s846 = scalar_lea.vmem [#allocation1], 1
  %847 = vst [vmem:[%s846] ss:$4 sm:$0xff] %v158
  %s848 = scalar_lea.vmem [#allocation1], 2
  %849 = vst [vmem:[%s848] ss:$4 sm:$0xff] %v160
  %s850 = scalar_lea.vmem [#allocation1], 3
  %851 = vst [vmem:[%s850] ss:$4 sm:$0xff] %v147
  %s852 = scalar_lea.vmem [#allocation1], 32
  %853 = vst [vmem:[%s852] ss:$4 sm:$0xff] %v162
  %s854 = scalar_lea.vmem [#allocation1], 33
  %855 = vst [vmem:[%s854] ss:$4 sm:$0xff] %v163
  %s856 = scalar_lea.vmem [#allocation1], 34
  %857 = vst [vmem:[%s856] ss:$4 sm:$0xff] %v164
  %s858 = scalar_lea.vmem [#allocation1], 35
  %859 = vst [vmem:[%s858] ss:$4 sm:$0xff] %v165
  %v860 = vld.sshfl [vmem:[#allocation1] sm:$0xff pattern:$0x73625140]
  %v861 = vld.sshfl [vmem:[#allocation1 + $0x20] sm:$0xff pattern:$0x73625140]
  %v862 = vsel %vm227, %v860, 0
  %v864 = vsel %vm227, %v861, 0
  %v867 = vsel %vm232, %v844, 0
  %869 = vmatpush.msra.mxu0 0.0
  %870 = vmatpush.msra.mxu0 0.0
  %871 = vmatpush.msra.mxu0 0.0
  %872 = vmatpush.msra.mxu0 0.0
  %873 = vmatpush.msra.mxu0 0.0
  %874 = vmatpush.msra.mxu0 0.0
  %875 = vmatpush.msra.mxu0 0.0
  %876 = vmatpush.msra.mxu0 0.0
  %877 = vmatpush.msra.mxu0 0.0
  %878 = vmatpush.msra.mxu0 0.0
  %879 = vmatpush.msra.mxu0 0.0
  %880 = vmatpush.msra.mxu0 0.0
  %881 = vmatpush.msra.mxu0 0.0
  %882 = vmatpush.msra.mxu0 0.0
  %883 = vmatpush.msra.mxu0 %v867
  %884 = vmatpush.msra.mxu0 %v843
  %885 = vmatmul.f32.gmra.mxu0 %v862
  %v886 = vpop.f32.mrf.mxu0
  %v887 = vadd.f32 0.0, %v886
  %888 = vmatmul.f32.gmra.mxu0 %v864
  %v889 = vpop.f32.mrf.mxu0
  %v890 = vadd.f32 0.0, %v889
  %891 = vdwg.mxu0
  %v892 = vadd.f32 %v840, %v887
  %v893 = vadd.f32 %v841, %v890
  %s894 = scalar_lea.vmem %s3, 48
  %v895 = vld [vmem:[%s894] sm:$0xff]
  %v896 = vld [vmem:[%s894 + $0x8] sm:$0xf]
  %897 = vst [vmem:[#allocation1] ss:$4 sm:$0xff] %v196
  %s898 = scalar_lea.vmem [#allocation1], 1
  %899 = vst [vmem:[%s898] ss:$4 sm:$0xff] %v199
  %s900 = scalar_lea.vmem [#allocation1], 2
  %901 = vst [vmem:[%s900] ss:$4 sm:$0xff] %v203
  %s902 = scalar_lea.vmem [#allocation1], 3
  %903 = vst [vmem:[%s902] ss:$4 sm:$0xff] %v206
  %s904 = scalar_lea.vmem [#allocation1], 32
  %905 = vst [vmem:[%s904] ss:$4 sm:$0xff] %v413
  %s906 = scalar_lea.vmem [#allocation1], 33
  %907 = vst [vmem:[%s906] ss:$4 sm:$0xff] %v416
  %s908 = scalar_lea.vmem [#allocation1], 34
  %909 = vst [vmem:[%s908] ss:$4 sm:$0xff] %v576
  %s910 = scalar_lea.vmem [#allocation1], 35
  %911 = vst [vmem:[%s910] ss:$4 sm:$0xff] %v579
  %v912 = vld.sshfl [vmem:[#allocation1] sm:$0xff pattern:$0x73625140]
  %v913 = vld.sshfl [vmem:[#allocation1 + $0x20] sm:$0xff pattern:$0x73625140]
  %v914 = vsel %vm227, %v912, 0
  %v916 = vsel %vm227, %v913, 0
  %v919 = vsel %vm232, %v896, 0
  %921 = vmatpush.msra.mxu0 0.0
  %922 = vmatpush.msra.mxu0 0.0
  %923 = vmatpush.msra.mxu0 0.0
  %924 = vmatpush.msra.mxu0 0.0
  %925 = vmatpush.msra.mxu0 0.0
  %926 = vmatpush.msra.mxu0 0.0
  %927 = vmatpush.msra.mxu0 0.0
  %928 = vmatpush.msra.mxu0 0.0
  %929 = vmatpush.msra.mxu0 0.0
  %930 = vmatpush.msra.mxu0 0.0
  %931 = vmatpush.msra.mxu0 0.0
  %932 = vmatpush.msra.mxu0 0.0
  %933 = vmatpush.msra.mxu0 0.0
  %934 = vmatpush.msra.mxu0 0.0
  %935 = vmatpush.msra.mxu0 %v919
  %936 = vmatpush.msra.mxu0 %v895
  %937 = vmatmul.f32.gmra.mxu0 %v914
  %v938 = vpop.f32.mrf.mxu0
  %v939 = vadd.f32 0.0, %v938
  %940 = vmatmul.f32.gmra.mxu0 %v916
  %v941 = vpop.f32.mrf.mxu0
  %v942 = vadd.f32 0.0, %v941
  %943 = vdwg.mxu0
  %v944 = vadd.f32 %v892, %v939
  %v945 = vadd.f32 %v893, %v942
  %s946 = scalar_lea.vmem %s3, 16
  %v947 = vld [vmem:[%s946] sm:$0xff]
  %v948 = vld [vmem:[%s946 + $0x8] sm:$0xf]
  %949 = vst [vmem:[#allocation1] ss:$4 sm:$0xff] %v160
  %s950 = scalar_lea.vmem [#allocation1], 1
  %951 = vst [vmem:[%s950] ss:$4 sm:$0xff] %v147
  %s952 = scalar_lea.vmem [#allocation1], 2
  %953 = vst [vmem:[%s952] ss:$4 sm:$0xff] %v162
  %s954 = scalar_lea.vmem [#allocation1], 3
  %955 = vst [vmem:[%s954] ss:$4 sm:$0xff] %v163
  %s956 = scalar_lea.vmem [#allocation1], 32
  %957 = vst [vmem:[%s956] ss:$4 sm:$0xff] %v164
  %s958 = scalar_lea.vmem [#allocation1], 33
  %959 = vst [vmem:[%s958] ss:$4 sm:$0xff] %v165
  %s960 = scalar_lea.vmem [#allocation1], 34
  %961 = vst [vmem:[%s960] ss:$4 sm:$0xff] %v149
  %s962 = scalar_lea.vmem [#allocation1], 35
  %963 = vst [vmem:[%s962] ss:$4 sm:$0xff] %v167
  %v964 = vld.sshfl [vmem:[#allocation1] sm:$0xff pattern:$0x73625140]
  %v965 = vld.sshfl [vmem:[#allocation1 + $0x20] sm:$0xff pattern:$0x73625140]
  %v966 = vsel %vm227, %v964, 0
  %v968 = vsel %vm227, %v965, 0
  %v971 = vsel %vm232, %v948, 0
  %973 = vmatpush.msra.mxu0 0.0
  %974 = vmatpush.msra.mxu0 0.0
  %975 = vmatpush.msra.mxu0 0.0
  %976 = vmatpush.msra.mxu0 0.0
  %977 = vmatpush.msra.mxu0 0.0
  %978 = vmatpush.msra.mxu0 0.0
  %979 = vmatpush.msra.mxu0 0.0
  %980 = vmatpush.msra.mxu0 0.0
  %981 = vmatpush.msra.mxu0 0.0
  %982 = vmatpush.msra.mxu0 0.0
  %983 = vmatpush.msra.mxu0 0.0
  %984 = vmatpush.msra.mxu0 0.0
  %985 = vmatpush.msra.mxu0 0.0
  %986 = vmatpush.msra.mxu0 0.0
  %987 = vmatpush.msra.mxu0 %v971
  %988 = vmatpush.msra.mxu0 %v947
  %989 = vmatmul.f32.gmra.mxu0 %v966
  %v990 = vpop.f32.mrf.mxu0
  %v991 = vadd.f32 0.0, %v990
  %992 = vmatmul.f32.gmra.mxu0 %v968
  %v993 = vpop.f32.mrf.mxu0
  %v994 = vadd.f32 0.0, %v993
  %995 = vdwg.mxu0
  %v996 = vadd.f32 %v944, %v991
  %v997 = vadd.f32 %v945, %v994
  %v998 = vadd.f32 %v996, %v684
  %v999 = vadd.f32 %v997, %v684
  %v1000 = vmax.f32 %v998, 0.0
  %v1001 = vmax.f32 %v999, 0.0
  %s1002 = scalar_lea.vmem %s3, 304
  %v1003 = vld [vmem:[%s1002] sm:$0xff]
  %v1004 = vld [vmem:[%s1002 + $0x8] sm:$0xf]
  %s1005 = scalar_lea.vmem %s3, 272
  %v1006 = vld [vmem:[%s1005] sm:$0xff]
  %v1007 = vld [vmem:[%s1005 + $0x8] sm:$0xf]
  %1008 = vst [vmem:[#allocation1] ss:$4 sm:$0xff] %v189
  %s1009 = scalar_lea.vmem [#allocation1], 1
  %1010 = vst [vmem:[%s1009] ss:$4 sm:$0xff] %v192
  %s1011 = scalar_lea.vmem [#allocation1], 2
  %1012 = vst [vmem:[%s1011] ss:$4 sm:$0xff] %v196
  %s1013 = scalar_lea.vmem [#allocation1], 3
  %1014 = vst [vmem:[%s1013] ss:$4 sm:$0xff] %v199
  %s1015 = scalar_lea.vmem [#allocation1], 32
  %1016 = vst [vmem:[%s1015] ss:$4 sm:$0xff] %v203
  %s1017 = scalar_lea.vmem [#allocation1], 33
  %1018 = vst [vmem:[%s1017] ss:$4 sm:$0xff] %v206
  %s1019 = scalar_lea.vmem [#allocation1], 34
  %1020 = vst [vmem:[%s1019] ss:$4 sm:$0xff] %v413
  %s1021 = scalar_lea.vmem [#allocation1], 35
  %1022 = vst [vmem:[%s1021] ss:$4 sm:$0xff] %v416
  %v1023 = vld.sshfl [vmem:[#allocation1] sm:$0xff pattern:$0x73625140]
  %v1024 = vld.sshfl [vmem:[#allocation1 + $0x20] sm:$0xff pattern:$0x73625140]
  %v1025 = vsel %vm227, %v1023, 0
  %v1027 = vsel %vm227, %v1024, 0
  %v1030 = vsel %vm232, %v1007, 0
  %1032 = vmatpush.msra.mxu0 0.0
  %1033 = vmatpush.msra.mxu0 0.0
  %1034 = vmatpush.msra.mxu0 0.0
  %1035 = vmatpush.msra.mxu0 0.0
  %1036 = vmatpush.msra.mxu0 0.0
  %1037 = vmatpush.msra.mxu0 0.0
  %1038 = vmatpush.msra.mxu0 0.0
  %1039 = vmatpush.msra.mxu0 0.0
  %1040 = vmatpush.msra.mxu0 0.0
  %1041 = vmatpush.msra.mxu0 0.0
  %1042 = vmatpush.msra.mxu0 0.0
  %1043 = vmatpush.msra.mxu0 0.0
  %1044 = vmatpush.msra.mxu0 0.0
  %1045 = vmatpush.msra.mxu0 0.0
  %1046 = vmatpush.msra.mxu0 %v1030
  %1047 = vmatpush.msra.mxu0 %v1006
  %1048 = vmatmul.f32.gmra.mxu0 %v1025
  %v1049 = vpop.f32.mrf.mxu0
  %v1050 = vadd.f32 0.0, %v1049
  %1051 = vmatmul.f32.gmra.mxu0 %v1027
  %v1052 = vpop.f32.mrf.mxu0
  %v1053 = vadd.f32 0.0, %v1052
  %1054 = vdwg.mxu0
  %1055 = vst [vmem:[#allocation1] ss:$4 sm:$0xff] %v157
  %s1056 = scalar_lea.vmem [#allocation1], 1
  %1057 = vst [vmem:[%s1056] ss:$4 sm:$0xff] %v146
  %s1058 = scalar_lea.vmem [#allocation1], 2
  %1059 = vst [vmem:[%s1058] ss:$4 sm:$0xff] %v159
  %s1060 = scalar_lea.vmem [#allocation1], 3
  %1061 = vst [vmem:[%s1060] ss:$4 sm:$0xff] %v160
  %s1062 = scalar_lea.vmem [#allocation1], 32
  %1063 = vst [vmem:[%s1062] ss:$4 sm:$0xff] %v161
  %s1064 = scalar_lea.vmem [#allocation1], 33
  %1065 = vst [vmem:[%s1064] ss:$4 sm:$0xff] %v162
  %s1066 = scalar_lea.vmem [#allocation1], 34
  %1067 = vst [vmem:[%s1066] ss:$4 sm:$0xff] %v148
  %s1068 = scalar_lea.vmem [#allocation1], 35
  %1069 = vst [vmem:[%s1068] ss:$4 sm:$0xff] %v164
  %v1070 = vld.sshfl [vmem:[#allocation1] sm:$0xff pattern:$0x73625140]
  %v1071 = vld.sshfl [vmem:[#allocation1 + $0x20] sm:$0xff pattern:$0x73625140]
  %v1072 = vsel %vm227, %v1070, 0
  %v1074 = vsel %vm227, %v1071, 0
  %v1077 = vsel %vm232, %v1004, 0
  %1079 = vmatpush.msra.mxu0 0.0
  %1080 = vmatpush.msra.mxu0 0.0
  %1081 = vmatpush.msra.mxu0 0.0
  %1082 = vmatpush.msra.mxu0 0.0
  %1083 = vmatpush.msra.mxu0 0.0
  %1084 = vmatpush.msra.mxu0 0.0
  %1085 = vmatpush.msra.mxu0 0.0
  %1086 = vmatpush.msra.mxu0 0.0
  %1087 = vmatpush.msra.mxu0 0.0
  %1088 = vmatpush.msra.mxu0 0.0
  %1089 = vmatpush.msra.mxu0 0.0
  %1090 = vmatpush.msra.mxu0 0.0
  %1091 = vmatpush.msra.mxu0 0.0
  %1092 = vmatpush.msra.mxu0 0.0
  %1093 = vmatpush.msra.mxu0 %v1077
  %1094 = vmatpush.msra.mxu0 %v1003
  %1095 = vmatmul.f32.gmra.mxu0 %v1072
  %v1096 = vpop.f32.mrf.mxu0
  %v1097 = vadd.f32 %v1050, %v1096
  %1098 = vmatmul.f32.gmra.mxu0 %v1074
  %v1099 = vpop.f32.mrf.mxu0
  %v1100 = vadd.f32 %v1053, %v1099
  %1101 = vdwg.mxu0
  %s1102 = scalar_lea.vmem %s3, 240
  %v1103 = vld [vmem:[%s1102] sm:$0xff]
  %v1104 = vld [vmem:[%s1102 + $0x8] sm:$0xf]
  %1105 = vst [vmem:[#allocation1] ss:$4 sm:$0xff] %v146
  %s1106 = scalar_lea.vmem [#allocation1], 1
  %1107 = vst [vmem:[%s1106] ss:$4 sm:$0xff] %v158
  %s1108 = scalar_lea.vmem [#allocation1], 2
  %1109 = vst [vmem:[%s1108] ss:$4 sm:$0xff] %v160
  %s1110 = scalar_lea.vmem [#allocation1], 3
  %1111 = vst [vmem:[%s1110] ss:$4 sm:$0xff] %v147
  %s1112 = scalar_lea.vmem [#allocation1], 32
  %1113 = vst [vmem:[%s1112] ss:$4 sm:$0xff] %v162
  %s1114 = scalar_lea.vmem [#allocation1], 33
  %1115 = vst [vmem:[%s1114] ss:$4 sm:$0xff] %v163
  %s1116 = scalar_lea.vmem [#allocation1], 34
  %1117 = vst [vmem:[%s1116] ss:$4 sm:$0xff] %v164
  %s1118 = scalar_lea.vmem [#allocation1], 35
  %1119 = vst [vmem:[%s1118] ss:$4 sm:$0xff] %v165
  %v1120 = vld.sshfl [vmem:[#allocation1] sm:$0xff pattern:$0x73625140]
  %v1121 = vld.sshfl [vmem:[#allocation1 + $0x20] sm:$0xff pattern:$0x73625140]
  %v1122 = vsel %vm227, %v1120, 0
  %v1124 = vsel %vm227, %v1121, 0
  %v1127 = vsel %vm232, %v1104, 0
  %1129 = vmatpush.msra.mxu0 0.0
  %1130 = vmatpush.msra.mxu0 0.0
  %1131 = vmatpush.msra.mxu0 0.0
  %1132 = vmatpush.msra.mxu0 0.0
  %1133 = vmatpush.msra.mxu0 0.0
  %1134 = vmatpush.msra.mxu0 0.0
  %1135 = vmatpush.msra.mxu0 0.0
  %1136 = vmatpush.msra.mxu0 0.0
  %1137 = vmatpush.msra.mxu0 0.0
  %1138 = vmatpush.msra.mxu0 0.0
  %1139 = vmatpush.msra.mxu0 0.0
  %1140 = vmatpush.msra.mxu0 0.0
  %1141 = vmatpush.msra.mxu0 0.0
  %1142 = vmatpush.msra.mxu0 0.0
  %1143 = vmatpush.msra.mxu0 %v1127
  %1144 = vmatpush.msra.mxu0 %v1103
  %1145 = vmatmul.f32.gmra.mxu0 %v1122
  %v1146 = vpop.f32.mrf.mxu0
  %v1147 = vadd.f32 0.0, %v1146
  %1148 = vmatmul.f32.gmra.mxu0 %v1124
  %v1149 = vpop.f32.mrf.mxu0
  %v1150 = vadd.f32 0.0, %v1149
  %1151 = vdwg.mxu0
  %v1152 = vadd.f32 %v1097, %v1147
  %v1153 = vadd.f32 %v1100, %v1150
  %s1154 = scalar_lea.vmem %s3, 144
  %v1155 = vld [vmem:[%s1154] sm:$0xff]
  %v1156 = vld [vmem:[%s1154 + $0x8] sm:$0xf]
  %1157 = vst [vmem:[#allocation1] ss:$4 sm:$0xff] %v159
  %s1158 = scalar_lea.vmem [#allocation1], 1
  %1159 = vst [vmem:[%s1158] ss:$4 sm:$0xff] %v160
  %s1160 = scalar_lea.vmem [#allocation1], 2
  %1161 = vst [vmem:[%s1160] ss:$4 sm:$0xff] %v161
  %s1162 = scalar_lea.vmem [#allocation1], 3
  %1163 = vst [vmem:[%s1162] ss:$4 sm:$0xff] %v162
  %s1164 = scalar_lea.vmem [#allocation1], 32
  %1165 = vst [vmem:[%s1164] ss:$4 sm:$0xff] %v148
  %s1166 = scalar_lea.vmem [#allocation1], 33
  %1167 = vst [vmem:[%s1166] ss:$4 sm:$0xff] %v164
  %s1168 = scalar_lea.vmem [#allocation1], 34
  %1169 = vst [vmem:[%s1168] ss:$4 sm:$0xff] %v166
  %s1170 = scalar_lea.vmem [#allocation1], 35
  %1171 = vst [vmem:[%s1170] ss:$4 sm:$0xff] %v149
  %v1172 = vld.sshfl [vmem:[#allocation1] sm:$0xff pattern:$0x73625140]
  %v1173 = vld.sshfl [vmem:[#allocation1 + $0x20] sm:$0xff pattern:$0x73625140]
  %v1174 = vsel %vm227, %v1172, 0
  %v1176 = vsel %vm227, %v1173, 0
  %v1179 = vsel %vm232, %v1156, 0
  %1181 = vmatpush.msra.mxu0 0.0
  %1182 = vmatpush.msra.mxu0 0.0
  %1183 = vmatpush.msra.mxu0 0.0
  %1184 = vmatpush.msra.mxu0 0.0
  %1185 = vmatpush.msra.mxu0 0.0
  %1186 = vmatpush.msra.mxu0 0.0
  %1187 = vmatpush.msra.mxu0 0.0
  %1188 = vmatpush.msra.mxu0 0.0
  %1189 = vmatpush.msra.mxu0 0.0
  %1190 = vmatpush.msra.mxu0 0.0
  %1191 = vmatpush.msra.mxu0 0.0
  %1192 = vmatpush.msra.mxu0 0.0
  %1193 = vmatpush.msra.mxu0 0.0
  %1194 = vmatpush.msra.mxu0 0.0
  %1195 = vmatpush.msra.mxu0 %v1179
  %1196 = vmatpush.msra.mxu0 %v1155
  %1197 = vmatmul.f32.gmra.mxu0 %v1174
  %v1198 = vpop.f32.mrf.mxu0
  %v1199 = vadd.f32 0.0, %v1198
  %1200 = vmatmul.f32.gmra.mxu0 %v1176
  %v1201 = vpop.f32.mrf.mxu0
  %v1202 = vadd.f32 0.0, %v1201
  %1203 = vdwg.mxu0
  %v1204 = vadd.f32 %v1152, %v1199
  %v1205 = vadd.f32 %v1153, %v1202
  %s1206 = scalar_lea.vmem %s3, 112
  %v1207 = vld [vmem:[%s1206] sm:$0xff]
  %v1208 = vld [vmem:[%s1206 + $0x8] sm:$0xf]
  %1209 = vst [vmem:[#allocation1] ss:$4 sm:$0xff] %v196
  %s1210 = scalar_lea.vmem [#allocation1], 1
  %1211 = vst [vmem:[%s1210] ss:$4 sm:$0xff] %v199
  %s1212 = scalar_lea.vmem [#allocation1], 2
  %1213 = vst [vmem:[%s1212] ss:$4 sm:$0xff] %v203
  %s1214 = scalar_lea.vmem [#allocation1], 3
  %1215 = vst [vmem:[%s1214] ss:$4 sm:$0xff] %v206
  %s1216 = scalar_lea.vmem [#allocation1], 32
  %1217 = vst [vmem:[%s1216] ss:$4 sm:$0xff] %v413
  %s1218 = scalar_lea.vmem [#allocation1], 33
  %1219 = vst [vmem:[%s1218] ss:$4 sm:$0xff] %v416
  %s1220 = scalar_lea.vmem [#allocation1], 34
  %1221 = vst [vmem:[%s1220] ss:$4 sm:$0xff] %v576
  %s1222 = scalar_lea.vmem [#allocation1], 35
  %1223 = vst [vmem:[%s1222] ss:$4 sm:$0xff] %v579
  %v1224 = vld.sshfl [vmem:[#allocation1] sm:$0xff pattern:$0x73625140]
  %v1225 = vld.sshfl [vmem:[#allocation1 + $0x20] sm:$0xff pattern:$0x73625140]
  %v1226 = vsel %vm227, %v1224, 0
  %v1228 = vsel %vm227, %v1225, 0
  %v1231 = vsel %vm232, %v1208, 0
  %1233 = vmatpush.msra.mxu0 0.0
  %1234 = vmatpush.msra.mxu0 0.0
  %1235 = vmatpush.msra.mxu0 0.0
  %1236 = vmatpush.msra.mxu0 0.0
  %1237 = vmatpush.msra.mxu0 0.0
  %1238 = vmatpush.msra.mxu0 0.0
  %1239 = vmatpush.msra.mxu0 0.0
  %1240 = vmatpush.msra.mxu0 0.0
  %1241 = vmatpush.msra.mxu0 0.0
  %1242 = vmatpush.msra.mxu0 0.0
  %1243 = vmatpush.msra.mxu0 0.0
  %1244 = vmatpush.msra.mxu0 0.0
  %1245 = vmatpush.msra.mxu0 0.0
  %1246 = vmatpush.msra.mxu0 0.0
  %1247 = vmatpush.msra.mxu0 %v1231
  %1248 = vmatpush.msra.mxu0 %v1207
  %1249 = vmatmul.f32.gmra.mxu0 %v1226
  %v1250 = vpop.f32.mrf.mxu0
  %v1251 = vadd.f32 0.0, %v1250
  %1252 = vmatmul.f32.gmra.mxu0 %v1228
  %v1253 = vpop.f32.mrf.mxu0
  %v1254 = vadd.f32 0.0, %v1253
  %1255 = vdwg.mxu0
  %v1256 = vadd.f32 %v1204, %v1251
  %v1257 = vadd.f32 %v1205, %v1254
  %s1258 = scalar_lea.vmem %s3, 80
  %v1259 = vld [vmem:[%s1258] sm:$0xff]
  %v1260 = vld [vmem:[%s1258 + $0x8] sm:$0xf]
  %1261 = vst [vmem:[#allocation1] ss:$4 sm:$0xff] %v160
  %s1262 = scalar_lea.vmem [#allocation1], 1
  %1263 = vst [vmem:[%s1262] ss:$4 sm:$0xff] %v147
  %s1264 = scalar_lea.vmem [#allocation1], 2
  %1265 = vst [vmem:[%s1264] ss:$4 sm:$0xff] %v162
  %s1266 = scalar_lea.vmem [#allocation1], 3
  %1267 = vst [vmem:[%s1266] ss:$4 sm:$0xff] %v163
  %s1268 = scalar_lea.vmem [#allocation1], 32
  %1269 = vst [vmem:[%s1268] ss:$4 sm:$0xff] %v164
  %s1270 = scalar_lea.vmem [#allocation1], 33
  %1271 = vst [vmem:[%s1270] ss:$4 sm:$0xff] %v165
  %s1272 = scalar_lea.vmem [#allocation1], 34
  %1273 = vst [vmem:[%s1272] ss:$4 sm:$0xff] %v149
  %s1274 = scalar_lea.vmem [#allocation1], 35
  %1275 = vst [vmem:[%s1274] ss:$4 sm:$0xff] %v167
  %v1276 = vld.sshfl [vmem:[#allocation1] sm:$0xff pattern:$0x73625140]
  %v1277 = vld.sshfl [vmem:[#allocation1 + $0x20] sm:$0xff pattern:$0x73625140]
  %v1278 = vsel %vm227, %v1276, 0
  %v1280 = vsel %vm227, %v1277, 0
  %v1283 = vsel %vm232, %v1260, 0
  %1285 = vmatpush.msra.mxu0 0.0
  %1286 = vmatpush.msra.mxu0 0.0
  %1287 = vmatpush.msra.mxu0 0.0
  %1288 = vmatpush.msra.mxu0 0.0
  %1289 = vmatpush.msra.mxu0 0.0
  %1290 = vmatpush.msra.mxu0 0.0
  %1291 = vmatpush.msra.mxu0 0.0
  %1292 = vmatpush.msra.mxu0 0.0
  %1293 = vmatpush.msra.mxu0 0.0
  %1294 = vmatpush.msra.mxu0 0.0
  %1295 = vmatpush.msra.mxu0 0.0
  %1296 = vmatpush.msra.mxu0 0.0
  %1297 = vmatpush.msra.mxu0 0.0
  %1298 = vmatpush.msra.mxu0 0.0
  %1299 = vmatpush.msra.mxu0 %v1283
  %1300 = vmatpush.msra.mxu0 %v1259
  %1301 = vmatmul.f32.gmra.mxu0 %v1278
  %v1302 = vpop.f32.mrf.mxu0
  %v1303 = vadd.f32 0.0, %v1302
  %1304 = vmatmul.f32.gmra.mxu0 %v1280
  %v1305 = vpop.f32.mrf.mxu0
  %v1306 = vadd.f32 0.0, %v1305
  %1307 = vdwg.mxu0
  %v1308 = vadd.f32 %v1256, %v1303
  %v1309 = vadd.f32 %v1257, %v1306
  %v1310 = vadd.f32 %v1308, %v684
  %v1311 = vadd.f32 %v1309, %v684
  %v1312 = vmax.f32 %v1310, 0.0
  %v1313 = vmax.f32 %v1311, 0.0
  %s1314 = scalar_lea.vmem %s3, 288
  %v1315 = vld [vmem:[%s1314] sm:$0xff]
  %v1316 = vld [vmem:[%s1314 + $0x8] sm:$0xf]
  %s1317 = scalar_lea.vmem %s3, 256
  %v1318 = vld [vmem:[%s1317] sm:$0xff]
  %v1319 = vld [vmem:[%s1317 + $0x8] sm:$0xf]
  %1320 = vst [vmem:[#allocation1] ss:$4 sm:$0xff] %v146
  %s1321 = scalar_lea.vmem [#allocation1], 1
  %1322 = vst [vmem:[%s1321] ss:$4 sm:$0xff] %v158
  %s1323 = scalar_lea.vmem [#allocation1], 2
  %1324 = vst [vmem:[%s1323] ss:$4 sm:$0xff] %v160
  %s1325 = scalar_lea.vmem [#allocation1], 3
  %1326 = vst [vmem:[%s1325] ss:$4 sm:$0xff] %v147
  %s1327 = scalar_lea.vmem [#allocation1], 32
  %1328 = vst [vmem:[%s1327] ss:$4 sm:$0xff] %v162
  %s1329 = scalar_lea.vmem [#allocation1], 33
  %1330 = vst [vmem:[%s1329] ss:$4 sm:$0xff] %v163
  %s1331 = scalar_lea.vmem [#allocation1], 34
  %1332 = vst [vmem:[%s1331] ss:$4 sm:$0xff] %v164
  %s1333 = scalar_lea.vmem [#allocation1], 35
  %1334 = vst [vmem:[%s1333] ss:$4 sm:$0xff] %v165
  %v1335 = vld.sshfl [vmem:[#allocation1] sm:$0xff pattern:$0x73625140]
  %v1336 = vld.sshfl [vmem:[#allocation1 + $0x20] sm:$0xff pattern:$0x73625140]
  %v1337 = vsel %vm227, %v1335, 0
  %v1339 = vsel %vm227, %v1336, 0
  %v1342 = vsel %vm232, %v1319, 0
  %1344 = vmatpush.msra.mxu0 0.0
  %1345 = vmatpush.msra.mxu0 0.0
  %1346 = vmatpush.msra.mxu0 0.0
  %1347 = vmatpush.msra.mxu0 0.0
  %1348 = vmatpush.msra.mxu0 0.0
  %1349 = vmatpush.msra.mxu0 0.0
  %1350 = vmatpush.msra.mxu0 0.0
  %1351 = vmatpush.msra.mxu0 0.0
  %1352 = vmatpush.msra.mxu0 0.0
  %1353 = vmatpush.msra.mxu0 0.0
  %1354 = vmatpush.msra.mxu0 0.0
  %1355 = vmatpush.msra.mxu0 0.0
  %1356 = vmatpush.msra.mxu0 0.0
  %1357 = vmatpush.msra.mxu0 0.0
  %1358 = vmatpush.msra.mxu0 %v1342
  %1359 = vmatpush.msra.mxu0 %v1318
  %1360 = vmatmul.f32.gmra.mxu0 %v1337
  %v1361 = vpop.f32.mrf.mxu0
  %v1362 = vadd.f32 0.0, %v1361
  %1363 = vmatmul.f32.gmra.mxu0 %v1339
  %v1364 = vpop.f32.mrf.mxu0
  %v1365 = vadd.f32 0.0, %v1364
  %1366 = vdwg.mxu0
  %1367 = vst [vmem:[#allocation1] ss:$4 sm:$0xff] %v189
  %s1368 = scalar_lea.vmem [#allocation1], 1
  %1369 = vst [vmem:[%s1368] ss:$4 sm:$0xff] %v192
  %s1370 = scalar_lea.vmem [#allocation1], 2
  %1371 = vst [vmem:[%s1370] ss:$4 sm:$0xff] %v196
  %s1372 = scalar_lea.vmem [#allocation1], 3
  %1373 = vst [vmem:[%s1372] ss:$4 sm:$0xff] %v199
  %s1374 = scalar_lea.vmem [#allocation1], 32
  %1375 = vst [vmem:[%s1374] ss:$4 sm:$0xff] %v203
  %s1376 = scalar_lea.vmem [#allocation1], 33
  %1377 = vst [vmem:[%s1376] ss:$4 sm:$0xff] %v206
  %s1378 = scalar_lea.vmem [#allocation1], 34
  %1379 = vst [vmem:[%s1378] ss:$4 sm:$0xff] %v413
  %s1380 = scalar_lea.vmem [#allocation1], 35
  %1381 = vst [vmem:[%s1380] ss:$4 sm:$0xff] %v416
  %v1382 = vld.sshfl [vmem:[#allocation1] sm:$0xff pattern:$0x73625140]
  %v1383 = vld.sshfl [vmem:[#allocation1 + $0x20] sm:$0xff pattern:$0x73625140]
  %v1384 = vsel %vm227, %v1382, 0
  %v1386 = vsel %vm227, %v1383, 0
  %v1389 = vsel %vm232, %v1316, 0
  %1391 = vmatpush.msra.mxu0 0.0
  %1392 = vmatpush.msra.mxu0 0.0
  %1393 = vmatpush.msra.mxu0 0.0
  %1394 = vmatpush.msra.mxu0 0.0
  %1395 = vmatpush.msra.mxu0 0.0
  %1396 = vmatpush.msra.mxu0 0.0
  %1397 = vmatpush.msra.mxu0 0.0
  %1398 = vmatpush.msra.mxu0 0.0
  %1399 = vmatpush.msra.mxu0 0.0
  %1400 = vmatpush.msra.mxu0 0.0
  %1401 = vmatpush.msra.mxu0 0.0
  %1402 = vmatpush.msra.mxu0 0.0
  %1403 = vmatpush.msra.mxu0 0.0
  %1404 = vmatpush.msra.mxu0 0.0
  %1405 = vmatpush.msra.mxu0 %v1389
  %1406 = vmatpush.msra.mxu0 %v1315
  %1407 = vmatmul.f32.gmra.mxu0 %v1384
  %v1408 = vpop.f32.mrf.mxu0
  %v1409 = vadd.f32 %v1362, %v1408
  %1410 = vmatmul.f32.gmra.mxu0 %v1386
  %v1411 = vpop.f32.mrf.mxu0
  %v1412 = vadd.f32 %v1365, %v1411
  %1413 = vdwg.mxu0
  %s1414 = scalar_lea.vmem %s3, 128
  %v1415 = vld [vmem:[%s1414] sm:$0xff]
  %v1416 = vld [vmem:[%s1414 + $0x8] sm:$0xf]
  %1417 = vst [vmem:[#allocation1] ss:$4 sm:$0xff] %v196
  %s1418 = scalar_lea.vmem [#allocation1], 1
  %1419 = vst [vmem:[%s1418] ss:$4 sm:$0xff] %v199
  %s1420 = scalar_lea.vmem [#allocation1], 2
  %1421 = vst [vmem:[%s1420] ss:$4 sm:$0xff] %v203
  %s1422 = scalar_lea.vmem [#allocation1], 3
  %1423 = vst [vmem:[%s1422] ss:$4 sm:$0xff] %v206
  %s1424 = scalar_lea.vmem [#allocation1], 32
  %1425 = vst [vmem:[%s1424] ss:$4 sm:$0xff] %v413
  %s1426 = scalar_lea.vmem [#allocation1], 33
  %1427 = vst [vmem:[%s1426] ss:$4 sm:$0xff] %v416
  %s1428 = scalar_lea.vmem [#allocation1], 34
  %1429 = vst [vmem:[%s1428] ss:$4 sm:$0xff] %v576
  %s1430 = scalar_lea.vmem [#allocation1], 35
  %1431 = vst [vmem:[%s1430] ss:$4 sm:$0xff] %v579
  %v1432 = vld.sshfl [vmem:[#allocation1] sm:$0xff pattern:$0x73625140]
  %v1433 = vld.sshfl [vmem:[#allocation1 + $0x20] sm:$0xff pattern:$0x73625140]
  %v1434 = vsel %vm227, %v1432, 0
  %v1436 = vsel %vm227, %v1433, 0
  %v1439 = vsel %vm232, %v1416, 0
  %1441 = vmatpush.msra.mxu0 0.0
  %1442 = vmatpush.msra.mxu0 0.0
  %1443 = vmatpush.msra.mxu0 0.0
  %1444 = vmatpush.msra.mxu0 0.0
  %1445 = vmatpush.msra.mxu0 0.0
  %1446 = vmatpush.msra.mxu0 0.0
  %1447 = vmatpush.msra.mxu0 0.0
  %1448 = vmatpush.msra.mxu0 0.0
  %1449 = vmatpush.msra.mxu0 0.0
  %1450 = vmatpush.msra.mxu0 0.0
  %1451 = vmatpush.msra.mxu0 0.0
  %1452 = vmatpush.msra.mxu0 0.0
  %1453 = vmatpush.msra.mxu0 0.0
  %1454 = vmatpush.msra.mxu0 0.0
  %1455 = vmatpush.msra.mxu0 %v1439
  %1456 = vmatpush.msra.mxu0 %v1415
  %1457 = vmatmul.f32.gmra.mxu0 %v1434
  %v1458 = vpop.f32.mrf.mxu0
  %v1459 = vadd.f32 0.0, %v1458
  %1460 = vmatmul.f32.gmra.mxu0 %v1436
  %v1461 = vpop.f32.mrf.mxu0
  %v1462 = vadd.f32 0.0, %v1461
  %1463 = vdwg.mxu0
  %v1464 = vadd.f32 %v1409, %v1459
  %v1465 = vadd.f32 %v1412, %v1462
  %s1466 = scalar_lea.vmem %s3, 96
  %v1467 = vld [vmem:[%s1466] sm:$0xff]
  %v1468 = vld [vmem:[%s1466 + $0x8] sm:$0xf]
  %1469 = vst [vmem:[#allocation1] ss:$4 sm:$0xff] %v160
  %s1470 = scalar_lea.vmem [#allocation1], 1
  %1471 = vst [vmem:[%s1470] ss:$4 sm:$0xff] %v147
  %s1472 = scalar_lea.vmem [#allocation1], 2
  %1473 = vst [vmem:[%s1472] ss:$4 sm:$0xff] %v162
  %s1474 = scalar_lea.vmem [#allocation1], 3
  %1475 = vst [vmem:[%s1474] ss:$4 sm:$0xff] %v163
  %s1476 = scalar_lea.vmem [#allocation1], 32
  %1477 = vst [vmem:[%s1476] ss:$4 sm:$0xff] %v164
  %s1478 = scalar_lea.vmem [#allocation1], 33
  %1479 = vst [vmem:[%s1478] ss:$4 sm:$0xff] %v165
  %s1480 = scalar_lea.vmem [#allocation1], 34
  %1481 = vst [vmem:[%s1480] ss:$4 sm:$0xff] %v149
  %s1482 = scalar_lea.vmem [#allocation1], 35
  %1483 = vst [vmem:[%s1482] ss:$4 sm:$0xff] %v167
  %v1484 = vld.sshfl [vmem:[#allocation1] sm:$0xff pattern:$0x73625140]
  %v1485 = vld.sshfl [vmem:[#allocation1 + $0x20] sm:$0xff pattern:$0x73625140]
  %v1486 = vsel %vm227, %v1484, 0
  %v1488 = vsel %vm227, %v1485, 0
  %v1491 = vsel %vm232, %v1468, 0
  %1493 = vmatpush.msra.mxu0 0.0
  %1494 = vmatpush.msra.mxu0 0.0
  %1495 = vmatpush.msra.mxu0 0.0
  %1496 = vmatpush.msra.mxu0 0.0
  %1497 = vmatpush.msra.mxu0 0.0
  %1498 = vmatpush.msra.mxu0 0.0
  %1499 = vmatpush.msra.mxu0 0.0
  %1500 = vmatpush.msra.mxu0 0.0
  %1501 = vmatpush.msra.mxu0 0.0
  %1502 = vmatpush.msra.mxu0 0.0
  %1503 = vmatpush.msra.mxu0 0.0
  %1504 = vmatpush.msra.mxu0 0.0
  %1505 = vmatpush.msra.mxu0 0.0
  %1506 = vmatpush.msra.mxu0 0.0
  %1507 = vmatpush.msra.mxu0 %v1491
  %1508 = vmatpush.msra.mxu0 %v1467
  %1509 = vmatmul.f32.gmra.mxu0 %v1486
  %v1510 = vpop.f32.mrf.mxu0
  %v1511 = vadd.f32 0.0, %v1510
  %1512 = vmatmul.f32.gmra.mxu0 %v1488
  %v1513 = vpop.f32.mrf.mxu0
  %v1514 = vadd.f32 0.0, %v1513
  %1515 = vdwg.mxu0
  %v1516 = vadd.f32 %v1464, %v1511
  %v1517 = vadd.f32 %v1465, %v1514
  %v1518 = vadd.f32 %v1516, %v684
  %v1519 = vadd.f32 %v1517, %v684
  %v1520 = vmax.f32 %v1518, 0.0
  %v1521 = vmax.f32 %v1519, 0.0
  %v1524 = vrot.slane %v688, 1
  %v1525 = vrot.slane %v688, 2
  %v1526 = vrot.slane %v688, 3
  %v1527 = vrot.slane %v688, 4
  %v1528 = vrot.slane %v688, 5
  %v1529 = vrot.slane %v688, 6
  %v1530 = vrot.slane %v688, 7
  %v1531 = vrot.slane %v689, 1
  %v1532 = vrot.slane %v689, 2
  %v1533 = vrot.slane %v689, 3
  %v1534 = vrot.slane %v689, 4
  %v1535 = vrot.slane %v689, 5
  %v1536 = vrot.slane %v689, 6
  %v1537 = vrot.slane %v689, 7
  %v1554 = vrot.slane %v1000, 1
  %v1555 = vrot.slane %v1000, 2
  %v1556 = vrot.slane %v1000, 3
  %v1557 = vrot.slane %v1000, 4
  %v1558 = vrot.slane %v1000, 5
  %v1559 = vrot.slane %v1000, 6
  %v1560 = vrot.slane %v1000, 7
  %v1561 = vrot.slane %v1001, 1
  %v1562 = vrot.slane %v1001, 2
  %v1563 = vrot.slane %v1001, 3
  %v1564 = vrot.slane %v1001, 4
  %v1565 = vrot.slane %v1001, 5
  %v1566 = vrot.slane %v1001, 6
  %v1567 = vrot.slane %v1001, 7
  %v1568 = vperm.slane %v1000, 0
  %v1569 = vperm.slane %v1554, 0
  %v1570 = vperm.slane %v1555, 0
  %v1571 = vperm.slane %v1556, 0
  %v1572 = vperm.slane %v1557, 0
  %v1573 = vperm.slane %v1558, 0
  %v1574 = vperm.slane %v1559, 0
  %v1575 = vperm.slane %v1560, 0
  %v1576 = vperm.slane %v1001, 0
  %v1577 = vperm.slane %v1561, 0
  %v1578 = vperm.slane %v1562, 0
  %v1579 = vperm.slane %v1563, 0
  %v1580 = vperm.slane %v1564, 0
  %v1581 = vperm.slane %v1565, 0
  %v1582 = vperm.slane %v1566, 0
  %v1583 = vperm.slane %v1567, 0
  %v1600 = vsel %vm172, %v688, %v1568
  %v1601 = vsel %vm172, %v1524, %v1569
  %v1602 = vsel %vm172, %v1525, %v1570
  %v1603 = vsel %vm172, %v1526, %v1571
  %v1604 = vsel %vm172, %v1527, %v1572
  %v1605 = vsel %vm172, %v1528, %v1573
  %v1606 = vsel %vm172, %v1529, %v1574
  %v1607 = vsel %vm172, %v1530, %v1575
  %v1608 = vsel %vm172, %v689, %v1576
  %v1609 = vsel %vm172, %v1531, %v1577
  %v1610 = vsel %vm172, %v1532, %v1578
  %v1611 = vsel %vm172, %v1533, %v1579
  %v1612 = vsel %vm172, %v1534, %v1580
  %v1613 = vsel %vm172, %v1535, %v1581
  %v1614 = vsel %vm172, %v1536, %v1582
  %v1615 = vsel %vm172, %v1537, %v1583
  %v1618 = vrot.slane %v1312, 1
  %v1619 = vrot.slane %v1312, 2
  %v1620 = vrot.slane %v1312, 3
  %v1621 = vrot.slane %v1312, 4
  %v1622 = vrot.slane %v1312, 5
  %v1623 = vrot.slane %v1312, 6
  %v1624 = vrot.slane %v1312, 7
  %v1625 = vrot.slane %v1313, 1
  %v1626 = vrot.slane %v1313, 2
  %v1627 = vrot.slane %v1313, 3
  %v1628 = vrot.slane %v1313, 4
  %v1629 = vrot.slane %v1313, 5
  %v1630 = vrot.slane %v1313, 6
  %v1631 = vrot.slane %v1313, 7
  %v1648 = vrot.slane %v1520, 1
  %v1649 = vrot.slane %v1520, 2
  %v1650 = vrot.slane %v1520, 3
  %v1651 = vrot.slane %v1520, 4
  %v1652 = vrot.slane %v1520, 5
  %v1653 = vrot.slane %v1520, 6
  %v1654 = vrot.slane %v1520, 7
  %v1655 = vrot.slane %v1521, 1
  %v1656 = vrot.slane %v1521, 2
  %v1657 = vrot.slane %v1521, 3
  %v1658 = vrot.slane %v1521, 4
  %v1659 = vrot.slane %v1521, 5
  %v1660 = vrot.slane %v1521, 6
  %v1661 = vrot.slane %v1521, 7
  %v1662 = vperm.slane %v1520, 0
  %v1663 = vperm.slane %v1648, 0
  %v1664 = vperm.slane %v1649, 0
  %v1665 = vperm.slane %v1650, 0
  %v1666 = vperm.slane %v1651, 0
  %v1667 = vperm.slane %v1652, 0
  %v1668 = vperm.slane %v1653, 0
  %v1669 = vperm.slane %v1654, 0
  %v1670 = vperm.slane %v1521, 0
  %v1671 = vperm.slane %v1655, 0
  %v1672 = vperm.slane %v1656, 0
  %v1673 = vperm.slane %v1657, 0
  %v1674 = vperm.slane %v1658, 0
  %v1675 = vperm.slane %v1659, 0
  %v1676 = vperm.slane %v1660, 0
  %v1677 = vperm.slane %v1661, 0
  %v1694 = vsel %vm172, %v1312, %v1662
  %v1695 = vsel %vm172, %v1618, %v1663
  %v1696 = vsel %vm172, %v1619, %v1664
  %v1697 = vsel %vm172, %v1620, %v1665
  %v1698 = vsel %vm172, %v1621, %v1666
  %v1699 = vsel %vm172, %v1622, %v1667
  %v1700 = vsel %vm172, %v1623, %v1668
  %v1701 = vsel %vm172, %v1624, %v1669
  %v1702 = vsel %vm172, %v1313, %v1670
  %v1703 = vsel %vm172, %v1625, %v1671
  %v1704 = vsel %vm172, %v1626, %v1672
  %v1705 = vsel %vm172, %v1627, %v1673
  %v1706 = vsel %vm172, %v1628, %v1674
  %v1707 = vsel %vm172, %v1629, %v1675
  %v1708 = vsel %vm172, %v1630, %v1676
  %v1709 = vsel %vm172, %v1631, %v1677
  %1742 = vst [vmem:[#allocation1] ss:$4 sm:$0xff] %v1600
  %s1743 = scalar_lea.vmem [#allocation1], 1
  %1744 = vst [vmem:[%s1743] ss:$4 sm:$0xff] %v1601
  %s1745 = scalar_lea.vmem [#allocation1], 2
  %1746 = vst [vmem:[%s1745] ss:$4 sm:$0xff] %v1602
  %s1747 = scalar_lea.vmem [#allocation1], 3
  %1748 = vst [vmem:[%s1747] ss:$4 sm:$0xff] %v1603
  %v1749 = vld.sshfl [vmem:[#allocation1] sm:$0xff pattern:$0x73625140]
  %s1750 = scalar_lea.vmem [#allocation1], 32
  %1751 = vst [vmem:[%s1750] ss:$4 sm:$0xff] %v1694
  %s1752 = scalar_lea.vmem [#allocation1], 33
  %1753 = vst [vmem:[%s1752] ss:$4 sm:$0xff] %v1695
  %s1754 = scalar_lea.vmem [#allocation1], 34
  %1755 = vst [vmem:[%s1754] ss:$4 sm:$0xff] %v1696
  %s1756 = scalar_lea.vmem [#allocation1], 35
  %1757 = vst [vmem:[%s1756] ss:$4 sm:$0xff] %v1697
  %v1758 = vld.sshfl [vmem:[#allocation1 + $0x20] sm:$0xff pattern:$0x73625140]
  %1759 = vst [vmem:[#allocation1] ss:$4 sm:$0xff] %v1604
  %1760 = vst [vmem:[%s1743] ss:$4 sm:$0xff] %v1605
  %1761 = vst [vmem:[%s1745] ss:$4 sm:$0xff] %v1606
  %1762 = vst [vmem:[%s1747] ss:$4 sm:$0xff] %v1607
  %v1763 = vld.sshfl [vmem:[#allocation1] sm:$0xff pattern:$0x73625140]
  %1764 = vst [vmem:[%s1750] ss:$4 sm:$0xff] %v1698
  %1765 = vst [vmem:[%s1752] ss:$4 sm:$0xff] %v1699
  %1766 = vst [vmem:[%s1754] ss:$4 sm:$0xff] %v1700
  %1767 = vst [vmem:[%s1756] ss:$4 sm:$0xff] %v1701
  %v1768 = vld.sshfl [vmem:[#allocation1 + $0x20] sm:$0xff pattern:$0x73625140]
  %1769 = vst [vmem:[#allocation1] ss:$4 sm:$0xff] %v1608
  %1770 = vst [vmem:[%s1743] ss:$4 sm:$0xff] %v1609
  %1771 = vst [vmem:[%s1745] ss:$4 sm:$0xff] %v1610
  %1772 = vst [vmem:[%s1747] ss:$4 sm:$0xff] %v1611
  %v1773 = vld.sshfl [vmem:[#allocation1] sm:$0xff pattern:$0x73625140]
  %1774 = vst [vmem:[%s1750] ss:$4 sm:$0xff] %v1702
  %1775 = vst [vmem:[%s1752] ss:$4 sm:$0xff] %v1703
  %1776 = vst [vmem:[%s1754] ss:$4 sm:$0xff] %v1704
  %1777 = vst [vmem:[%s1756] ss:$4 sm:$0xff] %v1705
  %v1778 = vld.sshfl [vmem:[#allocation1 + $0x20] sm:$0xff pattern:$0x73625140]
  %1779 = vst [vmem:[#allocation1] ss:$4 sm:$0xff] %v1612
  %1780 = vst [vmem:[%s1743] ss:$4 sm:$0xff] %v1613
  %1781 = vst [vmem:[%s1745] ss:$4 sm:$0xff] %v1614
  %1782 = vst [vmem:[%s1747] ss:$4 sm:$0xff] %v1615
  %v1783 = vld.sshfl [vmem:[#allocation1] sm:$0xff pattern:$0x73625140]
  %1784 = vst [vmem:[%s1750] ss:$4 sm:$0xff] %v1706
  %1785 = vst [vmem:[%s1752] ss:$4 sm:$0xff] %v1707
  %1786 = vst [vmem:[%s1754] ss:$4 sm:$0xff] %v1708
  %1787 = vst [vmem:[%s1756] ss:$4 sm:$0xff] %v1709
  %v1788 = vld.sshfl [vmem:[#allocation1 + $0x20] sm:$0xff pattern:$0x73625140]
  %v1790 = vrot.slane 0.0, 7
  %v1791 = vrot.slane %v1749, 7
  %v1792 = vrot.slane %v1758, 7
  %v1793 = vrot.slane %v1763, 7
  %v1794 = vrot.slane %v1768, 7
  %v1795 = vrot.slane %v1773, 7
  %v1796 = vrot.slane %v1778, 7
  %v1797 = vrot.slane %v1783, 7
  %v1798 = vrot.slane %v1788, 7
  %v1808 = vsel %vm172, 0.0, %v1790
  %v1809 = vsel %vm172, 0.0, %v1791
  %v1810 = vsel %vm172, 0.0, %v1792
  %v1811 = vsel %vm172, 0.0, %v1793
  %v1812 = vsel %vm172, 0.0, %v1794
  %v1813 = vsel %vm172, 0.0, %v1795
  %v1814 = vsel %vm172, 0.0, %v1796
  %v1815 = vsel %vm172, 0.0, %v1797
  %v1816 = vsel %vm172, 0.0, %v1798
  %v1817 = vsel %vm172, %v1790, 0.0
  %v1818 = vsel %vm172, %v1791, 0.0
  %v1819 = vsel %vm172, %v1792, 0.0
  %v1820 = vsel %vm172, %v1793, 0.0
  %v1821 = vsel %vm172, %v1794, 0.0
  %v1822 = vsel %vm172, %v1795, 0.0
  %v1823 = vsel %vm172, %v1796, 0.0
  %v1824 = vsel %vm172, %v1797, 0.0
  %v1825 = vsel %vm172, %v1798, 0.0
  %v1826 = vld [vmem:[%s6] sm:$0x1]
  %s1827 = scalar_lea.vmem %s5, 768
  %v1828 = vld [vmem:[%s1827] sm:$0xff]
  %v1829 = vld [vmem:[%s1827 + $0x8] sm:$0xff]
  %v1830 = vld [vmem:[%s1827 + $0x10] sm:$0xff]
  %v1831 = vld [vmem:[%s1827 + $0x18] sm:$0xff]
  %vm1848 = vcmask 1046528
  %v1849 = vrot.slane %v1808, 1
  %v1850 = vrot.slane %v1817, 1
  %v1851 = vsel %vm1848, %v1849, %v1850
  %v1852 = vrot.slane %v1809, 1
  %v1853 = vrot.slane %v1818, 1
  %v1854 = vsel %vm1848, %v1852, %v1853
  %v1855 = vrot.slane %v1810, 1
  %v1856 = vrot.slane %v1819, 1
  %v1857 = vsel %vm1848, %v1855, %v1856
  %v1858 = vrot.slane %v1811, 1
  %v1859 = vrot.slane %v1820, 1
  %v1860 = vsel %vm1848, %v1858, %v1859
  %v1861 = vrot.slane %v1812, 1
  %v1862 = vrot.slane %v1821, 1
  %v1863 = vsel %vm1848, %v1861, %v1862
  %v1864 = vrot.slane %v1813, 1
  %v1865 = vrot.slane %v1822, 1
  %v1866 = vsel %vm1848, %v1864, %v1865
  %v1867 = vrot.slane %v1814, 1
  %v1868 = vrot.slane %v1823, 1
  %v1869 = vsel %vm1848, %v1867, %v1868
  %v1870 = vrot.slane %v1815, 1
  %v1871 = vrot.slane %v1824, 1
  %v1872 = vsel %vm1848, %v1870, %v1871
  %s1873 = scalar_lea.vmem %s5, 704
  %v1874 = vld [vmem:[%s1873] sm:$0xff]
  %v1875 = vld [vmem:[%s1873 + $0x8] sm:$0xff]
  %v1876 = vld [vmem:[%s1873 + $0x10] sm:$0xff]
  %v1877 = vld [vmem:[%s1873 + $0x18] sm:$0xff]
  %vm1878 = vcmask 261120
  %v1879 = vsel %vm1878, %v1851, 0
  %v1881 = vsel %vm1878, %v1854, 0
  %v1883 = vsel %vm1878, %v1857, 0
  %v1885 = vsel %vm1878, %v1860, 0
  %v1887 = vsel %vm1878, %v1863, 0
  %v1889 = vsel %vm1878, %v1866, 0
  %v1891 = vsel %vm1878, %v1869, 0
  %v1893 = vsel %vm1878, %v1872, 0
  %1895 = vmatpush.msra.mxu0 0.0
  %1896 = vmatpush.msra.mxu0 0.0
  %1897 = vmatpush.msra.mxu0 0.0
  %1898 = vmatpush.msra.mxu0 0.0
  %1899 = vmatpush.msra.mxu0 0.0
  %1900 = vmatpush.msra.mxu0 0.0
  %1901 = vmatpush.msra.mxu0 0.0
  %1902 = vmatpush.msra.mxu0 0.0
  %1903 = vmatpush.msra.mxu0 0.0
  %1904 = vmatpush.msra.mxu0 0.0
  %1905 = vmatpush.msra.mxu0 0.0
  %1906 = vmatpush.msra.mxu0 0.0
  %1907 = vmatpush.msra.mxu0 %v1877
  %1908 = vmatpush.msra.mxu0 %v1876
  %1909 = vmatpush.msra.mxu0 %v1875
  %1910 = vmatpush.msra.mxu0 %v1874
  %1911 = vmatmul.f32.gmra.mxu0 %v1879
  %v1912 = vpop.f32.mrf.mxu0
  %v1913 = vadd.f32 0.0, %v1912
  %1914 = vmatmul.f32.gmra.mxu0 %v1881
  %v1915 = vpop.f32.mrf.mxu0
  %v1916 = vadd.f32 0.0, %v1915
  %1917 = vmatmul.f32.gmra.mxu0 %v1883
  %v1918 = vpop.f32.mrf.mxu0
  %v1919 = vadd.f32 0.0, %v1918
  %1920 = vmatmul.f32.gmra.mxu0 %v1885
  %v1921 = vpop.f32.mrf.mxu0
  %v1922 = vadd.f32 0.0, %v1921
  %1923 = vmatmul.f32.gmra.mxu0 %v1887
  %v1924 = vpop.f32.mrf.mxu0
  %v1925 = vadd.f32 0.0, %v1924
  %1926 = vmatmul.f32.gmra.mxu0 %v1889
  %v1927 = vpop.f32.mrf.mxu0
  %v1928 = vadd.f32 0.0, %v1927
  %1929 = vmatmul.f32.gmra.mxu0 %v1891
  %v1930 = vpop.f32.mrf.mxu0
  %v1931 = vadd.f32 0.0, %v1930
  %1932 = vmatmul.f32.gmra.mxu0 %v1893
  %v1933 = vpop.f32.mrf.mxu0
  %v1934 = vadd.f32 0.0, %v1933
  %1935 = vdwg.mxu0
  %v1936 = vsel %vm1878, %v1808, 0
  %v1938 = vsel %vm1878, %v1809, 0
  %v1940 = vsel %vm1878, %v1810, 0
  %v1942 = vsel %vm1878, %v1811, 0
  %v1944 = vsel %vm1878, %v1812, 0
  %v1946 = vsel %vm1878, %v1813, 0
  %v1948 = vsel %vm1878, %v1814, 0
  %v1950 = vsel %vm1878, %v1815, 0
  %1952 = vmatpush.msra.mxu0 0.0
  %1953 = vmatpush.msra.mxu0 0.0
  %1954 = vmatpush.msra.mxu0 0.0
  %1955 = vmatpush.msra.mxu0 0.0
  %1956 = vmatpush.msra.mxu0 0.0
  %1957 = vmatpush.msra.mxu0 0.0
  %1958 = vmatpush.msra.mxu0 0.0
  %1959 = vmatpush.msra.mxu0 0.0
  %1960 = vmatpush.msra.mxu0 0.0
  %1961 = vmatpush.msra.mxu0 0.0
  %1962 = vmatpush.msra.mxu0 0.0
  %1963 = vmatpush.msra.mxu0 0.0
  %1964 = vmatpush.msra.mxu0 %v1831
  %1965 = vmatpush.msra.mxu0 %v1830
  %1966 = vmatpush.msra.mxu0 %v1829
  %1967 = vmatpush.msra.mxu0 %v1828
  %1968 = vmatmul.f32.gmra.mxu0 %v1936
  %v1969 = vpop.f32.mrf.mxu0
  %v1970 = vadd.f32 %v1913, %v1969
  %1971 = vmatmul.f32.gmra.mxu0 %v1938
  %v1972 = vpop.f32.mrf.mxu0
  %v1973 = vadd.f32 %v1916, %v1972
  %1974 = vmatmul.f32.gmra.mxu0 %v1940
  %v1975 = vpop.f32.mrf.mxu0
  %v1976 = vadd.f32 %v1919, %v1975
  %1977 = vmatmul.f32.gmra.mxu0 %v1942
  %v1978 = vpop.f32.mrf.mxu0
  %v1979 = vadd.f32 %v1922, %v1978
  %1980 = vmatmul.f32.gmra.mxu0 %v1944
  %v1981 = vpop.f32.mrf.mxu0
  %v1982 = vadd.f32 %v1925, %v1981
  %1983 = vmatmul.f32.gmra.mxu0 %v1946
  %v1984 = vpop.f32.mrf.mxu0
  %v1985 = vadd.f32 %v1928, %v1984
  %1986 = vmatmul.f32.gmra.mxu0 %v1948
  %v1987 = vpop.f32.mrf.mxu0
  %v1988 = vadd.f32 %v1931, %v1987
  %1989 = vmatmul.f32.gmra.mxu0 %v1950
  %v1990 = vpop.f32.mrf.mxu0
  %v1991 = vadd.f32 %v1934, %v1990
  %1992 = vdwg.mxu0
  %vm1993 = vcmask 1045504
  %v1994 = vrot.slane %v1808, 2
  %v1995 = vrot.slane %v1817, 2
  %v1996 = vsel %vm1993, %v1994, %v1995
  %v1997 = vrot.slane %v1809, 2
  %v1998 = vrot.slane %v1818, 2
  %v1999 = vsel %vm1993, %v1997, %v1998
  %v2000 = vrot.slane %v1810, 2
  %v2001 = vrot.slane %v1819, 2
  %v2002 = vsel %vm1993, %v2000, %v2001
  %v2003 = vrot.slane %v1811, 2
  %v2004 = vrot.slane %v1820, 2
  %v2005 = vsel %vm1993, %v2003, %v2004
  %v2006 = vrot.slane %v1812, 2
  %v2007 = vrot.slane %v1821, 2
  %v2008 = vsel %vm1993, %v2006, %v2007
  %v2009 = vrot.slane %v1813, 2
  %v2010 = vrot.slane %v1822, 2
  %v2011 = vsel %vm1993, %v2009, %v2010
  %v2012 = vrot.slane %v1814, 2
  %v2013 = vrot.slane %v1823, 2
  %v2014 = vsel %vm1993, %v2012, %v2013
  %v2015 = vrot.slane %v1815, 2
  %v2016 = vrot.slane %v1824, 2
  %v2017 = vsel %vm1993, %v2015, %v2016
  %s2018 = scalar_lea.vmem %s5, 640
  %v2019 = vld [vmem:[%s2018] sm:$0xff]
  %v2020 = vld [vmem:[%s2018 + $0x8] sm:$0xff]
  %v2021 = vld [vmem:[%s2018 + $0x10] sm:$0xff]
  %v2022 = vld [vmem:[%s2018 + $0x18] sm:$0xff]
  %v2023 = vsel %vm1878, %v1996, 0
  %v2025 = vsel %vm1878, %v1999, 0
  %v2027 = vsel %vm1878, %v2002, 0
  %v2029 = vsel %vm1878, %v2005, 0
  %v2031 = vsel %vm1878, %v2008, 0
  %v2033 = vsel %vm1878, %v2011, 0
  %v2035 = vsel %vm1878, %v2014, 0
  %v2037 = vsel %vm1878, %v2017, 0
  %2039 = vmatpush.msra.mxu0 0.0
  %2040 = vmatpush.msra.mxu0 0.0
  %2041 = vmatpush.msra.mxu0 0.0
  %2042 = vmatpush.msra.mxu0 0.0
  %2043 = vmatpush.msra.mxu0 0.0
  %2044 = vmatpush.msra.mxu0 0.0
  %2045 = vmatpush.msra.mxu0 0.0
  %2046 = vmatpush.msra.mxu0 0.0
  %2047 = vmatpush.msra.mxu0 0.0
  %2048 = vmatpush.msra.mxu0 0.0
  %2049 = vmatpush.msra.mxu0 0.0
  %2050 = vmatpush.msra.mxu0 0.0
  %2051 = vmatpush.msra.mxu0 %v2022
  %2052 = vmatpush.msra.mxu0 %v2021
  %2053 = vmatpush.msra.mxu0 %v2020
  %2054 = vmatpush.msra.mxu0 %v2019
  %2055 = vmatmul.f32.gmra.mxu0 %v2023
  %v2056 = vpop.f32.mrf.mxu0
  %v2057 = vadd.f32 0.0, %v2056
  %2058 = vmatmul.f32.gmra.mxu0 %v2025
  %v2059 = vpop.f32.mrf.mxu0
  %v2060 = vadd.f32 0.0, %v2059
  %2061 = vmatmul.f32.gmra.mxu0 %v2027
  %v2062 = vpop.f32.mrf.mxu0
  %v2063 = vadd.f32 0.0, %v2062
  %2064 = vmatmul.f32.gmra.mxu0 %v2029
  %v2065 = vpop.f32.mrf.mxu0
  %v2066 = vadd.f32 0.0, %v2065
  %2067 = vmatmul.f32.gmra.mxu0 %v2031
  %v2068 = vpop.f32.mrf.mxu0
  %v2069 = vadd.f32 0.0, %v2068
  %2070 = vmatmul.f32.gmra.mxu0 %v2033
  %v2071 = vpop.f32.mrf.mxu0
  %v2072 = vadd.f32 0.0, %v2071
  %2073 = vmatmul.f32.gmra.mxu0 %v2035
  %v2074 = vpop.f32.mrf.mxu0
  %v2075 = vadd.f32 0.0, %v2074
  %2076 = vmatmul.f32.gmra.mxu0 %v2037
  %v2077 = vpop.f32.mrf.mxu0
  %v2078 = vadd.f32 0.0, %v2077
  %2079 = vdwg.mxu0
  %v2080 = vadd.f32 %v1970, %v2057
  %v2081 = vadd.f32 %v1973, %v2060
  %v2082 = vadd.f32 %v1976, %v2063
  %v2083 = vadd.f32 %v1979, %v2066
  %v2084 = vadd.f32 %v1982, %v2069
  %v2085 = vadd.f32 %v1985, %v2072
  %v2086 = vadd.f32 %v1988, %v2075
  %v2087 = vadd.f32 %v1991, %v2078
  %s2088 = scalar_lea.vmem %s5, 448
  %v2089 = vld [vmem:[%s2088] sm:$0xff]
  %v2090 = vld [vmem:[%s2088 + $0x8] sm:$0xff]
  %v2091 = vld [vmem:[%s2088 + $0x10] sm:$0xff]
  %v2092 = vld [vmem:[%s2088 + $0x18] sm:$0xff]
  %v2094 = vsel %vm1878, %v1816, 0
  %2096 = vmatpush.msra.mxu0 0.0
  %2097 = vmatpush.msra.mxu0 0.0
  %2098 = vmatpush.msra.mxu0 0.0
  %2099 = vmatpush.msra.mxu0 0.0
  %2100 = vmatpush.msra.mxu0 0.0
  %2101 = vmatpush.msra.mxu0 0.0
  %2102 = vmatpush.msra.mxu0 0.0
  %2103 = vmatpush.msra.mxu0 0.0
  %2104 = vmatpush.msra.mxu0 0.0
  %2105 = vmatpush.msra.mxu0 0.0
  %2106 = vmatpush.msra.mxu0 0.0
  %2107 = vmatpush.msra.mxu0 0.0
  %2108 = vmatpush.msra.mxu0 %v2092
  %2109 = vmatpush.msra.mxu0 %v2091
  %2110 = vmatpush.msra.mxu0 %v2090
  %2111 = vmatpush.msra.mxu0 %v2089
  %2112 = vmatmul.f32.gmra.mxu0 %v1938
  %v2113 = vpop.f32.mrf.mxu0
  %v2114 = vadd.f32 0.0, %v2113
  %2115 = vmatmul.f32.gmra.mxu0 %v1940
  %v2116 = vpop.f32.mrf.mxu0
  %v2117 = vadd.f32 0.0, %v2116
  %2118 = vmatmul.f32.gmra.mxu0 %v1942
  %v2119 = vpop.f32.mrf.mxu0
  %v2120 = vadd.f32 0.0, %v2119
  %2121 = vmatmul.f32.gmra.mxu0 %v1944
  %v2122 = vpop.f32.mrf.mxu0
  %v2123 = vadd.f32 0.0, %v2122
  %2124 = vmatmul.f32.gmra.mxu0 %v1946
  %v2125 = vpop.f32.mrf.mxu0
  %v2126 = vadd.f32 0.0, %v2125
  %2127 = vmatmul.f32.gmra.mxu0 %v1948
  %v2128 = vpop.f32.mrf.mxu0
  %v2129 = vadd.f32 0.0, %v2128
  %2130 = vmatmul.f32.gmra.mxu0 %v1950
  %v2131 = vpop.f32.mrf.mxu0
  %v2132 = vadd.f32 0.0, %v2131
  %2133 = vmatmul.f32.gmra.mxu0 %v2094
  %v2134 = vpop.f32.mrf.mxu0
  %v2135 = vadd.f32 0.0, %v2134
  %2136 = vdwg.mxu0
  %v2137 = vadd.f32 %v2080, %v2114
  %v2138 = vadd.f32 %v2081, %v2117
  %v2139 = vadd.f32 %v2082, %v2120
  %v2140 = vadd.f32 %v2083, %v2123
  %v2141 = vadd.f32 %v2084, %v2126
  %v2142 = vadd.f32 %v2085, %v2129
  %v2143 = vadd.f32 %v2086, %v2132
  %v2144 = vadd.f32 %v2087, %v2135
  %v2146 = vrot.slane %v1816, 1
  %v2147 = vrot.slane %v1825, 1
  %v2148 = vsel %vm1848, %v2146, %v2147
  %s2149 = scalar_lea.vmem %s5, 384
  %v2150 = vld [vmem:[%s2149] sm:$0xff]
  %v2151 = vld [vmem:[%s2149 + $0x8] sm:$0xff]
  %v2152 = vld [vmem:[%s2149 + $0x10] sm:$0xff]
  %v2153 = vld [vmem:[%s2149 + $0x18] sm:$0xff]
  %v2154 = vsel %vm1878, %v2148, 0
  %2156 = vmatpush.msra.mxu0 0.0
  %2157 = vmatpush.msra.mxu0 0.0
  %2158 = vmatpush.msra.mxu0 0.0
  %2159 = vmatpush.msra.mxu0 0.0
  %2160 = vmatpush.msra.mxu0 0.0
  %2161 = vmatpush.msra.mxu0 0.0
  %2162 = vmatpush.msra.mxu0 0.0
  %2163 = vmatpush.msra.mxu0 0.0
  %2164 = vmatpush.msra.mxu0 0.0
  %2165 = vmatpush.msra.mxu0 0.0
  %2166 = vmatpush.msra.mxu0 0.0
  %2167 = vmatpush.msra.mxu0 0.0
  %2168 = vmatpush.msra.mxu0 %v2153
  %2169 = vmatpush.msra.mxu0 %v2152
  %2170 = vmatpush.msra.mxu0 %v2151
  %2171 = vmatpush.msra.mxu0 %v2150
  %2172 = vmatmul.f32.gmra.mxu0 %v1881
  %v2173 = vpop.f32.mrf.mxu0
  %v2174 = vadd.f32 0.0, %v2173
  %2175 = vmatmul.f32.gmra.mxu0 %v1883
  %v2176 = vpop.f32.mrf.mxu0
  %v2177 = vadd.f32 0.0, %v2176
  %2178 = vmatmul.f32.gmra.mxu0 %v1885
  %v2179 = vpop.f32.mrf.mxu0
  %v2180 = vadd.f32 0.0, %v2179
  %2181 = vmatmul.f32.gmra.mxu0 %v1887
  %v2182 = vpop.f32.mrf.mxu0
  %v2183 = vadd.f32 0.0, %v2182
  %2184 = vmatmul.f32.gmra.mxu0 %v1889
  %v2185 = vpop.f32.mrf.mxu0
  %v2186 = vadd.f32 0.0, %v2185
  %2187 = vmatmul.f32.gmra.mxu0 %v1891
  %v2188 = vpop.f32.mrf.mxu0
  %v2189 = vadd.f32 0.0, %v2188
  %2190 = vmatmul.f32.gmra.mxu0 %v1893
  %v2191 = vpop.f32.mrf.mxu0
  %v2192 = vadd.f32 0.0, %v2191
  %2193 = vmatmul.f32.gmra.mxu0 %v2154
  %v2194 = vpop.f32.mrf.mxu0
  %v2195 = vadd.f32 0.0, %v2194
  %2196 = vdwg.mxu0
  %v2197 = vadd.f32 %v2137, %v2174
  %v2198 = vadd.f32 %v2138, %v2177
  %v2199 = vadd.f32 %v2139, %v2180
  %v2200 = vadd.f32 %v2140, %v2183
  %v2201 = vadd.f32 %v2141, %v2186
  %v2202 = vadd.f32 %v2142, %v2189
  %v2203 = vadd.f32 %v2143, %v2192
  %v2204 = vadd.f32 %v2144, %v2195
  %v2205 = vrot.slane %v1816, 2
  %v2206 = vrot.slane %v1825, 2
  %v2207 = vsel %vm1993, %v2205, %v2206
  %s2208 = scalar_lea.vmem %s5, 320
  %v2209 = vld [vmem:[%s2208] sm:$0xff]
  %v2210 = vld [vmem:[%s2208 + $0x8] sm:$0xff]
  %v2211 = vld [vmem:[%s2208 + $0x10] sm:$0xff]
  %v2212 = vld [vmem:[%s2208 + $0x18] sm:$0xff]
  %v2213 = vsel %vm1878, %v2207, 0
  %2215 = vmatpush.msra.mxu0 0.0
  %2216 = vmatpush.msra.mxu0 0.0
  %2217 = vmatpush.msra.mxu0 0.0
  %2218 = vmatpush.msra.mxu0 0.0
  %2219 = vmatpush.msra.mxu0 0.0
  %2220 = vmatpush.msra.mxu0 0.0
  %2221 = vmatpush.msra.mxu0 0.0
  %2222 = vmatpush.msra.mxu0 0.0
  %2223 = vmatpush.msra.mxu0 0.0
  %2224 = vmatpush.msra.mxu0 0.0
  %2225 = vmatpush.msra.mxu0 0.0
  %2226 = vmatpush.msra.mxu0 0.0
  %2227 = vmatpush.msra.mxu0 %v2212
  %2228 = vmatpush.msra.mxu0 %v2211
  %2229 = vmatpush.msra.mxu0 %v2210
  %2230 = vmatpush.msra.mxu0 %v2209
  %2231 = vmatmul.f32.gmra.mxu0 %v2025
  %v2232 = vpop.f32.mrf.mxu0
  %v2233 = vadd.f32 0.0, %v2232
  %2234 = vmatmul.f32.gmra.mxu0 %v2027
  %v2235 = vpop.f32.mrf.mxu0
  %v2236 = vadd.f32 0.0, %v2235
  %2237 = vmatmul.f32.gmra.mxu0 %v2029
  %v2238 = vpop.f32.mrf.mxu0
  %v2239 = vadd.f32 0.0, %v2238
  %2240 = vmatmul.f32.gmra.mxu0 %v2031
  %v2241 = vpop.f32.mrf.mxu0
  %v2242 = vadd.f32 0.0, %v2241
  %2243 = vmatmul.f32.gmra.mxu0 %v2033
  %v2244 = vpop.f32.mrf.mxu0
  %v2245 = vadd.f32 0.0, %v2244
  %2246 = vmatmul.f32.gmra.mxu0 %v2035
  %v2247 = vpop.f32.mrf.mxu0
  %v2248 = vadd.f32 0.0, %v2247
  %2249 = vmatmul.f32.gmra.mxu0 %v2037
  %v2250 = vpop.f32.mrf.mxu0
  %v2251 = vadd.f32 0.0, %v2250
  %2252 = vmatmul.f32.gmra.mxu0 %v2213
  %v2253 = vpop.f32.mrf.mxu0
  %v2254 = vadd.f32 0.0, %v2253
  %2255 = vdwg.mxu0
  %v2256 = vadd.f32 %v2197, %v2233
  %v2257 = vadd.f32 %v2198, %v2236
  %v2258 = vadd.f32 %v2199, %v2239
  %v2259 = vadd.f32 %v2200, %v2242
  %v2260 = vadd.f32 %v2201, %v2245
  %v2261 = vadd.f32 %v2202, %v2248
  %v2262 = vadd.f32 %v2203, %v2251
  %v2263 = vadd.f32 %v2204, %v2254
  %s2264 = scalar_lea.vmem %s5, 128
  %v2265 = vld [vmem:[%s2264] sm:$0xff]
  %v2266 = vld [vmem:[%s2264 + $0x8] sm:$0xff]
  %v2267 = vld [vmem:[%s2264 + $0x10] sm:$0xff]
  %v2268 = vld [vmem:[%s2264 + $0x18] sm:$0xff]
  %2269 = vmatpush.msra.mxu0 0.0
  %2270 = vmatpush.msra.mxu0 0.0
  %2271 = vmatpush.msra.mxu0 0.0
  %2272 = vmatpush.msra.mxu0 0.0
  %2273 = vmatpush.msra.mxu0 0.0
  %2274 = vmatpush.msra.mxu0 0.0
  %2275 = vmatpush.msra.mxu0 0.0
  %2276 = vmatpush.msra.mxu0 0.0
  %2277 = vmatpush.msra.mxu0 0.0
  %2278 = vmatpush.msra.mxu0 0.0
  %2279 = vmatpush.msra.mxu0 0.0
  %2280 = vmatpush.msra.mxu0 0.0
  %2281 = vmatpush.msra.mxu0 %v2268
  %2282 = vmatpush.msra.mxu0 %v2267
  %2283 = vmatpush.msra.mxu0 %v2266
  %2284 = vmatpush.msra.mxu0 %v2265
  %2285 = vmatmul.f32.gmra.mxu0 %v1940
  %v2286 = vpop.f32.mrf.mxu0
  %v2287 = vadd.f32 0.0, %v2286
  %2288 = vmatmul.f32.gmra.mxu0 %v1942
  %v2289 = vpop.f32.mrf.mxu0
  %v2290 = vadd.f32 0.0, %v2289
  %2291 = vmatmul.f32.gmra.mxu0 %v1944
  %v2292 = vpop.f32.mrf.mxu0
  %v2293 = vadd.f32 0.0, %v2292
  %2294 = vmatmul.f32.gmra.mxu0 %v1946
  %v2295 = vpop.f32.mrf.mxu0
  %v2296 = vadd.f32 0.0, %v2295
  %2297 = vmatmul.f32.gmra.mxu0 %v1948
  %v2298 = vpop.f32.mrf.mxu0
  %v2299 = vadd.f32 0.0, %v2298
  %2300 = vmatmul.f32.gmra.mxu0 %v1950
  %v2301 = vpop.f32.mrf.mxu0
  %v2302 = vadd.f32 0.0, %v2301
  %2303 = vmatmul.f32.gmra.mxu0 %v2094
  %v2304 = vpop.f32.mrf.mxu0
  %v2305 = vadd.f32 0.0, %v2304
  %2306 = vmatmul.f32.gmra.mxu0 %v1936
  %v2307 = vpop.f32.mrf.mxu0
  %v2308 = vadd.f32 0.0, %v2307
  %2309 = vdwg.mxu0
  %v2310 = vadd.f32 %v2256, %v2287
  %v2311 = vadd.f32 %v2257, %v2290
  %v2312 = vadd.f32 %v2258, %v2293
  %v2313 = vadd.f32 %v2259, %v2296
  %v2314 = vadd.f32 %v2260, %v2299
  %v2315 = vadd.f32 %v2261, %v2302
  %v2316 = vadd.f32 %v2262, %v2305
  %v2317 = vadd.f32 %v2263, %v2308
  %s2318 = scalar_lea.vmem %s5, 64
  %v2319 = vld [vmem:[%s2318] sm:$0xff]
  %v2320 = vld [vmem:[%s2318 + $0x8] sm:$0xff]
  %v2321 = vld [vmem:[%s2318 + $0x10] sm:$0xff]
  %v2322 = vld [vmem:[%s2318 + $0x18] sm:$0xff]
  %2323 = vmatpush.msra.mxu0 0.0
  %2324 = vmatpush.msra.mxu0 0.0
  %2325 = vmatpush.msra.mxu0 0.0
  %2326 = vmatpush.msra.mxu0 0.0
  %2327 = vmatpush.msra.mxu0 0.0
  %2328 = vmatpush.msra.mxu0 0.0
  %2329 = vmatpush.msra.mxu0 0.0
  %2330 = vmatpush.msra.mxu0 0.0
  %2331 = vmatpush.msra.mxu0 0.0
  %2332 = vmatpush.msra.mxu0 0.0
  %2333 = vmatpush.msra.mxu0 0.0
  %2334 = vmatpush.msra.mxu0 0.0
  %2335 = vmatpush.msra.mxu0 %v2322
  %2336 = vmatpush.msra.mxu0 %v2321
  %2337 = vmatpush.msra.mxu0 %v2320
  %2338 = vmatpush.msra.mxu0 %v2319
  %2339 = vmatmul.f32.gmra.mxu0 %v1883
  %v2340 = vpop.f32.mrf.mxu0
  %v2341 = vadd.f32 0.0, %v2340
  %2342 = vmatmul.f32.gmra.mxu0 %v1885
  %v2343 = vpop.f32.mrf.mxu0
  %v2344 = vadd.f32 0.0, %v2343
  %2345 = vmatmul.f32.gmra.mxu0 %v1887
  %v2346 = vpop.f32.mrf.mxu0
  %v2347 = vadd.f32 0.0, %v2346
  %2348 = vmatmul.f32.gmra.mxu0 %v1889
  %v2349 = vpop.f32.mrf.mxu0
  %v2350 = vadd.f32 0.0, %v2349
  %2351 = vmatmul.f32.gmra.mxu0 %v1891
  %v2352 = vpop.f32.mrf.mxu0
  %v2353 = vadd.f32 0.0, %v2352
  %2354 = vmatmul.f32.gmra.mxu0 %v1893
  %v2355 = vpop.f32.mrf.mxu0
  %v2356 = vadd.f32 0.0, %v2355
  %2357 = vmatmul.f32.gmra.mxu0 %v2154
  %v2358 = vpop.f32.mrf.mxu0
  %v2359 = vadd.f32 0.0, %v2358
  %2360 = vmatmul.f32.gmra.mxu0 %v1879
  %v2361 = vpop.f32.mrf.mxu0
  %v2362 = vadd.f32 0.0, %v2361
  %2363 = vdwg.mxu0
  %v2364 = vadd.f32 %v2310, %v2341
  %v2365 = vadd.f32 %v2311, %v2344
  %v2366 = vadd.f32 %v2312, %v2347
  %v2367 = vadd.f32 %v2313, %v2350
  %v2368 = vadd.f32 %v2314, %v2353
  %v2369 = vadd.f32 %v2315, %v2356
  %v2370 = vadd.f32 %v2316, %v2359
  %v2371 = vadd.f32 %v2317, %v2362
  %v2372 = vld [vmem:[%s5] sm:$0xff]
  %v2373 = vld [vmem:[%s5 + $0x8] sm:$0xff]
  %v2374 = vld [vmem:[%s5 + $0x10] sm:$0xff]
  %v2375 = vld [vmem:[%s5 + $0x18] sm:$0xff]
  %2376 = vmatpush.msra.mxu0 0.0
  %2377 = vmatpush.msra.mxu0 0.0
  %2378 = vmatpush.msra.mxu0 0.0
  %2379 = vmatpush.msra.mxu0 0.0
  %2380 = vmatpush.msra.mxu0 0.0
  %2381 = vmatpush.msra.mxu0 0.0
  %2382 = vmatpush.msra.mxu0 0.0
  %2383 = vmatpush.msra.mxu0 0.0
  %2384 = vmatpush.msra.mxu0 0.0
  %2385 = vmatpush.msra.mxu0 0.0
  %2386 = vmatpush.msra.mxu0 0.0
  %2387 = vmatpush.msra.mxu0 0.0
  %2388 = vmatpush.msra.mxu0 %v2375
  %2389 = vmatpush.msra.mxu0 %v2374
  %2390 = vmatpush.msra.mxu0 %v2373
  %2391 = vmatpush.msra.mxu0 %v2372
  %2392 = vmatmul.f32.gmra.mxu0 %v2027
  %v2393 = vpop.f32.mrf.mxu0
  %v2394 = vadd.f32 0.0, %v2393
  %2395 = vmatmul.f32.gmra.mxu0 %v2029
  %v2396 = vpop.f32.mrf.mxu0
  %v2397 = vadd.f32 0.0, %v2396
  %2398 = vmatmul.f32.gmra.mxu0 %v2031
  %v2399 = vpop.f32.mrf.mxu0
  %v2400 = vadd.f32 0.0, %v2399
  %2401 = vmatmul.f32.gmra.mxu0 %v2033
  %v2402 = vpop.f32.mrf.mxu0
  %v2403 = vadd.f32 0.0, %v2402
  %2404 = vmatmul.f32.gmra.mxu0 %v2035
  %v2405 = vpop.f32.mrf.mxu0
  %v2406 = vadd.f32 0.0, %v2405
  %2407 = vmatmul.f32.gmra.mxu0 %v2037
  %v2408 = vpop.f32.mrf.mxu0
  %v2409 = vadd.f32 0.0, %v2408
  %2410 = vmatmul.f32.gmra.mxu0 %v2213
  %v2411 = vpop.f32.mrf.mxu0
  %v2412 = vadd.f32 0.0, %v2411
  %2413 = vmatmul.f32.gmra.mxu0 %v2023
  %v2414 = vpop.f32.mrf.mxu0
  %v2415 = vadd.f32 0.0, %v2414
  %2416 = vdwg.mxu0
  %v2417 = vadd.f32 %v2364, %v2394
  %v2418 = vadd.f32 %v2365, %v2397
  %v2419 = vadd.f32 %v2366, %v2400
  %v2420 = vadd.f32 %v2367, %v2403
  %v2421 = vadd.f32 %v2368, %v2406
  %v2422 = vadd.f32 %v2369, %v2409
  %v2423 = vadd.f32 %v2370, %v2412
  %v2424 = vadd.f32 %v2371, %v2415
  %v2426 = vperm.slane %v1826, 0
  %v2428 = vadd.f32 %v2417, %v2426
  %v2429 = vadd.f32 %v2418, %v2426
  %v2430 = vadd.f32 %v2419, %v2426
  %v2431 = vadd.f32 %v2420, %v2426
  %v2432 = vadd.f32 %v2421, %v2426
  %v2433 = vadd.f32 %v2422, %v2426
  %v2434 = vadd.f32 %v2423, %v2426
  %v2435 = vadd.f32 %v2424, %v2426
  %v2436 = vxor.u32 %v2428, 2147483648
  %v2437 = vxor.u32 %v2429, 2147483648
  %v2438 = vxor.u32 %v2430, 2147483648
  %v2439 = vxor.u32 %v2431, 2147483648
  %v2440 = vxor.u32 %v2432, 2147483648
  %v2441 = vxor.u32 %v2433, 2147483648
  %v2442 = vxor.u32 %v2434, 2147483648
  %v2443 = vxor.u32 %v2435, 2147483648
  %v2444 = vmul.f32 %v2436, 1.442695
  %v2445 = vpow.pop %v2444
  %v2446 = vmul.f32 %v2437, 1.442695
  %v2447 = vpow.pop %v2446
  %v2448 = vmul.f32 %v2438, 1.442695
  %v2449 = vpow.pop %v2448
  %v2450 = vmul.f32 %v2439, 1.442695
  %v2451 = vpow.pop %v2450
  %v2452 = vmul.f32 %v2440, 1.442695
  %v2453 = vpow.pop %v2452
  %v2454 = vmul.f32 %v2441, 1.442695
  %v2455 = vpow.pop %v2454
  %v2456 = vmul.f32 %v2442, 1.442695
  %v2457 = vpow.pop %v2456
  %v2458 = vmul.f32 %v2443, 1.442695
  %v2459 = vpow.pop %v2458
  %v2460 = vadd.f32 %v2445, 1.0
  %v2461 = vadd.f32 %v2447, 1.0
  %v2462 = vadd.f32 %v2449, 1.0
  %v2463 = vadd.f32 %v2451, 1.0
  %v2464 = vadd.f32 %v2453, 1.0
  %v2465 = vadd.f32 %v2455, 1.0
  %v2466 = vadd.f32 %v2457, 1.0
  %v2467 = vadd.f32 %v2459, 1.0
  %v2468 = vrcp.pop %v2460
  %v2469 = vmul.f32 %v2460, %v2468
  %v2470 = vsub.f32 1.0, %v2469
  %v2471 = vmul.f32 %v2468, %v2470
  %v2472 = vadd.f32 %v2468, %v2471
  %vm2473 = vweird.f32 %v2460
  %vm2474 = vweird.f32 %v2468
  %vm2475 = vmor %vm2473, %vm2474
  %v2476 = vsel %vm2475, %v2468, %v2472
  %v2477 = vand.u32 2147483647, %v2460
  %vm2478 = vcmp.eq.f32.partialorder %v2477, 8.507059e+37
  %v2479 = vand.u32 %v2460, 2147483648
  %v2480 = vor.u32 1.1754944e-38, %v2479
  %v2481 = vsel %vm2478, %v2480, %v2476
  %v2482 = vmul.f32 1.0, %v2481
  %v2483 = vrcp.pop %v2461
  %v2484 = vmul.f32 %v2461, %v2483
  %v2485 = vsub.f32 1.0, %v2484
  %v2486 = vmul.f32 %v2483, %v2485
  %v2487 = vadd.f32 %v2483, %v2486
  %vm2488 = vweird.f32 %v2461
  %vm2489 = vweird.f32 %v2483
  %vm2490 = vmor %vm2488, %vm2489
  %v2491 = vsel %vm2490, %v2483, %v2487
  %v2492 = vand.u32 2147483647, %v2461
  %vm2493 = vcmp.eq.f32.partialorder %v2492, 8.507059e+37
  %v2494 = vand.u32 %v2461, 2147483648
  %v2495 = vor.u32 1.1754944e-38, %v2494
  %v2496 = vsel %vm2493, %v2495, %v2491
  %v2497 = vmul.f32 1.0, %v2496
  %v2498 = vrcp.pop %v2462
  %v2499 = vmul.f32 %v2462, %v2498
  %v2500 = vsub.f32 1.0, %v2499
  %v2501 = vmul.f32 %v2498, %v2500
  %v2502 = vadd.f32 %v2498, %v2501
  %vm2503 = vweird.f32 %v2462
  %vm2504 = vweird.f32 %v2498
  %vm2505 = vmor %vm2503, %vm2504
  %v2506 = vsel %vm2505, %v2498, %v2502
  %v2507 = vand.u32 2147483647, %v2462
  %vm2508 = vcmp.eq.f32.partialorder %v2507, 8.507059e+37
  %v2509 = vand.u32 %v2462, 2147483648
  %v2510 = vor.u32 1.1754944e-38, %v2509
  %v2511 = vsel %vm2508, %v2510, %v2506
  %v2512 = vmul.f32 1.0, %v2511
  %v2513 = vrcp.pop %v2463
  %v2514 = vmul.f32 %v2463, %v2513
  %v2515 = vsub.f32 1.0, %v2514
  %v2516 = vmul.f32 %v2513, %v2515
  %v2517 = vadd.f32 %v2513, %v2516
  %vm2518 = vweird.f32 %v2463
  %vm2519 = vweird.f32 %v2513
  %vm2520 = vmor %vm2518, %vm2519
  %v2521 = vsel %vm2520, %v2513, %v2517
  %v2522 = vand.u32 2147483647, %v2463
  %vm2523 = vcmp.eq.f32.partialorder %v2522, 8.507059e+37
  %v2524 = vand.u32 %v2463, 2147483648
  %v2525 = vor.u32 1.1754944e-38, %v2524
  %v2526 = vsel %vm2523, %v2525, %v2521
  %v2527 = vmul.f32 1.0, %v2526
  %v2528 = vrcp.pop %v2464
  %v2529 = vmul.f32 %v2464, %v2528
  %v2530 = vsub.f32 1.0, %v2529
  %v2531 = vmul.f32 %v2528, %v2530
  %v2532 = vadd.f32 %v2528, %v2531
  %vm2533 = vweird.f32 %v2464
  %vm2534 = vweird.f32 %v2528
  %vm2535 = vmor %vm2533, %vm2534
  %v2536 = vsel %vm2535, %v2528, %v2532
  %v2537 = vand.u32 2147483647, %v2464
  %vm2538 = vcmp.eq.f32.partialorder %v2537, 8.507059e+37
  %v2539 = vand.u32 %v2464, 2147483648
  %v2540 = vor.u32 1.1754944e-38, %v2539
  %v2541 = vsel %vm2538, %v2540, %v2536
  %v2542 = vmul.f32 1.0, %v2541
  %v2543 = vrcp.pop %v2465
  %v2544 = vmul.f32 %v2465, %v2543
  %v2545 = vsub.f32 1.0, %v2544
  %v2546 = vmul.f32 %v2543, %v2545
  %v2547 = vadd.f32 %v2543, %v2546
  %vm2548 = vweird.f32 %v2465
  %vm2549 = vweird.f32 %v2543
  %vm2550 = vmor %vm2548, %vm2549
  %v2551 = vsel %vm2550, %v2543, %v2547
  %v2552 = vand.u32 2147483647, %v2465
  %vm2553 = vcmp.eq.f32.partialorder %v2552, 8.507059e+37
  %v2554 = vand.u32 %v2465, 2147483648
  %v2555 = vor.u32 1.1754944e-38, %v2554
  %v2556 = vsel %vm2553, %v2555, %v2551
  %v2557 = vmul.f32 1.0, %v2556
  %v2558 = vrcp.pop %v2466
  %v2559 = vmul.f32 %v2466, %v2558
  %v2560 = vsub.f32 1.0, %v2559
  %v2561 = vmul.f32 %v2558, %v2560
  %v2562 = vadd.f32 %v2558, %v2561
  %vm2563 = vweird.f32 %v2466
  %vm2564 = vweird.f32 %v2558
  %vm2565 = vmor %vm2563, %vm2564
  %v2566 = vsel %vm2565, %v2558, %v2562
  %v2567 = vand.u32 2147483647, %v2466
  %vm2568 = vcmp.eq.f32.partialorder %v2567, 8.507059e+37
  %v2569 = vand.u32 %v2466, 2147483648
  %v2570 = vor.u32 1.1754944e-38, %v2569
  %v2571 = vsel %vm2568, %v2570, %v2566
  %v2572 = vmul.f32 1.0, %v2571
  %v2573 = vrcp.pop %v2467
  %v2574 = vmul.f32 %v2467, %v2573
  %v2575 = vsub.f32 1.0, %v2574
  %v2576 = vmul.f32 %v2573, %v2575
  %v2577 = vadd.f32 %v2573, %v2576
  %vm2578 = vweird.f32 %v2467
  %vm2579 = vweird.f32 %v2573
  %vm2580 = vmor %vm2578, %vm2579
  %v2581 = vsel %vm2580, %v2573, %v2577
  %v2582 = vand.u32 2147483647, %v2467
  %vm2583 = vcmp.eq.f32.partialorder %v2582, 8.507059e+37
  %v2584 = vand.u32 %v2467, 2147483648
  %v2585 = vor.u32 1.1754944e-38, %v2584
  %v2586 = vsel %vm2583, %v2585, %v2581
  %v2587 = vmul.f32 1.0, %v2586
  %s2588 = scalar_lea.vmem %s5, 736
  %v2589 = vld [vmem:[%s2588] sm:$0xff]
  %v2590 = vld [vmem:[%s2588 + $0x8] sm:$0xff]
  %v2591 = vld [vmem:[%s2588 + $0x10] sm:$0xff]
  %v2592 = vld [vmem:[%s2588 + $0x18] sm:$0xff]
  %s2593 = scalar_lea.vmem %s5, 672
  %v2594 = vld [vmem:[%s2593] sm:$0xff]
  %v2595 = vld [vmem:[%s2593 + $0x8] sm:$0xff]
  %v2596 = vld [vmem:[%s2593 + $0x10] sm:$0xff]
  %v2597 = vld [vmem:[%s2593 + $0x18] sm:$0xff]
  %2598 = vmatpush.msra.mxu0 0.0
  %2599 = vmatpush.msra.mxu0 0.0
  %2600 = vmatpush.msra.mxu0 0.0
  %2601 = vmatpush.msra.mxu0 0.0
  %2602 = vmatpush.msra.mxu0 0.0
  %2603 = vmatpush.msra.mxu0 0.0
  %2604 = vmatpush.msra.mxu0 0.0
  %2605 = vmatpush.msra.mxu0 0.0
  %2606 = vmatpush.msra.mxu0 0.0
  %2607 = vmatpush.msra.mxu0 0.0
  %2608 = vmatpush.msra.mxu0 0.0
  %2609 = vmatpush.msra.mxu0 0.0
  %2610 = vmatpush.msra.mxu0 %v2597
  %2611 = vmatpush.msra.mxu0 %v2596
  %2612 = vmatpush.msra.mxu0 %v2595
  %2613 = vmatpush.msra.mxu0 %v2594
  %2614 = vmatmul.f32.gmra.mxu0 %v2023
  %v2615 = vpop.f32.mrf.mxu0
  %v2616 = vadd.f32 0.0, %v2615
  %2617 = vmatmul.f32.gmra.mxu0 %v2025
  %v2618 = vpop.f32.mrf.mxu0
  %v2619 = vadd.f32 0.0, %v2618
  %2620 = vmatmul.f32.gmra.mxu0 %v2027
  %v2621 = vpop.f32.mrf.mxu0
  %v2622 = vadd.f32 0.0, %v2621
  %2623 = vmatmul.f32.gmra.mxu0 %v2029
  %v2624 = vpop.f32.mrf.mxu0
  %v2625 = vadd.f32 0.0, %v2624
  %2626 = vmatmul.f32.gmra.mxu0 %v2031
  %v2627 = vpop.f32.mrf.mxu0
  %v2628 = vadd.f32 0.0, %v2627
  %2629 = vmatmul.f32.gmra.mxu0 %v2033
  %v2630 = vpop.f32.mrf.mxu0
  %v2631 = vadd.f32 0.0, %v2630
  %2632 = vmatmul.f32.gmra.mxu0 %v2035
  %v2633 = vpop.f32.mrf.mxu0
  %v2634 = vadd.f32 0.0, %v2633
  %2635 = vmatmul.f32.gmra.mxu0 %v2037
  %v2636 = vpop.f32.mrf.mxu0
  %v2637 = vadd.f32 0.0, %v2636
  %2638 = vdwg.mxu0
  %2639 = vmatpush.msra.mxu0 0.0
  %2640 = vmatpush.msra.mxu0 0.0
  %2641 = vmatpush.msra.mxu0 0.0
  %2642 = vmatpush.msra.mxu0 0.0
  %2643 = vmatpush.msra.mxu0 0.0
  %2644 = vmatpush.msra.mxu0 0.0
  %2645 = vmatpush.msra.mxu0 0.0
  %2646 = vmatpush.msra.mxu0 0.0
  %2647 = vmatpush.msra.mxu0 0.0
  %2648 = vmatpush.msra.mxu0 0.0
  %2649 = vmatpush.msra.mxu0 0.0
  %2650 = vmatpush.msra.mxu0 0.0
  %2651 = vmatpush.msra.mxu0 %v2592
  %2652 = vmatpush.msra.mxu0 %v2591
  %2653 = vmatpush.msra.mxu0 %v2590
  %2654 = vmatpush.msra.mxu0 %v2589
  %2655 = vmatmul.f32.gmra.mxu0 %v1879
  %v2656 = vpop.f32.mrf.mxu0
  %v2657 = vadd.f32 %v2616, %v2656
  %2658 = vmatmul.f32.gmra.mxu0 %v1881
  %v2659 = vpop.f32.mrf.mxu0
  %v2660 = vadd.f32 %v2619, %v2659
  %2661 = vmatmul.f32.gmra.mxu0 %v1883
  %v2662 = vpop.f32.mrf.mxu0
  %v2663 = vadd.f32 %v2622, %v2662
  %2664 = vmatmul.f32.gmra.mxu0 %v1885
  %v2665 = vpop.f32.mrf.mxu0
  %v2666 = vadd.f32 %v2625, %v2665
  %2667 = vmatmul.f32.gmra.mxu0 %v1887
  %v2668 = vpop.f32.mrf.mxu0
  %v2669 = vadd.f32 %v2628, %v2668
  %2670 = vmatmul.f32.gmra.mxu0 %v1889
  %v2671 = vpop.f32.mrf.mxu0
  %v2672 = vadd.f32 %v2631, %v2671
  %2673 = vmatmul.f32.gmra.mxu0 %v1891
  %v2674 = vpop.f32.mrf.mxu0
  %v2675 = vadd.f32 %v2634, %v2674
  %2676 = vmatmul.f32.gmra.mxu0 %v1893
  %v2677 = vpop.f32.mrf.mxu0
  %v2678 = vadd.f32 %v2637, %v2677
  %2679 = vdwg.mxu0
  %s2680 = scalar_lea.vmem %s5, 416
  %v2681 = vld [vmem:[%s2680] sm:$0xff]
  %v2682 = vld [vmem:[%s2680 + $0x8] sm:$0xff]
  %v2683 = vld [vmem:[%s2680 + $0x10] sm:$0xff]
  %v2684 = vld [vmem:[%s2680 + $0x18] sm:$0xff]
  %2685 = vmatpush.msra.mxu0 0.0
  %2686 = vmatpush.msra.mxu0 0.0
  %2687 = vmatpush.msra.mxu0 0.0
  %2688 = vmatpush.msra.mxu0 0.0
  %2689 = vmatpush.msra.mxu0 0.0
  %2690 = vmatpush.msra.mxu0 0.0
  %2691 = vmatpush.msra.mxu0 0.0
  %2692 = vmatpush.msra.mxu0 0.0
  %2693 = vmatpush.msra.mxu0 0.0
  %2694 = vmatpush.msra.mxu0 0.0
  %2695 = vmatpush.msra.mxu0 0.0
  %2696 = vmatpush.msra.mxu0 0.0
  %2697 = vmatpush.msra.mxu0 %v2684
  %2698 = vmatpush.msra.mxu0 %v2683
  %2699 = vmatpush.msra.mxu0 %v2682
  %2700 = vmatpush.msra.mxu0 %v2681
  %2701 = vmatmul.f32.gmra.mxu0 %v1881
  %v2702 = vpop.f32.mrf.mxu0
  %v2703 = vadd.f32 0.0, %v2702
  %2704 = vmatmul.f32.gmra.mxu0 %v1883
  %v2705 = vpop.f32.mrf.mxu0
  %v2706 = vadd.f32 0.0, %v2705
  %2707 = vmatmul.f32.gmra.mxu0 %v1885
  %v2708 = vpop.f32.mrf.mxu0
  %v2709 = vadd.f32 0.0, %v2708
  %2710 = vmatmul.f32.gmra.mxu0 %v1887
  %v2711 = vpop.f32.mrf.mxu0
  %v2712 = vadd.f32 0.0, %v2711
  %2713 = vmatmul.f32.gmra.mxu0 %v1889
  %v2714 = vpop.f32.mrf.mxu0
  %v2715 = vadd.f32 0.0, %v2714
  %2716 = vmatmul.f32.gmra.mxu0 %v1891
  %v2717 = vpop.f32.mrf.mxu0
  %v2718 = vadd.f32 0.0, %v2717
  %2719 = vmatmul.f32.gmra.mxu0 %v1893
  %v2720 = vpop.f32.mrf.mxu0
  %v2721 = vadd.f32 0.0, %v2720
  %2722 = vmatmul.f32.gmra.mxu0 %v2154
  %v2723 = vpop.f32.mrf.mxu0
  %v2724 = vadd.f32 0.0, %v2723
  %2725 = vdwg.mxu0
  %v2726 = vadd.f32 %v2657, %v2703
  %v2727 = vadd.f32 %v2660, %v2706
  %v2728 = vadd.f32 %v2663, %v2709
  %v2729 = vadd.f32 %v2666, %v2712
  %v2730 = vadd.f32 %v2669, %v2715
  %v2731 = vadd.f32 %v2672, %v2718
  %v2732 = vadd.f32 %v2675, %v2721
  %v2733 = vadd.f32 %v2678, %v2724
  %s2734 = scalar_lea.vmem %s5, 352
  %v2735 = vld [vmem:[%s2734] sm:$0xff]
  %v2736 = vld [vmem:[%s2734 + $0x8] sm:$0xff]
  %v2737 = vld [vmem:[%s2734 + $0x10] sm:$0xff]
  %v2738 = vld [vmem:[%s2734 + $0x18] sm:$0xff]
  %2739 = vmatpush.msra.mxu0 0.0
  %2740 = vmatpush.msra.mxu0 0.0
  %2741 = vmatpush.msra.mxu0 0.0
  %2742 = vmatpush.msra.mxu0 0.0
  %2743 = vmatpush.msra.mxu0 0.0
  %2744 = vmatpush.msra.mxu0 0.0
  %2745 = vmatpush.msra.mxu0 0.0
  %2746 = vmatpush.msra.mxu0 0.0
  %2747 = vmatpush.msra.mxu0 0.0
  %2748 = vmatpush.msra.mxu0 0.0
  %2749 = vmatpush.msra.mxu0 0.0
  %2750 = vmatpush.msra.mxu0 0.0
  %2751 = vmatpush.msra.mxu0 %v2738
  %2752 = vmatpush.msra.mxu0 %v2737
  %2753 = vmatpush.msra.mxu0 %v2736
  %2754 = vmatpush.msra.mxu0 %v2735
  %2755 = vmatmul.f32.gmra.mxu0 %v2025
  %v2756 = vpop.f32.mrf.mxu0
  %v2757 = vadd.f32 0.0, %v2756
  %2758 = vmatmul.f32.gmra.mxu0 %v2027
  %v2759 = vpop.f32.mrf.mxu0
  %v2760 = vadd.f32 0.0, %v2759
  %2761 = vmatmul.f32.gmra.mxu0 %v2029
  %v2762 = vpop.f32.mrf.mxu0
  %v2763 = vadd.f32 0.0, %v2762
  %2764 = vmatmul.f32.gmra.mxu0 %v2031
  %v2765 = vpop.f32.mrf.mxu0
  %v2766 = vadd.f32 0.0, %v2765
  %2767 = vmatmul.f32.gmra.mxu0 %v2033
  %v2768 = vpop.f32.mrf.mxu0
  %v2769 = vadd.f32 0.0, %v2768
  %2770 = vmatmul.f32.gmra.mxu0 %v2035
  %v2771 = vpop.f32.mrf.mxu0
  %v2772 = vadd.f32 0.0, %v2771
  %2773 = vmatmul.f32.gmra.mxu0 %v2037
  %v2774 = vpop.f32.mrf.mxu0
  %v2775 = vadd.f32 0.0, %v2774
  %2776 = vmatmul.f32.gmra.mxu0 %v2213
  %v2777 = vpop.f32.mrf.mxu0
  %v2778 = vadd.f32 0.0, %v2777
  %2779 = vdwg.mxu0
  %v2780 = vadd.f32 %v2726, %v2757
  %v2781 = vadd.f32 %v2727, %v2760
  %v2782 = vadd.f32 %v2728, %v2763
  %v2783 = vadd.f32 %v2729, %v2766
  %v2784 = vadd.f32 %v2730, %v2769
  %v2785 = vadd.f32 %v2731, %v2772
  %v2786 = vadd.f32 %v2732, %v2775
  %v2787 = vadd.f32 %v2733, %v2778
  %s2788 = scalar_lea.vmem %s5, 96
  %v2789 = vld [vmem:[%s2788] sm:$0xff]
  %v2790 = vld [vmem:[%s2788 + $0x8] sm:$0xff]
  %v2791 = vld [vmem:[%s2788 + $0x10] sm:$0xff]
  %v2792 = vld [vmem:[%s2788 + $0x18] sm:$0xff]
  %2793 = vmatpush.msra.mxu0 0.0
  %2794 = vmatpush.msra.mxu0 0.0
  %2795 = vmatpush.msra.mxu0 0.0
  %2796 = vmatpush.msra.mxu0 0.0
  %2797 = vmatpush.msra.mxu0 0.0
  %2798 = vmatpush.msra.mxu0 0.0
  %2799 = vmatpush.msra.mxu0 0.0
  %2800 = vmatpush.msra.mxu0 0.0
  %2801 = vmatpush.msra.mxu0 0.0
  %2802 = vmatpush.msra.mxu0 0.0
  %2803 = vmatpush.msra.mxu0 0.0
  %2804 = vmatpush.msra.mxu0 0.0
  %2805 = vmatpush.msra.mxu0 %v2792
  %2806 = vmatpush.msra.mxu0 %v2791
  %2807 = vmatpush.msra.mxu0 %v2790
  %2808 = vmatpush.msra.mxu0 %v2789
  %2809 = vmatmul.f32.gmra.mxu0 %v1883
  %v2810 = vpop.f32.mrf.mxu0
  %v2811 = vadd.f32 0.0, %v2810
  %2812 = vmatmul.f32.gmra.mxu0 %v1885
  %v2813 = vpop.f32.mrf.mxu0
  %v2814 = vadd.f32 0.0, %v2813
  %2815 = vmatmul.f32.gmra.mxu0 %v1887
  %v2816 = vpop.f32.mrf.mxu0
  %v2817 = vadd.f32 0.0, %v2816
  %2818 = vmatmul.f32.gmra.mxu0 %v1889
  %v2819 = vpop.f32.mrf.mxu0
  %v2820 = vadd.f32 0.0, %v2819
  %2821 = vmatmul.f32.gmra.mxu0 %v1891
  %v2822 = vpop.f32.mrf.mxu0
  %v2823 = vadd.f32 0.0, %v2822
  %2824 = vmatmul.f32.gmra.mxu0 %v1893
  %v2825 = vpop.f32.mrf.mxu0
  %v2826 = vadd.f32 0.0, %v2825
  %2827 = vmatmul.f32.gmra.mxu0 %v2154
  %v2828 = vpop.f32.mrf.mxu0
  %v2829 = vadd.f32 0.0, %v2828
  %2830 = vmatmul.f32.gmra.mxu0 %v1879
  %v2831 = vpop.f32.mrf.mxu0
  %v2832 = vadd.f32 0.0, %v2831
  %2833 = vdwg.mxu0
  %v2834 = vadd.f32 %v2780, %v2811
  %v2835 = vadd.f32 %v2781, %v2814
  %v2836 = vadd.f32 %v2782, %v2817
  %v2837 = vadd.f32 %v2783, %v2820
  %v2838 = vadd.f32 %v2784, %v2823
  %v2839 = vadd.f32 %v2785, %v2826
  %v2840 = vadd.f32 %v2786, %v2829
  %v2841 = vadd.f32 %v2787, %v2832
  %s2842 = scalar_lea.vmem %s5, 32
  %v2843 = vld [vmem:[%s2842] sm:$0xff]
  %v2844 = vld [vmem:[%s2842 + $0x8] sm:$0xff]
  %v2845 = vld [vmem:[%s2842 + $0x10] sm:$0xff]
  %v2846 = vld [vmem:[%s2842 + $0x18] sm:$0xff]
  %2847 = vmatpush.msra.mxu0 0.0
  %2848 = vmatpush.msra.mxu0 0.0
  %2849 = vmatpush.msra.mxu0 0.0
  %2850 = vmatpush.msra.mxu0 0.0
  %2851 = vmatpush.msra.mxu0 0.0
  %2852 = vmatpush.msra.mxu0 0.0
  %2853 = vmatpush.msra.mxu0 0.0
  %2854 = vmatpush.msra.mxu0 0.0
  %2855 = vmatpush.msra.mxu0 0.0
  %2856 = vmatpush.msra.mxu0 0.0
  %2857 = vmatpush.msra.mxu0 0.0
  %2858 = vmatpush.msra.mxu0 0.0
  %2859 = vmatpush.msra.mxu0 %v2846
  %2860 = vmatpush.msra.mxu0 %v2845
  %2861 = vmatpush.msra.mxu0 %v2844
  %2862 = vmatpush.msra.mxu0 %v2843
  %2863 = vmatmul.f32.gmra.mxu0 %v2027
  %v2864 = vpop.f32.mrf.mxu0
  %v2865 = vadd.f32 0.0, %v2864
  %2866 = vmatmul.f32.gmra.mxu0 %v2029
  %v2867 = vpop.f32.mrf.mxu0
  %v2868 = vadd.f32 0.0, %v2867
  %2869 = vmatmul.f32.gmra.mxu0 %v2031
  %v2870 = vpop.f32.mrf.mxu0
  %v2871 = vadd.f32 0.0, %v2870
  %2872 = vmatmul.f32.gmra.mxu0 %v2033
  %v2873 = vpop.f32.mrf.mxu0
  %v2874 = vadd.f32 0.0, %v2873
  %2875 = vmatmul.f32.gmra.mxu0 %v2035
  %v2876 = vpop.f32.mrf.mxu0
  %v2877 = vadd.f32 0.0, %v2876
  %2878 = vmatmul.f32.gmra.mxu0 %v2037
  %v2879 = vpop.f32.mrf.mxu0
  %v2880 = vadd.f32 0.0, %v2879
  %2881 = vmatmul.f32.gmra.mxu0 %v2213
  %v2882 = vpop.f32.mrf.mxu0
  %v2883 = vadd.f32 0.0, %v2882
  %2884 = vmatmul.f32.gmra.mxu0 %v2023
  %v2885 = vpop.f32.mrf.mxu0
  %v2886 = vadd.f32 0.0, %v2885
  %2887 = vdwg.mxu0
  %v2888 = vadd.f32 %v2834, %v2865
  %v2889 = vadd.f32 %v2835, %v2868
  %v2890 = vadd.f32 %v2836, %v2871
  %v2891 = vadd.f32 %v2837, %v2874
  %v2892 = vadd.f32 %v2838, %v2877
  %v2893 = vadd.f32 %v2839, %v2880
  %v2894 = vadd.f32 %v2840, %v2883
  %v2895 = vadd.f32 %v2841, %v2886
  %v2896 = vadd.f32 %v2888, %v2426
  %v2897 = vadd.f32 %v2889, %v2426
  %v2898 = vadd.f32 %v2890, %v2426
  %v2899 = vadd.f32 %v2891, %v2426
  %v2900 = vadd.f32 %v2892, %v2426
  %v2901 = vadd.f32 %v2893, %v2426
  %v2902 = vadd.f32 %v2894, %v2426
  %v2903 = vadd.f32 %v2895, %v2426
  %v2904 = vxor.u32 %v2896, 2147483648
  %v2905 = vxor.u32 %v2897, 2147483648
  %v2906 = vxor.u32 %v2898, 2147483648
  %v2907 = vxor.u32 %v2899, 2147483648
  %v2908 = vxor.u32 %v2900, 2147483648
  %v2909 = vxor.u32 %v2901, 2147483648
  %v2910 = vxor.u32 %v2902, 2147483648
  %v2911 = vxor.u32 %v2903, 2147483648
  %v2912 = vmul.f32 %v2904, 1.442695
  %v2913 = vpow.pop %v2912
  %v2914 = vmul.f32 %v2905, 1.442695
  %v2915 = vpow.pop %v2914
  %v2916 = vmul.f32 %v2906, 1.442695
  %v2917 = vpow.pop %v2916
  %v2918 = vmul.f32 %v2907, 1.442695
  %v2919 = vpow.pop %v2918
  %v2920 = vmul.f32 %v2908, 1.442695
  %v2921 = vpow.pop %v2920
  %v2922 = vmul.f32 %v2909, 1.442695
  %v2923 = vpow.pop %v2922
  %v2924 = vmul.f32 %v2910, 1.442695
  %v2925 = vpow.pop %v2924
  %v2926 = vmul.f32 %v2911, 1.442695
  %v2927 = vpow.pop %v2926
  %v2928 = vadd.f32 %v2913, 1.0
  %v2929 = vadd.f32 %v2915, 1.0
  %v2930 = vadd.f32 %v2917, 1.0
  %v2931 = vadd.f32 %v2919, 1.0
  %v2932 = vadd.f32 %v2921, 1.0
  %v2933 = vadd.f32 %v2923, 1.0
  %v2934 = vadd.f32 %v2925, 1.0
  %v2935 = vadd.f32 %v2927, 1.0
  %v2936 = vrcp.pop %v2928
  %v2937 = vmul.f32 %v2928, %v2936
  %v2938 = vsub.f32 1.0, %v2937
  %v2939 = vmul.f32 %v2936, %v2938
  %v2940 = vadd.f32 %v2936, %v2939
  %vm2941 = vweird.f32 %v2928
  %vm2942 = vweird.f32 %v2936
  %vm2943 = vmor %vm2941, %vm2942
  %v2944 = vsel %vm2943, %v2936, %v2940
  %v2945 = vand.u32 2147483647, %v2928
  %vm2946 = vcmp.eq.f32.partialorder %v2945, 8.507059e+37
  %v2947 = vand.u32 %v2928, 2147483648
  %v2948 = vor.u32 1.1754944e-38, %v2947
  %v2949 = vsel %vm2946, %v2948, %v2944
  %v2950 = vmul.f32 1.0, %v2949
  %v2951 = vrcp.pop %v2929
  %v2952 = vmul.f32 %v2929, %v2951
  %v2953 = vsub.f32 1.0, %v2952
  %v2954 = vmul.f32 %v2951, %v2953
  %v2955 = vadd.f32 %v2951, %v2954
  %vm2956 = vweird.f32 %v2929
  %vm2957 = vweird.f32 %v2951
  %vm2958 = vmor %vm2956, %vm2957
  %v2959 = vsel %vm2958, %v2951, %v2955
  %v2960 = vand.u32 2147483647, %v2929
  %vm2961 = vcmp.eq.f32.partialorder %v2960, 8.507059e+37
  %v2962 = vand.u32 %v2929, 2147483648
  %v2963 = vor.u32 1.1754944e-38, %v2962
  %v2964 = vsel %vm2961, %v2963, %v2959
  %v2965 = vmul.f32 1.0, %v2964
  %v2966 = vrcp.pop %v2930
  %v2967 = vmul.f32 %v2930, %v2966
  %v2968 = vsub.f32 1.0, %v2967
  %v2969 = vmul.f32 %v2966, %v2968
  %v2970 = vadd.f32 %v2966, %v2969
  %vm2971 = vweird.f32 %v2930
  %vm2972 = vweird.f32 %v2966
  %vm2973 = vmor %vm2971, %vm2972
  %v2974 = vsel %vm2973, %v2966, %v2970
  %v2975 = vand.u32 2147483647, %v2930
  %vm2976 = vcmp.eq.f32.partialorder %v2975, 8.507059e+37
  %v2977 = vand.u32 %v2930, 2147483648
  %v2978 = vor.u32 1.1754944e-38, %v2977
  %v2979 = vsel %vm2976, %v2978, %v2974
  %v2980 = vmul.f32 1.0, %v2979
  %v2981 = vrcp.pop %v2931
  %v2982 = vmul.f32 %v2931, %v2981
  %v2983 = vsub.f32 1.0, %v2982
  %v2984 = vmul.f32 %v2981, %v2983
  %v2985 = vadd.f32 %v2981, %v2984
  %vm2986 = vweird.f32 %v2931
  %vm2987 = vweird.f32 %v2981
  %vm2988 = vmor %vm2986, %vm2987
  %v2989 = vsel %vm2988, %v2981, %v2985
  %v2990 = vand.u32 2147483647, %v2931
  %vm2991 = vcmp.eq.f32.partialorder %v2990, 8.507059e+37
  %v2992 = vand.u32 %v2931, 2147483648
  %v2993 = vor.u32 1.1754944e-38, %v2992
  %v2994 = vsel %vm2991, %v2993, %v2989
  %v2995 = vmul.f32 1.0, %v2994
  %v2996 = vrcp.pop %v2932
  %v2997 = vmul.f32 %v2932, %v2996
  %v2998 = vsub.f32 1.0, %v2997
  %v2999 = vmul.f32 %v2996, %v2998
  %v3000 = vadd.f32 %v2996, %v2999
  %vm3001 = vweird.f32 %v2932
  %vm3002 = vweird.f32 %v2996
  %vm3003 = vmor %vm3001, %vm3002
  %v3004 = vsel %vm3003, %v2996, %v3000
  %v3005 = vand.u32 2147483647, %v2932
  %vm3006 = vcmp.eq.f32.partialorder %v3005, 8.507059e+37
  %v3007 = vand.u32 %v2932, 2147483648
  %v3008 = vor.u32 1.1754944e-38, %v3007
  %v3009 = vsel %vm3006, %v3008, %v3004
  %v3010 = vmul.f32 1.0, %v3009
  %v3011 = vrcp.pop %v2933
  %v3012 = vmul.f32 %v2933, %v3011
  %v3013 = vsub.f32 1.0, %v3012
  %v3014 = vmul.f32 %v3011, %v3013
  %v3015 = vadd.f32 %v3011, %v3014
  %vm3016 = vweird.f32 %v2933
  %vm3017 = vweird.f32 %v3011
  %vm3018 = vmor %vm3016, %vm3017
  %v3019 = vsel %vm3018, %v3011, %v3015
  %v3020 = vand.u32 2147483647, %v2933
  %vm3021 = vcmp.eq.f32.partialorder %v3020, 8.507059e+37
  %v3022 = vand.u32 %v2933, 2147483648
  %v3023 = vor.u32 1.1754944e-38, %v3022
  %v3024 = vsel %vm3021, %v3023, %v3019
  %v3025 = vmul.f32 1.0, %v3024
  %v3026 = vrcp.pop %v2934
  %v3027 = vmul.f32 %v2934, %v3026
  %v3028 = vsub.f32 1.0, %v3027
  %v3029 = vmul.f32 %v3026, %v3028
  %v3030 = vadd.f32 %v3026, %v3029
  %vm3031 = vweird.f32 %v2934
  %vm3032 = vweird.f32 %v3026
  %vm3033 = vmor %vm3031, %vm3032
  %v3034 = vsel %vm3033, %v3026, %v3030
  %v3035 = vand.u32 2147483647, %v2934
  %vm3036 = vcmp.eq.f32.partialorder %v3035, 8.507059e+37
  %v3037 = vand.u32 %v2934, 2147483648
  %v3038 = vor.u32 1.1754944e-38, %v3037
  %v3039 = vsel %vm3036, %v3038, %v3034
  %v3040 = vmul.f32 1.0, %v3039
  %v3041 = vrcp.pop %v2935
  %v3042 = vmul.f32 %v2935, %v3041
  %v3043 = vsub.f32 1.0, %v3042
  %v3044 = vmul.f32 %v3041, %v3043
  %v3045 = vadd.f32 %v3041, %v3044
  %vm3046 = vweird.f32 %v2935
  %vm3047 = vweird.f32 %v3041
  %vm3048 = vmor %vm3046, %vm3047
  %v3049 = vsel %vm3048, %v3041, %v3045
  %v3050 = vand.u32 2147483647, %v2935
  %vm3051 = vcmp.eq.f32.partialorder %v3050, 8.507059e+37
  %v3052 = vand.u32 %v2935, 2147483648
  %v3053 = vor.u32 1.1754944e-38, %v3052
  %v3054 = vsel %vm3051, %v3053, %v3049
  %v3055 = vmul.f32 1.0, %v3054
  %s3056 = scalar_lea.vmem %s5, 608
  %v3057 = vld [vmem:[%s3056] sm:$0xff]
  %v3058 = vld [vmem:[%s3056 + $0x8] sm:$0xff]
  %v3059 = vld [vmem:[%s3056 + $0x10] sm:$0xff]
  %v3060 = vld [vmem:[%s3056 + $0x18] sm:$0xff]
  %s3061 = scalar_lea.vmem %s5, 544
  %v3062 = vld [vmem:[%s3061] sm:$0xff]
  %v3063 = vld [vmem:[%s3061 + $0x8] sm:$0xff]
  %v3064 = vld [vmem:[%s3061 + $0x10] sm:$0xff]
  %v3065 = vld [vmem:[%s3061 + $0x18] sm:$0xff]
  %3066 = vmatpush.msra.mxu0 0.0
  %3067 = vmatpush.msra.mxu0 0.0
  %3068 = vmatpush.msra.mxu0 0.0
  %3069 = vmatpush.msra.mxu0 0.0
  %3070 = vmatpush.msra.mxu0 0.0
  %3071 = vmatpush.msra.mxu0 0.0
  %3072 = vmatpush.msra.mxu0 0.0
  %3073 = vmatpush.msra.mxu0 0.0
  %3074 = vmatpush.msra.mxu0 0.0
  %3075 = vmatpush.msra.mxu0 0.0
  %3076 = vmatpush.msra.mxu0 0.0
  %3077 = vmatpush.msra.mxu0 0.0
  %3078 = vmatpush.msra.mxu0 %v3065
  %3079 = vmatpush.msra.mxu0 %v3064
  %3080 = vmatpush.msra.mxu0 %v3063
  %3081 = vmatpush.msra.mxu0 %v3062
  %3082 = vmatmul.f32.gmra.mxu0 %v1881
  %v3083 = vpop.f32.mrf.mxu0
  %v3084 = vadd.f32 0.0, %v3083
  %3085 = vmatmul.f32.gmra.mxu0 %v1883
  %v3086 = vpop.f32.mrf.mxu0
  %v3087 = vadd.f32 0.0, %v3086
  %3088 = vmatmul.f32.gmra.mxu0 %v1885
  %v3089 = vpop.f32.mrf.mxu0
  %v3090 = vadd.f32 0.0, %v3089
  %3091 = vmatmul.f32.gmra.mxu0 %v1887
  %v3092 = vpop.f32.mrf.mxu0
  %v3093 = vadd.f32 0.0, %v3092
  %3094 = vmatmul.f32.gmra.mxu0 %v1889
  %v3095 = vpop.f32.mrf.mxu0
  %v3096 = vadd.f32 0.0, %v3095
  %3097 = vmatmul.f32.gmra.mxu0 %v1891
  %v3098 = vpop.f32.mrf.mxu0
  %v3099 = vadd.f32 0.0, %v3098
  %3100 = vmatmul.f32.gmra.mxu0 %v1893
  %v3101 = vpop.f32.mrf.mxu0
  %v3102 = vadd.f32 0.0, %v3101
  %3103 = vmatmul.f32.gmra.mxu0 %v2154
  %v3104 = vpop.f32.mrf.mxu0
  %v3105 = vadd.f32 0.0, %v3104
  %3106 = vdwg.mxu0
  %3107 = vmatpush.msra.mxu0 0.0
  %3108 = vmatpush.msra.mxu0 0.0
  %3109 = vmatpush.msra.mxu0 0.0
  %3110 = vmatpush.msra.mxu0 0.0
  %3111 = vmatpush.msra.mxu0 0.0
  %3112 = vmatpush.msra.mxu0 0.0
  %3113 = vmatpush.msra.mxu0 0.0
  %3114 = vmatpush.msra.mxu0 0.0
  %3115 = vmatpush.msra.mxu0 0.0
  %3116 = vmatpush.msra.mxu0 0.0
  %3117 = vmatpush.msra.mxu0 0.0
  %3118 = vmatpush.msra.mxu0 0.0
  %3119 = vmatpush.msra.mxu0 %v3060
  %3120 = vmatpush.msra.mxu0 %v3059
  %3121 = vmatpush.msra.mxu0 %v3058
  %3122 = vmatpush.msra.mxu0 %v3057
  %3123 = vmatmul.f32.gmra.mxu0 %v1938
  %v3124 = vpop.f32.mrf.mxu0
  %v3125 = vadd.f32 %v3084, %v3124
  %3126 = vmatmul.f32.gmra.mxu0 %v1940
  %v3127 = vpop.f32.mrf.mxu0
  %v3128 = vadd.f32 %v3087, %v3127
  %3129 = vmatmul.f32.gmra.mxu0 %v1942
  %v3130 = vpop.f32.mrf.mxu0
  %v3131 = vadd.f32 %v3090, %v3130
  %3132 = vmatmul.f32.gmra.mxu0 %v1944
  %v3133 = vpop.f32.mrf.mxu0
  %v3134 = vadd.f32 %v3093, %v3133
  %3135 = vmatmul.f32.gmra.mxu0 %v1946
  %v3136 = vpop.f32.mrf.mxu0
  %v3137 = vadd.f32 %v3096, %v3136
  %3138 = vmatmul.f32.gmra.mxu0 %v1948
  %v3139 = vpop.f32.mrf.mxu0
  %v3140 = vadd.f32 %v3099, %v3139
  %3141 = vmatmul.f32.gmra.mxu0 %v1950
  %v3142 = vpop.f32.mrf.mxu0
  %v3143 = vadd.f32 %v3102, %v3142
  %3144 = vmatmul.f32.gmra.mxu0 %v2094
  %v3145 = vpop.f32.mrf.mxu0
  %v3146 = vadd.f32 %v3105, %v3145
  %3147 = vdwg.mxu0
  %s3148 = scalar_lea.vmem %s5, 480
  %v3149 = vld [vmem:[%s3148] sm:$0xff]
  %v3150 = vld [vmem:[%s3148 + $0x8] sm:$0xff]
  %v3151 = vld [vmem:[%s3148 + $0x10] sm:$0xff]
  %v3152 = vld [vmem:[%s3148 + $0x18] sm:$0xff]
  %3153 = vmatpush.msra.mxu0 0.0
  %3154 = vmatpush.msra.mxu0 0.0
  %3155 = vmatpush.msra.mxu0 0.0
  %3156 = vmatpush.msra.mxu0 0.0
  %3157 = vmatpush.msra.mxu0 0.0
  %3158 = vmatpush.msra.mxu0 0.0
  %3159 = vmatpush.msra.mxu0 0.0
  %3160 = vmatpush.msra.mxu0 0.0
  %3161 = vmatpush.msra.mxu0 0.0
  %3162 = vmatpush.msra.mxu0 0.0
  %3163 = vmatpush.msra.mxu0 0.0
  %3164 = vmatpush.msra.mxu0 0.0
  %3165 = vmatpush.msra.mxu0 %v3152
  %3166 = vmatpush.msra.mxu0 %v3151
  %3167 = vmatpush.msra.mxu0 %v3150
  %3168 = vmatpush.msra.mxu0 %v3149
  %3169 = vmatmul.f32.gmra.mxu0 %v2025
  %v3170 = vpop.f32.mrf.mxu0
  %v3171 = vadd.f32 0.0, %v3170
  %3172 = vmatmul.f32.gmra.mxu0 %v2027
  %v3173 = vpop.f32.mrf.mxu0
  %v3174 = vadd.f32 0.0, %v3173
  %3175 = vmatmul.f32.gmra.mxu0 %v2029
  %v3176 = vpop.f32.mrf.mxu0
  %v3177 = vadd.f32 0.0, %v3176
  %3178 = vmatmul.f32.gmra.mxu0 %v2031
  %v3179 = vpop.f32.mrf.mxu0
  %v3180 = vadd.f32 0.0, %v3179
  %3181 = vmatmul.f32.gmra.mxu0 %v2033
  %v3182 = vpop.f32.mrf.mxu0
  %v3183 = vadd.f32 0.0, %v3182
  %3184 = vmatmul.f32.gmra.mxu0 %v2035
  %v3185 = vpop.f32.mrf.mxu0
  %v3186 = vadd.f32 0.0, %v3185
  %3187 = vmatmul.f32.gmra.mxu0 %v2037
  %v3188 = vpop.f32.mrf.mxu0
  %v3189 = vadd.f32 0.0, %v3188
  %3190 = vmatmul.f32.gmra.mxu0 %v2213
  %v3191 = vpop.f32.mrf.mxu0
  %v3192 = vadd.f32 0.0, %v3191
  %3193 = vdwg.mxu0
  %v3194 = vadd.f32 %v3125, %v3171
  %v3195 = vadd.f32 %v3128, %v3174
  %v3196 = vadd.f32 %v3131, %v3177
  %v3197 = vadd.f32 %v3134, %v3180
  %v3198 = vadd.f32 %v3137, %v3183
  %v3199 = vadd.f32 %v3140, %v3186
  %v3200 = vadd.f32 %v3143, %v3189
  %v3201 = vadd.f32 %v3146, %v3192
  %s3202 = scalar_lea.vmem %s5, 288
  %v3203 = vld [vmem:[%s3202] sm:$0xff]
  %v3204 = vld [vmem:[%s3202 + $0x8] sm:$0xff]
  %v3205 = vld [vmem:[%s3202 + $0x10] sm:$0xff]
  %v3206 = vld [vmem:[%s3202 + $0x18] sm:$0xff]
  %3207 = vmatpush.msra.mxu0 0.0
  %3208 = vmatpush.msra.mxu0 0.0
  %3209 = vmatpush.msra.mxu0 0.0
  %3210 = vmatpush.msra.mxu0 0.0
  %3211 = vmatpush.msra.mxu0 0.0
  %3212 = vmatpush.msra.mxu0 0.0
  %3213 = vmatpush.msra.mxu0 0.0
  %3214 = vmatpush.msra.mxu0 0.0
  %3215 = vmatpush.msra.mxu0 0.0
  %3216 = vmatpush.msra.mxu0 0.0
  %3217 = vmatpush.msra.mxu0 0.0
  %3218 = vmatpush.msra.mxu0 0.0
  %3219 = vmatpush.msra.mxu0 %v3206
  %3220 = vmatpush.msra.mxu0 %v3205
  %3221 = vmatpush.msra.mxu0 %v3204
  %3222 = vmatpush.msra.mxu0 %v3203
  %3223 = vmatmul.f32.gmra.mxu0 %v1940
  %v3224 = vpop.f32.mrf.mxu0
  %v3225 = vadd.f32 0.0, %v3224
  %3226 = vmatmul.f32.gmra.mxu0 %v1942
  %v3227 = vpop.f32.mrf.mxu0
  %v3228 = vadd.f32 0.0, %v3227
  %3229 = vmatmul.f32.gmra.mxu0 %v1944
  %v3230 = vpop.f32.mrf.mxu0
  %v3231 = vadd.f32 0.0, %v3230
  %3232 = vmatmul.f32.gmra.mxu0 %v1946
  %v3233 = vpop.f32.mrf.mxu0
  %v3234 = vadd.f32 0.0, %v3233
  %3235 = vmatmul.f32.gmra.mxu0 %v1948
  %v3236 = vpop.f32.mrf.mxu0
  %v3237 = vadd.f32 0.0, %v3236
  %3238 = vmatmul.f32.gmra.mxu0 %v1950
  %v3239 = vpop.f32.mrf.mxu0
  %v3240 = vadd.f32 0.0, %v3239
  %3241 = vmatmul.f32.gmra.mxu0 %v2094
  %v3242 = vpop.f32.mrf.mxu0
  %v3243 = vadd.f32 0.0, %v3242
  %3244 = vmatmul.f32.gmra.mxu0 %v1936
  %v3245 = vpop.f32.mrf.mxu0
  %v3246 = vadd.f32 0.0, %v3245
  %3247 = vdwg.mxu0
  %v3248 = vadd.f32 %v3194, %v3225
  %v3249 = vadd.f32 %v3195, %v3228
  %v3250 = vadd.f32 %v3196, %v3231
  %v3251 = vadd.f32 %v3197, %v3234
  %v3252 = vadd.f32 %v3198, %v3237
  %v3253 = vadd.f32 %v3199, %v3240
  %v3254 = vadd.f32 %v3200, %v3243
  %v3255 = vadd.f32 %v3201, %v3246
  %s3256 = scalar_lea.vmem %s5, 224
  %v3257 = vld [vmem:[%s3256] sm:$0xff]
  %v3258 = vld [vmem:[%s3256 + $0x8] sm:$0xff]
  %v3259 = vld [vmem:[%s3256 + $0x10] sm:$0xff]
  %v3260 = vld [vmem:[%s3256 + $0x18] sm:$0xff]
  %3261 = vmatpush.msra.mxu0 0.0
  %3262 = vmatpush.msra.mxu0 0.0
  %3263 = vmatpush.msra.mxu0 0.0
  %3264 = vmatpush.msra.mxu0 0.0
  %3265 = vmatpush.msra.mxu0 0.0
  %3266 = vmatpush.msra.mxu0 0.0
  %3267 = vmatpush.msra.mxu0 0.0
  %3268 = vmatpush.msra.mxu0 0.0
  %3269 = vmatpush.msra.mxu0 0.0
  %3270 = vmatpush.msra.mxu0 0.0
  %3271 = vmatpush.msra.mxu0 0.0
  %3272 = vmatpush.msra.mxu0 0.0
  %3273 = vmatpush.msra.mxu0 %v3260
  %3274 = vmatpush.msra.mxu0 %v3259
  %3275 = vmatpush.msra.mxu0 %v3258
  %3276 = vmatpush.msra.mxu0 %v3257
  %3277 = vmatmul.f32.gmra.mxu0 %v1883
  %v3278 = vpop.f32.mrf.mxu0
  %v3279 = vadd.f32 0.0, %v3278
  %3280 = vmatmul.f32.gmra.mxu0 %v1885
  %v3281 = vpop.f32.mrf.mxu0
  %v3282 = vadd.f32 0.0, %v3281
  %3283 = vmatmul.f32.gmra.mxu0 %v1887
  %v3284 = vpop.f32.mrf.mxu0
  %v3285 = vadd.f32 0.0, %v3284
  %3286 = vmatmul.f32.gmra.mxu0 %v1889
  %v3287 = vpop.f32.mrf.mxu0
  %v3288 = vadd.f32 0.0, %v3287
  %3289 = vmatmul.f32.gmra.mxu0 %v1891
  %v3290 = vpop.f32.mrf.mxu0
  %v3291 = vadd.f32 0.0, %v3290
  %3292 = vmatmul.f32.gmra.mxu0 %v1893
  %v3293 = vpop.f32.mrf.mxu0
  %v3294 = vadd.f32 0.0, %v3293
  %3295 = vmatmul.f32.gmra.mxu0 %v2154
  %v3296 = vpop.f32.mrf.mxu0
  %v3297 = vadd.f32 0.0, %v3296
  %3298 = vmatmul.f32.gmra.mxu0 %v1879
  %v3299 = vpop.f32.mrf.mxu0
  %v3300 = vadd.f32 0.0, %v3299
  %3301 = vdwg.mxu0
  %v3302 = vadd.f32 %v3248, %v3279
  %v3303 = vadd.f32 %v3249, %v3282
  %v3304 = vadd.f32 %v3250, %v3285
  %v3305 = vadd.f32 %v3251, %v3288
  %v3306 = vadd.f32 %v3252, %v3291
  %v3307 = vadd.f32 %v3253, %v3294
  %v3308 = vadd.f32 %v3254, %v3297
  %v3309 = vadd.f32 %v3255, %v3300
  %s3310 = scalar_lea.vmem %s5, 160
  %v3311 = vld [vmem:[%s3310] sm:$0xff]
  %v3312 = vld [vmem:[%s3310 + $0x8] sm:$0xff]
  %v3313 = vld [vmem:[%s3310 + $0x10] sm:$0xff]
  %v3314 = vld [vmem:[%s3310 + $0x18] sm:$0xff]
  %3315 = vmatpush.msra.mxu0 0.0
  %3316 = vmatpush.msra.mxu0 0.0
  %3317 = vmatpush.msra.mxu0 0.0
  %3318 = vmatpush.msra.mxu0 0.0
  %3319 = vmatpush.msra.mxu0 0.0
  %3320 = vmatpush.msra.mxu0 0.0
  %3321 = vmatpush.msra.mxu0 0.0
  %3322 = vmatpush.msra.mxu0 0.0
  %3323 = vmatpush.msra.mxu0 0.0
  %3324 = vmatpush.msra.mxu0 0.0
  %3325 = vmatpush.msra.mxu0 0.0
  %3326 = vmatpush.msra.mxu0 0.0
  %3327 = vmatpush.msra.mxu0 %v3314
  %3328 = vmatpush.msra.mxu0 %v3313
  %3329 = vmatpush.msra.mxu0 %v3312
  %3330 = vmatpush.msra.mxu0 %v3311
  %3331 = vmatmul.f32.gmra.mxu0 %v2027
  %v3332 = vpop.f32.mrf.mxu0
  %v3333 = vadd.f32 0.0, %v3332
  %3334 = vmatmul.f32.gmra.mxu0 %v2029
  %v3335 = vpop.f32.mrf.mxu0
  %v3336 = vadd.f32 0.0, %v3335
  %3337 = vmatmul.f32.gmra.mxu0 %v2031
  %v3338 = vpop.f32.mrf.mxu0
  %v3339 = vadd.f32 0.0, %v3338
  %3340 = vmatmul.f32.gmra.mxu0 %v2033
  %v3341 = vpop.f32.mrf.mxu0
  %v3342 = vadd.f32 0.0, %v3341
  %3343 = vmatmul.f32.gmra.mxu0 %v2035
  %v3344 = vpop.f32.mrf.mxu0
  %v3345 = vadd.f32 0.0, %v3344
  %3346 = vmatmul.f32.gmra.mxu0 %v2037
  %v3347 = vpop.f32.mrf.mxu0
  %v3348 = vadd.f32 0.0, %v3347
  %3349 = vmatmul.f32.gmra.mxu0 %v2213
  %v3350 = vpop.f32.mrf.mxu0
  %v3351 = vadd.f32 0.0, %v3350
  %3352 = vmatmul.f32.gmra.mxu0 %v2023
  %v3353 = vpop.f32.mrf.mxu0
  %v3354 = vadd.f32 0.0, %v3353
  %3355 = vdwg.mxu0
  %v3356 = vadd.f32 %v3302, %v3333
  %v3357 = vadd.f32 %v3303, %v3336
  %v3358 = vadd.f32 %v3304, %v3339
  %v3359 = vadd.f32 %v3305, %v3342
  %v3360 = vadd.f32 %v3306, %v3345
  %v3361 = vadd.f32 %v3307, %v3348
  %v3362 = vadd.f32 %v3308, %v3351
  %v3363 = vadd.f32 %v3309, %v3354
  %v3364 = vadd.f32 %v3356, %v2426
  %v3365 = vadd.f32 %v3357, %v2426
  %v3366 = vadd.f32 %v3358, %v2426
  %v3367 = vadd.f32 %v3359, %v2426
  %v3368 = vadd.f32 %v3360, %v2426
  %v3369 = vadd.f32 %v3361, %v2426
  %v3370 = vadd.f32 %v3362, %v2426
  %v3371 = vadd.f32 %v3363, %v2426
  %v3372 = vxor.u32 %v3364, 2147483648
  %v3373 = vxor.u32 %v3365, 2147483648
  %v3374 = vxor.u32 %v3366, 2147483648
  %v3375 = vxor.u32 %v3367, 2147483648
  %v3376 = vxor.u32 %v3368, 2147483648
  %v3377 = vxor.u32 %v3369, 2147483648
  %v3378 = vxor.u32 %v3370, 2147483648
  %v3379 = vxor.u32 %v3371, 2147483648
  %v3380 = vmul.f32 %v3372, 1.442695
  %v3381 = vpow.pop %v3380
  %v3382 = vmul.f32 %v3373, 1.442695
  %v3383 = vpow.pop %v3382
  %v3384 = vmul.f32 %v3374, 1.442695
  %v3385 = vpow.pop %v3384
  %v3386 = vmul.f32 %v3375, 1.442695
  %v3387 = vpow.pop %v3386
  %v3388 = vmul.f32 %v3376, 1.442695
  %v3389 = vpow.pop %v3388
  %v3390 = vmul.f32 %v3377, 1.442695
  %v3391 = vpow.pop %v3390
  %v3392 = vmul.f32 %v3378, 1.442695
  %v3393 = vpow.pop %v3392
  %v3394 = vmul.f32 %v3379, 1.442695
  %v3395 = vpow.pop %v3394
  %v3396 = vadd.f32 %v3381, 1.0
  %v3397 = vadd.f32 %v3383, 1.0
  %v3398 = vadd.f32 %v3385, 1.0
  %v3399 = vadd.f32 %v3387, 1.0
  %v3400 = vadd.f32 %v3389, 1.0
  %v3401 = vadd.f32 %v3391, 1.0
  %v3402 = vadd.f32 %v3393, 1.0
  %v3403 = vadd.f32 %v3395, 1.0
  %v3404 = vrcp.pop %v3396
  %v3405 = vmul.f32 %v3396, %v3404
  %v3406 = vsub.f32 1.0, %v3405
  %v3407 = vmul.f32 %v3404, %v3406
  %v3408 = vadd.f32 %v3404, %v3407
  %vm3409 = vweird.f32 %v3396
  %vm3410 = vweird.f32 %v3404
  %vm3411 = vmor %vm3409, %vm3410
  %v3412 = vsel %vm3411, %v3404, %v3408
  %v3413 = vand.u32 2147483647, %v3396
  %vm3414 = vcmp.eq.f32.partialorder %v3413, 8.507059e+37
  %v3415 = vand.u32 %v3396, 2147483648
  %v3416 = vor.u32 1.1754944e-38, %v3415
  %v3417 = vsel %vm3414, %v3416, %v3412
  %v3418 = vmul.f32 1.0, %v3417
  %v3419 = vrcp.pop %v3397
  %v3420 = vmul.f32 %v3397, %v3419
  %v3421 = vsub.f32 1.0, %v3420
  %v3422 = vmul.f32 %v3419, %v3421
  %v3423 = vadd.f32 %v3419, %v3422
  %vm3424 = vweird.f32 %v3397
  %vm3425 = vweird.f32 %v3419
  %vm3426 = vmor %vm3424, %vm3425
  %v3427 = vsel %vm3426, %v3419, %v3423
  %v3428 = vand.u32 2147483647, %v3397
  %vm3429 = vcmp.eq.f32.partialorder %v3428, 8.507059e+37
  %v3430 = vand.u32 %v3397, 2147483648
  %v3431 = vor.u32 1.1754944e-38, %v3430
  %v3432 = vsel %vm3429, %v3431, %v3427
  %v3433 = vmul.f32 1.0, %v3432
  %v3434 = vrcp.pop %v3398
  %v3435 = vmul.f32 %v3398, %v3434
  %v3436 = vsub.f32 1.0, %v3435
  %v3437 = vmul.f32 %v3434, %v3436
  %v3438 = vadd.f32 %v3434, %v3437
  %vm3439 = vweird.f32 %v3398
  %vm3440 = vweird.f32 %v3434
  %vm3441 = vmor %vm3439, %vm3440
  %v3442 = vsel %vm3441, %v3434, %v3438
  %v3443 = vand.u32 2147483647, %v3398
  %vm3444 = vcmp.eq.f32.partialorder %v3443, 8.507059e+37
  %v3445 = vand.u32 %v3398, 2147483648
  %v3446 = vor.u32 1.1754944e-38, %v3445
  %v3447 = vsel %vm3444, %v3446, %v3442
  %v3448 = vmul.f32 1.0, %v3447
  %v3449 = vrcp.pop %v3399
  %v3450 = vmul.f32 %v3399, %v3449
  %v3451 = vsub.f32 1.0, %v3450
  %v3452 = vmul.f32 %v3449, %v3451
  %v3453 = vadd.f32 %v3449, %v3452
  %vm3454 = vweird.f32 %v3399
  %vm3455 = vweird.f32 %v3449
  %vm3456 = vmor %vm3454, %vm3455
  %v3457 = vsel %vm3456, %v3449, %v3453
  %v3458 = vand.u32 2147483647, %v3399
  %vm3459 = vcmp.eq.f32.partialorder %v3458, 8.507059e+37
  %v3460 = vand.u32 %v3399, 2147483648
  %v3461 = vor.u32 1.1754944e-38, %v3460
  %v3462 = vsel %vm3459, %v3461, %v3457
  %v3463 = vmul.f32 1.0, %v3462
  %v3464 = vrcp.pop %v3400
  %v3465 = vmul.f32 %v3400, %v3464
  %v3466 = vsub.f32 1.0, %v3465
  %v3467 = vmul.f32 %v3464, %v3466
  %v3468 = vadd.f32 %v3464, %v3467
  %vm3469 = vweird.f32 %v3400
  %vm3470 = vweird.f32 %v3464
  %vm3471 = vmor %vm3469, %vm3470
  %v3472 = vsel %vm3471, %v3464, %v3468
  %v3473 = vand.u32 2147483647, %v3400
  %vm3474 = vcmp.eq.f32.partialorder %v3473, 8.507059e+37
  %v3475 = vand.u32 %v3400, 2147483648
  %v3476 = vor.u32 1.1754944e-38, %v3475
  %v3477 = vsel %vm3474, %v3476, %v3472
  %v3478 = vmul.f32 1.0, %v3477
  %v3479 = vrcp.pop %v3401
  %v3480 = vmul.f32 %v3401, %v3479
  %v3481 = vsub.f32 1.0, %v3480
  %v3482 = vmul.f32 %v3479, %v3481
  %v3483 = vadd.f32 %v3479, %v3482
  %vm3484 = vweird.f32 %v3401
  %vm3485 = vweird.f32 %v3479
  %vm3486 = vmor %vm3484, %vm3485
  %v3487 = vsel %vm3486, %v3479, %v3483
  %v3488 = vand.u32 2147483647, %v3401
  %vm3489 = vcmp.eq.f32.partialorder %v3488, 8.507059e+37
  %v3490 = vand.u32 %v3401, 2147483648
  %v3491 = vor.u32 1.1754944e-38, %v3490
  %v3492 = vsel %vm3489, %v3491, %v3487
  %v3493 = vmul.f32 1.0, %v3492
  %v3494 = vrcp.pop %v3402
  %v3495 = vmul.f32 %v3402, %v3494
  %v3496 = vsub.f32 1.0, %v3495
  %v3497 = vmul.f32 %v3494, %v3496
  %v3498 = vadd.f32 %v3494, %v3497
  %vm3499 = vweird.f32 %v3402
  %vm3500 = vweird.f32 %v3494
  %vm3501 = vmor %vm3499, %vm3500
  %v3502 = vsel %vm3501, %v3494, %v3498
  %v3503 = vand.u32 2147483647, %v3402
  %vm3504 = vcmp.eq.f32.partialorder %v3503, 8.507059e+37
  %v3505 = vand.u32 %v3402, 2147483648
  %v3506 = vor.u32 1.1754944e-38, %v3505
  %v3507 = vsel %vm3504, %v3506, %v3502
  %v3508 = vmul.f32 1.0, %v3507
  %v3509 = vrcp.pop %v3403
  %v3510 = vmul.f32 %v3403, %v3509
  %v3511 = vsub.f32 1.0, %v3510
  %v3512 = vmul.f32 %v3509, %v3511
  %v3513 = vadd.f32 %v3509, %v3512
  %vm3514 = vweird.f32 %v3403
  %vm3515 = vweird.f32 %v3509
  %vm3516 = vmor %vm3514, %vm3515
  %v3517 = vsel %vm3516, %v3509, %v3513
  %v3518 = vand.u32 2147483647, %v3403
  %vm3519 = vcmp.eq.f32.partialorder %v3518, 8.507059e+37
  %v3520 = vand.u32 %v3403, 2147483648
  %v3521 = vor.u32 1.1754944e-38, %v3520
  %v3522 = vsel %vm3519, %v3521, %v3517
  %v3523 = vmul.f32 1.0, %v3522
  %s3524 = scalar_lea.vmem %s5, 576
  %v3525 = vld [vmem:[%s3524] sm:$0xff]
  %v3526 = vld [vmem:[%s3524 + $0x8] sm:$0xff]
  %v3527 = vld [vmem:[%s3524 + $0x10] sm:$0xff]
  %v3528 = vld [vmem:[%s3524 + $0x18] sm:$0xff]
  %s3529 = scalar_lea.vmem %s5, 512
  %v3530 = vld [vmem:[%s3529] sm:$0xff]
  %v3531 = vld [vmem:[%s3529 + $0x8] sm:$0xff]
  %v3532 = vld [vmem:[%s3529 + $0x10] sm:$0xff]
  %v3533 = vld [vmem:[%s3529 + $0x18] sm:$0xff]
  %3534 = vmatpush.msra.mxu0 0.0
  %3535 = vmatpush.msra.mxu0 0.0
  %3536 = vmatpush.msra.mxu0 0.0
  %3537 = vmatpush.msra.mxu0 0.0
  %3538 = vmatpush.msra.mxu0 0.0
  %3539 = vmatpush.msra.mxu0 0.0
  %3540 = vmatpush.msra.mxu0 0.0
  %3541 = vmatpush.msra.mxu0 0.0
  %3542 = vmatpush.msra.mxu0 0.0
  %3543 = vmatpush.msra.mxu0 0.0
  %3544 = vmatpush.msra.mxu0 0.0
  %3545 = vmatpush.msra.mxu0 0.0
  %3546 = vmatpush.msra.mxu0 %v3533
  %3547 = vmatpush.msra.mxu0 %v3532
  %3548 = vmatpush.msra.mxu0 %v3531
  %3549 = vmatpush.msra.mxu0 %v3530
  %3550 = vmatmul.f32.gmra.mxu0 %v2025
  %v3551 = vpop.f32.mrf.mxu0
  %v3552 = vadd.f32 0.0, %v3551
  %3553 = vmatmul.f32.gmra.mxu0 %v2027
  %v3554 = vpop.f32.mrf.mxu0
  %v3555 = vadd.f32 0.0, %v3554
  %3556 = vmatmul.f32.gmra.mxu0 %v2029
  %v3557 = vpop.f32.mrf.mxu0
  %v3558 = vadd.f32 0.0, %v3557
  %3559 = vmatmul.f32.gmra.mxu0 %v2031
  %v3560 = vpop.f32.mrf.mxu0
  %v3561 = vadd.f32 0.0, %v3560
  %3562 = vmatmul.f32.gmra.mxu0 %v2033
  %v3563 = vpop.f32.mrf.mxu0
  %v3564 = vadd.f32 0.0, %v3563
  %3565 = vmatmul.f32.gmra.mxu0 %v2035
  %v3566 = vpop.f32.mrf.mxu0
  %v3567 = vadd.f32 0.0, %v3566
  %3568 = vmatmul.f32.gmra.mxu0 %v2037
  %v3569 = vpop.f32.mrf.mxu0
  %v3570 = vadd.f32 0.0, %v3569
  %3571 = vmatmul.f32.gmra.mxu0 %v2213
  %v3572 = vpop.f32.mrf.mxu0
  %v3573 = vadd.f32 0.0, %v3572
  %3574 = vdwg.mxu0
  %3575 = vmatpush.msra.mxu0 0.0
  %3576 = vmatpush.msra.mxu0 0.0
  %3577 = vmatpush.msra.mxu0 0.0
  %3578 = vmatpush.msra.mxu0 0.0
  %3579 = vmatpush.msra.mxu0 0.0
  %3580 = vmatpush.msra.mxu0 0.0
  %3581 = vmatpush.msra.mxu0 0.0
  %3582 = vmatpush.msra.mxu0 0.0
  %3583 = vmatpush.msra.mxu0 0.0
  %3584 = vmatpush.msra.mxu0 0.0
  %3585 = vmatpush.msra.mxu0 0.0
  %3586 = vmatpush.msra.mxu0 0.0
  %3587 = vmatpush.msra.mxu0 %v3528
  %3588 = vmatpush.msra.mxu0 %v3527
  %3589 = vmatpush.msra.mxu0 %v3526
  %3590 = vmatpush.msra.mxu0 %v3525
  %3591 = vmatmul.f32.gmra.mxu0 %v1881
  %v3592 = vpop.f32.mrf.mxu0
  %v3593 = vadd.f32 %v3552, %v3592
  %3594 = vmatmul.f32.gmra.mxu0 %v1883
  %v3595 = vpop.f32.mrf.mxu0
  %v3596 = vadd.f32 %v3555, %v3595
  %3597 = vmatmul.f32.gmra.mxu0 %v1885
  %v3598 = vpop.f32.mrf.mxu0
  %v3599 = vadd.f32 %v3558, %v3598
  %3600 = vmatmul.f32.gmra.mxu0 %v1887
  %v3601 = vpop.f32.mrf.mxu0
  %v3602 = vadd.f32 %v3561, %v3601
  %3603 = vmatmul.f32.gmra.mxu0 %v1889
  %v3604 = vpop.f32.mrf.mxu0
  %v3605 = vadd.f32 %v3564, %v3604
  %3606 = vmatmul.f32.gmra.mxu0 %v1891
  %v3607 = vpop.f32.mrf.mxu0
  %v3608 = vadd.f32 %v3567, %v3607
  %3609 = vmatmul.f32.gmra.mxu0 %v1893
  %v3610 = vpop.f32.mrf.mxu0
  %v3611 = vadd.f32 %v3570, %v3610
  %3612 = vmatmul.f32.gmra.mxu0 %v2154
  %v3613 = vpop.f32.mrf.mxu0
  %v3614 = vadd.f32 %v3573, %v3613
  %3615 = vdwg.mxu0
  %s3616 = scalar_lea.vmem %s5, 256
  %v3617 = vld [vmem:[%s3616] sm:$0xff]
  %v3618 = vld [vmem:[%s3616 + $0x8] sm:$0xff]
  %v3619 = vld [vmem:[%s3616 + $0x10] sm:$0xff]
  %v3620 = vld [vmem:[%s3616 + $0x18] sm:$0xff]
  %3621 = vmatpush.msra.mxu0 0.0
  %3622 = vmatpush.msra.mxu0 0.0
  %3623 = vmatpush.msra.mxu0 0.0
  %3624 = vmatpush.msra.mxu0 0.0
  %3625 = vmatpush.msra.mxu0 0.0
  %3626 = vmatpush.msra.mxu0 0.0
  %3627 = vmatpush.msra.mxu0 0.0
  %3628 = vmatpush.msra.mxu0 0.0
  %3629 = vmatpush.msra.mxu0 0.0
  %3630 = vmatpush.msra.mxu0 0.0
  %3631 = vmatpush.msra.mxu0 0.0
  %3632 = vmatpush.msra.mxu0 0.0
  %3633 = vmatpush.msra.mxu0 %v3620
  %3634 = vmatpush.msra.mxu0 %v3619
  %3635 = vmatpush.msra.mxu0 %v3618
  %3636 = vmatpush.msra.mxu0 %v3617
  %3637 = vmatmul.f32.gmra.mxu0 %v1883
  %v3638 = vpop.f32.mrf.mxu0
  %v3639 = vadd.f32 0.0, %v3638
  %3640 = vmatmul.f32.gmra.mxu0 %v1885
  %v3641 = vpop.f32.mrf.mxu0
  %v3642 = vadd.f32 0.0, %v3641
  %3643 = vmatmul.f32.gmra.mxu0 %v1887
  %v3644 = vpop.f32.mrf.mxu0
  %v3645 = vadd.f32 0.0, %v3644
  %3646 = vmatmul.f32.gmra.mxu0 %v1889
  %v3647 = vpop.f32.mrf.mxu0
  %v3648 = vadd.f32 0.0, %v3647
  %3649 = vmatmul.f32.gmra.mxu0 %v1891
  %v3650 = vpop.f32.mrf.mxu0
  %v3651 = vadd.f32 0.0, %v3650
  %3652 = vmatmul.f32.gmra.mxu0 %v1893
  %v3653 = vpop.f32.mrf.mxu0
  %v3654 = vadd.f32 0.0, %v3653
  %3655 = vmatmul.f32.gmra.mxu0 %v2154
  %v3656 = vpop.f32.mrf.mxu0
  %v3657 = vadd.f32 0.0, %v3656
  %3658 = vmatmul.f32.gmra.mxu0 %v1879
  %v3659 = vpop.f32.mrf.mxu0
  %v3660 = vadd.f32 0.0, %v3659
  %3661 = vdwg.mxu0
  %v3662 = vadd.f32 %v3593, %v3639
  %v3663 = vadd.f32 %v3596, %v3642
  %v3664 = vadd.f32 %v3599, %v3645
  %v3665 = vadd.f32 %v3602, %v3648
  %v3666 = vadd.f32 %v3605, %v3651
  %v3667 = vadd.f32 %v3608, %v3654
  %v3668 = vadd.f32 %v3611, %v3657
  %v3669 = vadd.f32 %v3614, %v3660
  %s3670 = scalar_lea.vmem %s5, 192
  %v3671 = vld [vmem:[%s3670] sm:$0xff]
  %v3672 = vld [vmem:[%s3670 + $0x8] sm:$0xff]
  %v3673 = vld [vmem:[%s3670 + $0x10] sm:$0xff]
  %v3674 = vld [vmem:[%s3670 + $0x18] sm:$0xff]
  %3675 = vmatpush.msra.mxu0 0.0
  %3676 = vmatpush.msra.mxu0 0.0
  %3677 = vmatpush.msra.mxu0 0.0
  %3678 = vmatpush.msra.mxu0 0.0
  %3679 = vmatpush.msra.mxu0 0.0
  %3680 = vmatpush.msra.mxu0 0.0
  %3681 = vmatpush.msra.mxu0 0.0
  %3682 = vmatpush.msra.mxu0 0.0
  %3683 = vmatpush.msra.mxu0 0.0
  %3684 = vmatpush.msra.mxu0 0.0
  %3685 = vmatpush.msra.mxu0 0.0
  %3686 = vmatpush.msra.mxu0 0.0
  %3687 = vmatpush.msra.mxu0 %v3674
  %3688 = vmatpush.msra.mxu0 %v3673
  %3689 = vmatpush.msra.mxu0 %v3672
  %3690 = vmatpush.msra.mxu0 %v3671
  %3691 = vmatmul.f32.gmra.mxu0 %v2027
  %v3692 = vpop.f32.mrf.mxu0
  %v3693 = vadd.f32 0.0, %v3692
  %3694 = vmatmul.f32.gmra.mxu0 %v2029
  %v3695 = vpop.f32.mrf.mxu0
  %v3696 = vadd.f32 0.0, %v3695
  %3697 = vmatmul.f32.gmra.mxu0 %v2031
  %v3698 = vpop.f32.mrf.mxu0
  %v3699 = vadd.f32 0.0, %v3698
  %3700 = vmatmul.f32.gmra.mxu0 %v2033
  %v3701 = vpop.f32.mrf.mxu0
  %v3702 = vadd.f32 0.0, %v3701
  %3703 = vmatmul.f32.gmra.mxu0 %v2035
  %v3704 = vpop.f32.mrf.mxu0
  %v3705 = vadd.f32 0.0, %v3704
  %3706 = vmatmul.f32.gmra.mxu0 %v2037
  %v3707 = vpop.f32.mrf.mxu0
  %v3708 = vadd.f32 0.0, %v3707
  %3709 = vmatmul.f32.gmra.mxu0 %v2213
  %v3710 = vpop.f32.mrf.mxu0
  %v3711 = vadd.f32 0.0, %v3710
  %3712 = vmatmul.f32.gmra.mxu0 %v2023
  %v3713 = vpop.f32.mrf.mxu0
  %v3714 = vadd.f32 0.0, %v3713
  %3715 = vdwg.mxu0
  %v3716 = vadd.f32 %v3662, %v3693
  %v3717 = vadd.f32 %v3663, %v3696
  %v3718 = vadd.f32 %v3664, %v3699
  %v3719 = vadd.f32 %v3665, %v3702
  %v3720 = vadd.f32 %v3666, %v3705
  %v3721 = vadd.f32 %v3667, %v3708
  %v3722 = vadd.f32 %v3668, %v3711
  %v3723 = vadd.f32 %v3669, %v3714
  %v3724 = vadd.f32 %v3716, %v2426
  %v3725 = vadd.f32 %v3717, %v2426
  %v3726 = vadd.f32 %v3718, %v2426
  %v3727 = vadd.f32 %v3719, %v2426
  %v3728 = vadd.f32 %v3720, %v2426
  %v3729 = vadd.f32 %v3721, %v2426
  %v3730 = vadd.f32 %v3722, %v2426
  %v3731 = vadd.f32 %v3723, %v2426
  %v3732 = vxor.u32 %v3724, 2147483648
  %v3733 = vxor.u32 %v3725, 2147483648
  %v3734 = vxor.u32 %v3726, 2147483648
  %v3735 = vxor.u32 %v3727, 2147483648
  %v3736 = vxor.u32 %v3728, 2147483648
  %v3737 = vxor.u32 %v3729, 2147483648
  %v3738 = vxor.u32 %v3730, 2147483648
  %v3739 = vxor.u32 %v3731, 2147483648
  %v3740 = vmul.f32 %v3732, 1.442695
  %v3741 = vpow.pop %v3740
  %v3742 = vmul.f32 %v3733, 1.442695
  %v3743 = vpow.pop %v3742
  %v3744 = vmul.f32 %v3734, 1.442695
  %v3745 = vpow.pop %v3744
  %v3746 = vmul.f32 %v3735, 1.442695
  %v3747 = vpow.pop %v3746
  %v3748 = vmul.f32 %v3736, 1.442695
  %v3749 = vpow.pop %v3748
  %v3750 = vmul.f32 %v3737, 1.442695
  %v3751 = vpow.pop %v3750
  %v3752 = vmul.f32 %v3738, 1.442695
  %v3753 = vpow.pop %v3752
  %v3754 = vmul.f32 %v3739, 1.442695
  %v3755 = vpow.pop %v3754
  %v3756 = vadd.f32 %v3741, 1.0
  %v3757 = vadd.f32 %v3743, 1.0
  %v3758 = vadd.f32 %v3745, 1.0
  %v3759 = vadd.f32 %v3747, 1.0
  %v3760 = vadd.f32 %v3749, 1.0
  %v3761 = vadd.f32 %v3751, 1.0
  %v3762 = vadd.f32 %v3753, 1.0
  %v3763 = vadd.f32 %v3755, 1.0
  %v3764 = vrcp.pop %v3756
  %v3765 = vmul.f32 %v3756, %v3764
  %v3766 = vsub.f32 1.0, %v3765
  %v3767 = vmul.f32 %v3764, %v3766
  %v3768 = vadd.f32 %v3764, %v3767
  %vm3769 = vweird.f32 %v3756
  %vm3770 = vweird.f32 %v3764
  %vm3771 = vmor %vm3769, %vm3770
  %v3772 = vsel %vm3771, %v3764, %v3768
  %v3773 = vand.u32 2147483647, %v3756
  %vm3774 = vcmp.eq.f32.partialorder %v3773, 8.507059e+37
  %v3775 = vand.u32 %v3756, 2147483648
  %v3776 = vor.u32 1.1754944e-38, %v3775
  %v3777 = vsel %vm3774, %v3776, %v3772
  %v3778 = vmul.f32 1.0, %v3777
  %v3779 = vrcp.pop %v3757
  %v3780 = vmul.f32 %v3757, %v3779
  %v3781 = vsub.f32 1.0, %v3780
  %v3782 = vmul.f32 %v3779, %v3781
  %v3783 = vadd.f32 %v3779, %v3782
  %vm3784 = vweird.f32 %v3757
  %vm3785 = vweird.f32 %v3779
  %vm3786 = vmor %vm3784, %vm3785
  %v3787 = vsel %vm3786, %v3779, %v3783
  %v3788 = vand.u32 2147483647, %v3757
  %vm3789 = vcmp.eq.f32.partialorder %v3788, 8.507059e+37
  %v3790 = vand.u32 %v3757, 2147483648
  %v3791 = vor.u32 1.1754944e-38, %v3790
  %v3792 = vsel %vm3789, %v3791, %v3787
  %v3793 = vmul.f32 1.0, %v3792
  %v3794 = vrcp.pop %v3758
  %v3795 = vmul.f32 %v3758, %v3794
  %v3796 = vsub.f32 1.0, %v3795
  %v3797 = vmul.f32 %v3794, %v3796
  %v3798 = vadd.f32 %v3794, %v3797
  %vm3799 = vweird.f32 %v3758
  %vm3800 = vweird.f32 %v3794
  %vm3801 = vmor %vm3799, %vm3800
  %v3802 = vsel %vm3801, %v3794, %v3798
  %v3803 = vand.u32 2147483647, %v3758
  %vm3804 = vcmp.eq.f32.partialorder %v3803, 8.507059e+37
  %v3805 = vand.u32 %v3758, 2147483648
  %v3806 = vor.u32 1.1754944e-38, %v3805
  %v3807 = vsel %vm3804, %v3806, %v3802
  %v3808 = vmul.f32 1.0, %v3807
  %v3809 = vrcp.pop %v3759
  %v3810 = vmul.f32 %v3759, %v3809
  %v3811 = vsub.f32 1.0, %v3810
  %v3812 = vmul.f32 %v3809, %v3811
  %v3813 = vadd.f32 %v3809, %v3812
  %vm3814 = vweird.f32 %v3759
  %vm3815 = vweird.f32 %v3809
  %vm3816 = vmor %vm3814, %vm3815
  %v3817 = vsel %vm3816, %v3809, %v3813
  %v3818 = vand.u32 2147483647, %v3759
  %vm3819 = vcmp.eq.f32.partialorder %v3818, 8.507059e+37
  %v3820 = vand.u32 %v3759, 2147483648
  %v3821 = vor.u32 1.1754944e-38, %v3820
  %v3822 = vsel %vm3819, %v3821, %v3817
  %v3823 = vmul.f32 1.0, %v3822
  %v3824 = vrcp.pop %v3760
  %v3825 = vmul.f32 %v3760, %v3824
  %v3826 = vsub.f32 1.0, %v3825
  %v3827 = vmul.f32 %v3824, %v3826
  %v3828 = vadd.f32 %v3824, %v3827
  %vm3829 = vweird.f32 %v3760
  %vm3830 = vweird.f32 %v3824
  %vm3831 = vmor %vm3829, %vm3830
  %v3832 = vsel %vm3831, %v3824, %v3828
  %v3833 = vand.u32 2147483647, %v3760
  %vm3834 = vcmp.eq.f32.partialorder %v3833, 8.507059e+37
  %v3835 = vand.u32 %v3760, 2147483648
  %v3836 = vor.u32 1.1754944e-38, %v3835
  %v3837 = vsel %vm3834, %v3836, %v3832
  %v3838 = vmul.f32 1.0, %v3837
  %v3839 = vrcp.pop %v3761
  %v3840 = vmul.f32 %v3761, %v3839
  %v3841 = vsub.f32 1.0, %v3840
  %v3842 = vmul.f32 %v3839, %v3841
  %v3843 = vadd.f32 %v3839, %v3842
  %vm3844 = vweird.f32 %v3761
  %vm3845 = vweird.f32 %v3839
  %vm3846 = vmor %vm3844, %vm3845
  %v3847 = vsel %vm3846, %v3839, %v3843
  %v3848 = vand.u32 2147483647, %v3761
  %vm3849 = vcmp.eq.f32.partialorder %v3848, 8.507059e+37
  %v3850 = vand.u32 %v3761, 2147483648
  %v3851 = vor.u32 1.1754944e-38, %v3850
  %v3852 = vsel %vm3849, %v3851, %v3847
  %v3853 = vmul.f32 1.0, %v3852
  %v3854 = vrcp.pop %v3762
  %v3855 = vmul.f32 %v3762, %v3854
  %v3856 = vsub.f32 1.0, %v3855
  %v3857 = vmul.f32 %v3854, %v3856
  %v3858 = vadd.f32 %v3854, %v3857
  %vm3859 = vweird.f32 %v3762
  %vm3860 = vweird.f32 %v3854
  %vm3861 = vmor %vm3859, %vm3860
  %v3862 = vsel %vm3861, %v3854, %v3858
  %v3863 = vand.u32 2147483647, %v3762
  %vm3864 = vcmp.eq.f32.partialorder %v3863, 8.507059e+37
  %v3865 = vand.u32 %v3762, 2147483648
  %v3866 = vor.u32 1.1754944e-38, %v3865
  %v3867 = vsel %vm3864, %v3866, %v3862
  %v3868 = vmul.f32 1.0, %v3867
  %v3869 = vrcp.pop %v3763
  %v3870 = vmul.f32 %v3763, %v3869
  %v3871 = vsub.f32 1.0, %v3870
  %v3872 = vmul.f32 %v3869, %v3871
  %v3873 = vadd.f32 %v3869, %v3872
  %vm3874 = vweird.f32 %v3763
  %vm3875 = vweird.f32 %v3869
  %vm3876 = vmor %vm3874, %vm3875
  %v3877 = vsel %vm3876, %v3869, %v3873
  %v3878 = vand.u32 2147483647, %v3763
  %vm3879 = vcmp.eq.f32.partialorder %v3878, 8.507059e+37
  %v3880 = vand.u32 %v3763, 2147483648
  %v3881 = vor.u32 1.1754944e-38, %v3880
  %v3882 = vsel %vm3879, %v3881, %v3877
  %v3883 = vmul.f32 1.0, %v3882
  %v3892 = vrot.slane %v2482, 1
  %v3893 = vrot.slane %v2482, 2
  %v3894 = vrot.slane %v2482, 3
  %v3895 = vrot.slane %v2482, 4
  %v3896 = vrot.slane %v2482, 5
  %v3897 = vrot.slane %v2482, 6
  %v3898 = vrot.slane %v2482, 7
  %v3899 = vrot.slane %v2497, 1
  %v3900 = vrot.slane %v2497, 2
  %v3901 = vrot.slane %v2497, 3
  %v3902 = vrot.slane %v2497, 4
  %v3903 = vrot.slane %v2497, 5
  %v3904 = vrot.slane %v2497, 6
  %v3905 = vrot.slane %v2497, 7
  %v3906 = vrot.slane %v2512, 1
  %v3907 = vrot.slane %v2512, 2
  %v3908 = vrot.slane %v2512, 3
  %v3909 = vrot.slane %v2512, 4
  %v3910 = vrot.slane %v2512, 5
  %v3911 = vrot.slane %v2512, 6
  %v3912 = vrot.slane %v2512, 7
  %v3913 = vrot.slane %v2527, 1
  %v3914 = vrot.slane %v2527, 2
  %v3915 = vrot.slane %v2527, 3
  %v3916 = vrot.slane %v2527, 4
  %v3917 = vrot.slane %v2527, 5
  %v3918 = vrot.slane %v2527, 6
  %v3919 = vrot.slane %v2527, 7
  %v3920 = vrot.slane %v2542, 1
  %v3921 = vrot.slane %v2542, 2
  %v3922 = vrot.slane %v2542, 3
  %v3923 = vrot.slane %v2542, 4
  %v3924 = vrot.slane %v2542, 5
  %v3925 = vrot.slane %v2542, 6
  %v3926 = vrot.slane %v2542, 7
  %v3927 = vrot.slane %v2557, 1
  %v3928 = vrot.slane %v2557, 2
  %v3929 = vrot.slane %v2557, 3
  %v3930 = vrot.slane %v2557, 4
  %v3931 = vrot.slane %v2557, 5
  %v3932 = vrot.slane %v2557, 6
  %v3933 = vrot.slane %v2557, 7
  %v3934 = vrot.slane %v2572, 1
  %v3935 = vrot.slane %v2572, 2
  %v3936 = vrot.slane %v2572, 3
  %v3937 = vrot.slane %v2572, 4
  %v3938 = vrot.slane %v2572, 5
  %v3939 = vrot.slane %v2572, 6
  %v3940 = vrot.slane %v2572, 7
  %v3941 = vrot.slane %v2587, 1
  %v3942 = vrot.slane %v2587, 2
  %v3943 = vrot.slane %v2587, 3
  %v3944 = vrot.slane %v2587, 4
  %v3945 = vrot.slane %v2587, 5
  %v3946 = vrot.slane %v2587, 6
  %v3947 = vrot.slane %v2587, 7
  %v4012 = vrot.slane %v2950, 1
  %v4013 = vrot.slane %v2950, 2
  %v4014 = vrot.slane %v2950, 3
  %v4015 = vrot.slane %v2950, 4
  %v4016 = vrot.slane %v2950, 5
  %v4017 = vrot.slane %v2950, 6
  %v4018 = vrot.slane %v2950, 7
  %v4019 = vrot.slane %v2965, 1
  %v4020 = vrot.slane %v2965, 2
  %v4021 = vrot.slane %v2965, 3
  %v4022 = vrot.slane %v2965, 4
  %v4023 = vrot.slane %v2965, 5
  %v4024 = vrot.slane %v2965, 6
  %v4025 = vrot.slane %v2965, 7
  %v4026 = vrot.slane %v2980, 1
  %v4027 = vrot.slane %v2980, 2
  %v4028 = vrot.slane %v2980, 3
  %v4029 = vrot.slane %v2980, 4
  %v4030 = vrot.slane %v2980, 5
  %v4031 = vrot.slane %v2980, 6
  %v4032 = vrot.slane %v2980, 7
  %v4033 = vrot.slane %v2995, 1
  %v4034 = vrot.slane %v2995, 2
  %v4035 = vrot.slane %v2995, 3
  %v4036 = vrot.slane %v2995, 4
  %v4037 = vrot.slane %v2995, 5
  %v4038 = vrot.slane %v2995, 6
  %v4039 = vrot.slane %v2995, 7
  %v4040 = vrot.slane %v3010, 1
  %v4041 = vrot.slane %v3010, 2
  %v4042 = vrot.slane %v3010, 3
  %v4043 = vrot.slane %v3010, 4
  %v4044 = vrot.slane %v3010, 5
  %v4045 = vrot.slane %v3010, 6
  %v4046 = vrot.slane %v3010, 7
  %v4047 = vrot.slane %v3025, 1
  %v4048 = vrot.slane %v3025, 2
  %v4049 = vrot.slane %v3025, 3
  %v4050 = vrot.slane %v3025, 4
  %v4051 = vrot.slane %v3025, 5
  %v4052 = vrot.slane %v3025, 6
  %v4053 = vrot.slane %v3025, 7
  %v4054 = vrot.slane %v3040, 1
  %v4055 = vrot.slane %v3040, 2
  %v4056 = vrot.slane %v3040, 3
  %v4057 = vrot.slane %v3040, 4
  %v4058 = vrot.slane %v3040, 5
  %v4059 = vrot.slane %v3040, 6
  %v4060 = vrot.slane %v3040, 7
  %v4061 = vrot.slane %v3055, 1
  %v4062 = vrot.slane %v3055, 2
  %v4063 = vrot.slane %v3055, 3
  %v4064 = vrot.slane %v3055, 4
  %v4065 = vrot.slane %v3055, 5
  %v4066 = vrot.slane %v3055, 6
  %v4067 = vrot.slane %v3055, 7
  %v4068 = vperm.slane %v2950, 0
  %v4069 = vperm.slane %v4012, 0
  %v4070 = vperm.slane %v4013, 0
  %v4071 = vperm.slane %v4014, 0
  %v4072 = vperm.slane %v4015, 0
  %v4073 = vperm.slane %v4016, 0
  %v4074 = vperm.slane %v4017, 0
  %v4075 = vperm.slane %v4018, 0
  %v4076 = vperm.slane %v2965, 0
  %v4077 = vperm.slane %v4019, 0
  %v4078 = vperm.slane %v4020, 0
  %v4079 = vperm.slane %v4021, 0
  %v4080 = vperm.slane %v4022, 0
  %v4081 = vperm.slane %v4023, 0
  %v4082 = vperm.slane %v4024, 0
  %v4083 = vperm.slane %v4025, 0
  %v4084 = vperm.slane %v2980, 0
  %v4085 = vperm.slane %v4026, 0
  %v4086 = vperm.slane %v4027, 0
  %v4087 = vperm.slane %v4028, 0
  %v4088 = vperm.slane %v4029, 0
  %v4089 = vperm.slane %v4030, 0
  %v4090 = vperm.slane %v4031, 0
  %v4091 = vperm.slane %v4032, 0
  %v4092 = vperm.slane %v2995, 0
  %v4093 = vperm.slane %v4033, 0
  %v4094 = vperm.slane %v4034, 0
  %v4095 = vperm.slane %v4035, 0
  %v4096 = vperm.slane %v4036, 0
  %v4097 = vperm.slane %v4037, 0
  %v4098 = vperm.slane %v4038, 0
  %v4099 = vperm.slane %v4039, 0
  %v4100 = vperm.slane %v3010, 0
  %v4101 = vperm.slane %v4040, 0
  %v4102 = vperm.slane %v4041, 0
  %v4103 = vperm.slane %v4042, 0
  %v4104 = vperm.slane %v4043, 0
  %v4105 = vperm.slane %v4044, 0
  %v4106 = vperm.slane %v4045, 0
  %v4107 = vperm.slane %v4046, 0
  %v4108 = vperm.slane %v3025, 0
  %v4109 = vperm.slane %v4047, 0
  %v4110 = vperm.slane %v4048, 0
  %v4111 = vperm.slane %v4049, 0
  %v4112 = vperm.slane %v4050, 0
  %v4113 = vperm.slane %v4051, 0
  %v4114 = vperm.slane %v4052, 0
  %v4115 = vperm.slane %v4053, 0
  %v4116 = vperm.slane %v3040, 0
  %v4117 = vperm.slane %v4054, 0
  %v4118 = vperm.slane %v4055, 0
  %v4119 = vperm.slane %v4056, 0
  %v4120 = vperm.slane %v4057, 0
  %v4121 = vperm.slane %v4058, 0
  %v4122 = vperm.slane %v4059, 0
  %v4123 = vperm.slane %v4060, 0
  %v4124 = vperm.slane %v3055, 0
  %v4125 = vperm.slane %v4061, 0
  %v4126 = vperm.slane %v4062, 0
  %v4127 = vperm.slane %v4063, 0
  %v4128 = vperm.slane %v4064, 0
  %v4129 = vperm.slane %v4065, 0
  %v4130 = vperm.slane %v4066, 0
  %v4131 = vperm.slane %v4067, 0
  %v4196 = vsel %vm172, %v2482, %v4068
  %v4197 = vsel %vm172, %v3892, %v4069
  %v4198 = vsel %vm172, %v3893, %v4070
  %v4199 = vsel %vm172, %v3894, %v4071
  %v4200 = vsel %vm172, %v3895, %v4072
  %v4201 = vsel %vm172, %v3896, %v4073
  %v4202 = vsel %vm172, %v3897, %v4074
  %v4203 = vsel %vm172, %v3898, %v4075
  %v4204 = vsel %vm172, %v2497, %v4076
  %v4205 = vsel %vm172, %v3899, %v4077
  %v4206 = vsel %vm172, %v3900, %v4078
  %v4207 = vsel %vm172, %v3901, %v4079
  %v4208 = vsel %vm172, %v3902, %v4080
  %v4209 = vsel %vm172, %v3903, %v4081
  %v4210 = vsel %vm172, %v3904, %v4082
  %v4211 = vsel %vm172, %v3905, %v4083
  %v4212 = vsel %vm172, %v2512, %v4084
  %v4213 = vsel %vm172, %v3906, %v4085
  %v4214 = vsel %vm172, %v3907, %v4086
  %v4215 = vsel %vm172, %v3908, %v4087
  %v4216 = vsel %vm172, %v3909, %v4088
  %v4217 = vsel %vm172, %v3910, %v4089
  %v4218 = vsel %vm172, %v3911, %v4090
  %v4219 = vsel %vm172, %v3912, %v4091
  %v4220 = vsel %vm172, %v2527, %v4092
  %v4221 = vsel %vm172, %v3913, %v4093
  %v4222 = vsel %vm172, %v3914, %v4094
  %v4223 = vsel %vm172, %v3915, %v4095
  %v4224 = vsel %vm172, %v3916, %v4096
  %v4225 = vsel %vm172, %v3917, %v4097
  %v4226 = vsel %vm172, %v3918, %v4098
  %v4227 = vsel %vm172, %v3919, %v4099
  %v4228 = vsel %vm172, %v2542, %v4100
  %v4229 = vsel %vm172, %v3920, %v4101
  %v4230 = vsel %vm172, %v3921, %v4102
  %v4231 = vsel %vm172, %v3922, %v4103
  %v4232 = vsel %vm172, %v3923, %v4104
  %v4233 = vsel %vm172, %v3924, %v4105
  %v4234 = vsel %vm172, %v3925, %v4106
  %v4235 = vsel %vm172, %v3926, %v4107
  %v4236 = vsel %vm172, %v2557, %v4108
  %v4237 = vsel %vm172, %v3927, %v4109
  %v4238 = vsel %vm172, %v3928, %v4110
  %v4239 = vsel %vm172, %v3929, %v4111
  %v4240 = vsel %vm172, %v3930, %v4112
  %v4241 = vsel %vm172, %v3931, %v4113
  %v4242 = vsel %vm172, %v3932, %v4114
  %v4243 = vsel %vm172, %v3933, %v4115
  %v4244 = vsel %vm172, %v2572, %v4116
  %v4245 = vsel %vm172, %v3934, %v4117
  %v4246 = vsel %vm172, %v3935, %v4118
  %v4247 = vsel %vm172, %v3936, %v4119
  %v4248 = vsel %vm172, %v3937, %v4120
  %v4249 = vsel %vm172, %v3938, %v4121
  %v4250 = vsel %vm172, %v3939, %v4122
  %v4251 = vsel %vm172, %v3940, %v4123
  %v4252 = vsel %vm172, %v2587, %v4124
  %v4253 = vsel %vm172, %v3941, %v4125
  %v4254 = vsel %vm172, %v3942, %v4126
  %v4255 = vsel %vm172, %v3943, %v4127
  %v4256 = vsel %vm172, %v3944, %v4128
  %v4257 = vsel %vm172, %v3945, %v4129
  %v4258 = vsel %vm172, %v3946, %v4130
  %v4259 = vsel %vm172, %v3947, %v4131
  %v4268 = vrot.slane %v3418, 1
  %v4269 = vrot.slane %v3418, 2
  %v4270 = vrot.slane %v3418, 3
  %v4271 = vrot.slane %v3418, 4
  %v4272 = vrot.slane %v3418, 5
  %v4273 = vrot.slane %v3418, 6
  %v4274 = vrot.slane %v3418, 7
  %v4275 = vrot.slane %v3433, 1
  %v4276 = vrot.slane %v3433, 2
  %v4277 = vrot.slane %v3433, 3
  %v4278 = vrot.slane %v3433, 4
  %v4279 = vrot.slane %v3433, 5
  %v4280 = vrot.slane %v3433, 6
  %v4281 = vrot.slane %v3433, 7
  %v4282 = vrot.slane %v3448, 1
  %v4283 = vrot.slane %v3448, 2
  %v4284 = vrot.slane %v3448, 3
  %v4285 = vrot.slane %v3448, 4
  %v4286 = vrot.slane %v3448, 5
  %v4287 = vrot.slane %v3448, 6
  %v4288 = vrot.slane %v3448, 7
  %v4289 = vrot.slane %v3463, 1
  %v4290 = vrot.slane %v3463, 2
  %v4291 = vrot.slane %v3463, 3
  %v4292 = vrot.slane %v3463, 4
  %v4293 = vrot.slane %v3463, 5
  %v4294 = vrot.slane %v3463, 6
  %v4295 = vrot.slane %v3463, 7
  %v4296 = vrot.slane %v3478, 1
  %v4297 = vrot.slane %v3478, 2
  %v4298 = vrot.slane %v3478, 3
  %v4299 = vrot.slane %v3478, 4
  %v4300 = vrot.slane %v3478, 5
  %v4301 = vrot.slane %v3478, 6
  %v4302 = vrot.slane %v3478, 7
  %v4303 = vrot.slane %v3493, 1
  %v4304 = vrot.slane %v3493, 2
  %v4305 = vrot.slane %v3493, 3
  %v4306 = vrot.slane %v3493, 4
  %v4307 = vrot.slane %v3493, 5
  %v4308 = vrot.slane %v3493, 6
  %v4309 = vrot.slane %v3493, 7
  %v4310 = vrot.slane %v3508, 1
  %v4311 = vrot.slane %v3508, 2
  %v4312 = vrot.slane %v3508, 3
  %v4313 = vrot.slane %v3508, 4
  %v4314 = vrot.slane %v3508, 5
  %v4315 = vrot.slane %v3508, 6
  %v4316 = vrot.slane %v3508, 7
  %v4317 = vrot.slane %v3523, 1
  %v4318 = vrot.slane %v3523, 2
  %v4319 = vrot.slane %v3523, 3
  %v4320 = vrot.slane %v3523, 4
  %v4321 = vrot.slane %v3523, 5
  %v4322 = vrot.slane %v3523, 6
  %v4323 = vrot.slane %v3523, 7
  %v4388 = vrot.slane %v3778, 1
  %v4389 = vrot.slane %v3778, 2
  %v4390 = vrot.slane %v3778, 3
  %v4391 = vrot.slane %v3778, 4
  %v4392 = vrot.slane %v3778, 5
  %v4393 = vrot.slane %v3778, 6
  %v4394 = vrot.slane %v3778, 7
  %v4395 = vrot.slane %v3793, 1
  %v4396 = vrot.slane %v3793, 2
  %v4397 = vrot.slane %v3793, 3
  %v4398 = vrot.slane %v3793, 4
  %v4399 = vrot.slane %v3793, 5
  %v4400 = vrot.slane %v3793, 6
  %v4401 = vrot.slane %v3793, 7
  %v4402 = vrot.slane %v3808, 1
  %v4403 = vrot.slane %v3808, 2
  %v4404 = vrot.slane %v3808, 3
  %v4405 = vrot.slane %v3808, 4
  %v4406 = vrot.slane %v3808, 5
  %v4407 = vrot.slane %v3808, 6
  %v4408 = vrot.slane %v3808, 7
  %v4409 = vrot.slane %v3823, 1
  %v4410 = vrot.slane %v3823, 2
  %v4411 = vrot.slane %v3823, 3
  %v4412 = vrot.slane %v3823, 4
  %v4413 = vrot.slane %v3823, 5
  %v4414 = vrot.slane %v3823, 6
  %v4415 = vrot.slane %v3823, 7
  %v4416 = vrot.slane %v3838, 1
  %v4417 = vrot.slane %v3838, 2
  %v4418 = vrot.slane %v3838, 3
  %v4419 = vrot.slane %v3838, 4
  %v4420 = vrot.slane %v3838, 5
  %v4421 = vrot.slane %v3838, 6
  %v4422 = vrot.slane %v3838, 7
  %v4423 = vrot.slane %v3853, 1
  %v4424 = vrot.slane %v3853, 2
  %v4425 = vrot.slane %v3853, 3
  %v4426 = vrot.slane %v3853, 4
  %v4427 = vrot.slane %v3853, 5
  %v4428 = vrot.slane %v3853, 6
  %v4429 = vrot.slane %v3853, 7
  %v4430 = vrot.slane %v3868, 1
  %v4431 = vrot.slane %v3868, 2
  %v4432 = vrot.slane %v3868, 3
  %v4433 = vrot.slane %v3868, 4
  %v4434 = vrot.slane %v3868, 5
  %v4435 = vrot.slane %v3868, 6
  %v4436 = vrot.slane %v3868, 7
  %v4437 = vrot.slane %v3883, 1
  %v4438 = vrot.slane %v3883, 2
  %v4439 = vrot.slane %v3883, 3
  %v4440 = vrot.slane %v3883, 4
  %v4441 = vrot.slane %v3883, 5
  %v4442 = vrot.slane %v3883, 6
  %v4443 = vrot.slane %v3883, 7
  %v4444 = vperm.slane %v3778, 0
  %v4445 = vperm.slane %v4388, 0
  %v4446 = vperm.slane %v4389, 0
  %v4447 = vperm.slane %v4390, 0
  %v4448 = vperm.slane %v4391, 0
  %v4449 = vperm.slane %v4392, 0
  %v4450 = vperm.slane %v4393, 0
  %v4451 = vperm.slane %v4394, 0
  %v4452 = vperm.slane %v3793, 0
  %v4453 = vperm.slane %v4395, 0
  %v4454 = vperm.slane %v4396, 0
  %v4455 = vperm.slane %v4397, 0
  %v4456 = vperm.slane %v4398, 0
  %v4457 = vperm.slane %v4399, 0
  %v4458 = vperm.slane %v4400, 0
  %v4459 = vperm.slane %v4401, 0
  %v4460 = vperm.slane %v3808, 0
  %v4461 = vperm.slane %v4402, 0
  %v4462 = vperm.slane %v4403, 0
  %v4463 = vperm.slane %v4404, 0
  %v4464 = vperm.slane %v4405, 0
  %v4465 = vperm.slane %v4406, 0
  %v4466 = vperm.slane %v4407, 0
  %v4467 = vperm.slane %v4408, 0
  %v4468 = vperm.slane %v3823, 0
  %v4469 = vperm.slane %v4409, 0
  %v4470 = vperm.slane %v4410, 0
  %v4471 = vperm.slane %v4411, 0
  %v4472 = vperm.slane %v4412, 0
  %v4473 = vperm.slane %v4413, 0
  %v4474 = vperm.slane %v4414, 0
  %v4475 = vperm.slane %v4415, 0
  %v4476 = vperm.slane %v3838, 0
  %v4477 = vperm.slane %v4416, 0
  %v4478 = vperm.slane %v4417, 0
  %v4479 = vperm.slane %v4418, 0
  %v4480 = vperm.slane %v4419, 0
  %v4481 = vperm.slane %v4420, 0
  %v4482 = vperm.slane %v4421, 0
  %v4483 = vperm.slane %v4422, 0
  %v4484 = vperm.slane %v3853, 0
  %v4485 = vperm.slane %v4423, 0
  %v4486 = vperm.slane %v4424, 0
  %v4487 = vperm.slane %v4425, 0
  %v4488 = vperm.slane %v4426, 0
  %v4489 = vperm.slane %v4427, 0
  %v4490 = vperm.slane %v4428, 0
  %v4491 = vperm.slane %v4429, 0
  %v4492 = vperm.slane %v3868, 0
  %v4493 = vperm.slane %v4430, 0
  %v4494 = vperm.slane %v4431, 0
  %v4495 = vperm.slane %v4432, 0
  %v4496 = vperm.slane %v4433, 0
  %v4497 = vperm.slane %v4434, 0
  %v4498 = vperm.slane %v4435, 0
  %v4499 = vperm.slane %v4436, 0
  %v4500 = vperm.slane %v3883, 0
  %v4501 = vperm.slane %v4437, 0
  %v4502 = vperm.slane %v4438, 0
  %v4503 = vperm.slane %v4439, 0
  %v4504 = vperm.slane %v4440, 0
  %v4505 = vperm.slane %v4441, 0
  %v4506 = vperm.slane %v4442, 0
  %v4507 = vperm.slane %v4443, 0
  %v4572 = vsel %vm172, %v3418, %v4444
  %v4573 = vsel %vm172, %v4268, %v4445
  %v4574 = vsel %vm172, %v4269, %v4446
  %v4575 = vsel %vm172, %v4270, %v4447
  %v4576 = vsel %vm172, %v4271, %v4448
  %v4577 = vsel %vm172, %v4272, %v4449
  %v4578 = vsel %vm172, %v4273, %v4450
  %v4579 = vsel %vm172, %v4274, %v4451
  %v4580 = vsel %vm172, %v3433, %v4452
  %v4581 = vsel %vm172, %v4275, %v4453
  %v4582 = vsel %vm172, %v4276, %v4454
  %v4583 = vsel %vm172, %v4277, %v4455
  %v4584 = vsel %vm172, %v4278, %v4456
  %v4585 = vsel %vm172, %v4279, %v4457
  %v4586 = vsel %vm172, %v4280, %v4458
  %v4587 = vsel %vm172, %v4281, %v4459
  %v4588 = vsel %vm172, %v3448, %v4460
  %v4589 = vsel %vm172, %v4282, %v4461
  %v4590 = vsel %vm172, %v4283, %v4462
  %v4591 = vsel %vm172, %v4284, %v4463
  %v4592 = vsel %vm172, %v4285, %v4464
  %v4593 = vsel %vm172, %v4286, %v4465
  %v4594 = vsel %vm172, %v4287, %v4466
  %v4595 = vsel %vm172, %v4288, %v4467
  %v4596 = vsel %vm172, %v3463, %v4468
  %v4597 = vsel %vm172, %v4289, %v4469
  %v4598 = vsel %vm172, %v4290, %v4470
  %v4599 = vsel %vm172, %v4291, %v4471
  %v4600 = vsel %vm172, %v4292, %v4472
  %v4601 = vsel %vm172, %v4293, %v4473
  %v4602 = vsel %vm172, %v4294, %v4474
  %v4603 = vsel %vm172, %v4295, %v4475
  %v4604 = vsel %vm172, %v3478, %v4476
  %v4605 = vsel %vm172, %v4296, %v4477
  %v4606 = vsel %vm172, %v4297, %v4478
  %v4607 = vsel %vm172, %v4298, %v4479
  %v4608 = vsel %vm172, %v4299, %v4480
  %v4609 = vsel %vm172, %v4300, %v4481
  %v4610 = vsel %vm172, %v4301, %v4482
  %v4611 = vsel %vm172, %v4302, %v4483
  %v4612 = vsel %vm172, %v3493, %v4484
  %v4613 = vsel %vm172, %v4303, %v4485
  %v4614 = vsel %vm172, %v4304, %v4486
  %v4615 = vsel %vm172, %v4305, %v4487
  %v4616 = vsel %vm172, %v4306, %v4488
  %v4617 = vsel %vm172, %v4307, %v4489
  %v4618 = vsel %vm172, %v4308, %v4490
  %v4619 = vsel %vm172, %v4309, %v4491
  %v4620 = vsel %vm172, %v3508, %v4492
  %v4621 = vsel %vm172, %v4310, %v4493
  %v4622 = vsel %vm172, %v4311, %v4494
  %v4623 = vsel %vm172, %v4312, %v4495
  %v4624 = vsel %vm172, %v4313, %v4496
  %v4625 = vsel %vm172, %v4314, %v4497
  %v4626 = vsel %vm172, %v4315, %v4498
  %v4627 = vsel %vm172, %v4316, %v4499
  %v4628 = vsel %vm172, %v3523, %v4500
  %v4629 = vsel %vm172, %v4317, %v4501
  %v4630 = vsel %vm172, %v4318, %v4502
  %v4631 = vsel %vm172, %v4319, %v4503
  %v4632 = vsel %vm172, %v4320, %v4504
  %v4633 = vsel %vm172, %v4321, %v4505
  %v4634 = vsel %vm172, %v4322, %v4506
  %v4635 = vsel %vm172, %v4323, %v4507
  %4764 = vst [vmem:[#allocation1] ss:$4 sm:$0xff] %v4196
  %s4765 = scalar_lea.vmem [#allocation1], 1
  %4766 = vst [vmem:[%s4765] ss:$4 sm:$0xff] %v4197
  %s4767 = scalar_lea.vmem [#allocation1], 2
  %4768 = vst [vmem:[%s4767] ss:$4 sm:$0xff] %v4198
  %s4769 = scalar_lea.vmem [#allocation1], 3
  %4770 = vst [vmem:[%s4769] ss:$4 sm:$0xff] %v4199
  %s4771 = scalar_lea.vmem [#allocation1], 32
  %4772 = vst [vmem:[%s4771] ss:$4 sm:$0xff] %v4200
  %s4773 = scalar_lea.vmem [#allocation1], 33
  %4774 = vst [vmem:[%s4773] ss:$4 sm:$0xff] %v4201
  %s4775 = scalar_lea.vmem [#allocation1], 34
  %4776 = vst [vmem:[%s4775] ss:$4 sm:$0xff] %v4202
  %s4777 = scalar_lea.vmem [#allocation1], 35
  %4778 = vst [vmem:[%s4777] ss:$4 sm:$0xff] %v4203
  %v4779 = vld.sshfl [vmem:[#allocation1] sm:$0xff pattern:$0x73625140]
  %v4780 = vld.sshfl [vmem:[#allocation1 + $0x20] sm:$0xff pattern:$0x73625140]
  %4781 = vst [vmem:[#allocation1] ss:$4 sm:$0xff] %v4572
  %4782 = vst [vmem:[%s4765] ss:$4 sm:$0xff] %v4573
  %4783 = vst [vmem:[%s4767] ss:$4 sm:$0xff] %v4574
  %4784 = vst [vmem:[%s4769] ss:$4 sm:$0xff] %v4575
  %4785 = vst [vmem:[%s4771] ss:$4 sm:$0xff] %v4576
  %4786 = vst [vmem:[%s4773] ss:$4 sm:$0xff] %v4577
  %4787 = vst [vmem:[%s4775] ss:$4 sm:$0xff] %v4578
  %4788 = vst [vmem:[%s4777] ss:$4 sm:$0xff] %v4579
  %v4789 = vld.sshfl [vmem:[#allocation1] sm:$0xff pattern:$0x73625140]
  %v4790 = vld.sshfl [vmem:[#allocation1 + $0x20] sm:$0xff pattern:$0x73625140]
  %4791 = vst [vmem:[#allocation1] ss:$4 sm:$0xff] %v4204
  %4792 = vst [vmem:[%s4765] ss:$4 sm:$0xff] %v4205
  %4793 = vst [vmem:[%s4767] ss:$4 sm:$0xff] %v4206
  %4794 = vst [vmem:[%s4769] ss:$4 sm:$0xff] %v4207
  %4795 = vst [vmem:[%s4771] ss:$4 sm:$0xff] %v4208
  %4796 = vst [vmem:[%s4773] ss:$4 sm:$0xff] %v4209
  %4797 = vst [vmem:[%s4775] ss:$4 sm:$0xff] %v4210
  %4798 = vst [vmem:[%s4777] ss:$4 sm:$0xff] %v4211
  %v4799 = vld.sshfl [vmem:[#allocation1] sm:$0xff pattern:$0x73625140]
  %v4800 = vld.sshfl [vmem:[#allocation1 + $0x20] sm:$0xff pattern:$0x73625140]
  %4801 = vst [vmem:[#allocation1] ss:$4 sm:$0xff] %v4580
  %4802 = vst [vmem:[%s4765] ss:$4 sm:$0xff] %v4581
  %4803 = vst [vmem:[%s4767] ss:$4 sm:$0xff] %v4582
  %4804 = vst [vmem:[%s4769] ss:$4 sm:$0xff] %v4583
  %4805 = vst [vmem:[%s4771] ss:$4 sm:$0xff] %v4584
  %4806 = vst [vmem:[%s4773] ss:$4 sm:$0xff] %v4585
  %4807 = vst [vmem:[%s4775] ss:$4 sm:$0xff] %v4586
  %4808 = vst [vmem:[%s4777] ss:$4 sm:$0xff] %v4587
  %v4809 = vld.sshfl [vmem:[#allocation1] sm:$0xff pattern:$0x73625140]
  %v4810 = vld.sshfl [vmem:[#allocation1 + $0x20] sm:$0xff pattern:$0x73625140]
  %4811 = vst [vmem:[#allocation1] ss:$4 sm:$0xff] %v4212
  %4812 = vst [vmem:[%s4765] ss:$4 sm:$0xff] %v4213
  %4813 = vst [vmem:[%s4767] ss:$4 sm:$0xff] %v4214
  %4814 = vst [vmem:[%s4769] ss:$4 sm:$0xff] %v4215
  %4815 = vst [vmem:[%s4771] ss:$4 sm:$0xff] %v4216
  %4816 = vst [vmem:[%s4773] ss:$4 sm:$0xff] %v4217
  %4817 = vst [vmem:[%s4775] ss:$4 sm:$0xff] %v4218
  %4818 = vst [vmem:[%s4777] ss:$4 sm:$0xff] %v4219
  %v4819 = vld.sshfl [vmem:[#allocation1] sm:$0xff pattern:$0x73625140]
  %v4820 = vld.sshfl [vmem:[#allocation1 + $0x20] sm:$0xff pattern:$0x73625140]
  %4821 = vst [vmem:[#allocation1] ss:$4 sm:$0xff] %v4588
  %4822 = vst [vmem:[%s4765] ss:$4 sm:$0xff] %v4589
  %4823 = vst [vmem:[%s4767] ss:$4 sm:$0xff] %v4590
  %4824 = vst [vmem:[%s4769] ss:$4 sm:$0xff] %v4591
  %4825 = vst [vmem:[%s4771] ss:$4 sm:$0xff] %v4592
  %4826 = vst [vmem:[%s4773] ss:$4 sm:$0xff] %v4593
  %4827 = vst [vmem:[%s4775] ss:$4 sm:$0xff] %v4594
  %4828 = vst [vmem:[%s4777] ss:$4 sm:$0xff] %v4595
  %v4829 = vld.sshfl [vmem:[#allocation1] sm:$0xff pattern:$0x73625140]
  %v4830 = vld.sshfl [vmem:[#allocation1 + $0x20] sm:$0xff pattern:$0x73625140]
  %4831 = vst [vmem:[#allocation1] ss:$4 sm:$0xff] %v4220
  %4832 = vst [vmem:[%s4765] ss:$4 sm:$0xff] %v4221
  %4833 = vst [vmem:[%s4767] ss:$4 sm:$0xff] %v4222
  %4834 = vst [vmem:[%s4769] ss:$4 sm:$0xff] %v4223
  %4835 = vst [vmem:[%s4771] ss:$4 sm:$0xff] %v4224
  %4836 = vst [vmem:[%s4773] ss:$4 sm:$0xff] %v4225
  %4837 = vst [vmem:[%s4775] ss:$4 sm:$0xff] %v4226
  %4838 = vst [vmem:[%s4777] ss:$4 sm:$0xff] %v4227
  %v4839 = vld.sshfl [vmem:[#allocation1] sm:$0xff pattern:$0x73625140]
  %v4840 = vld.sshfl [vmem:[#allocation1 + $0x20] sm:$0xff pattern:$0x73625140]
  %4841 = vst [vmem:[#allocation1] ss:$4 sm:$0xff] %v4596
  %4842 = vst [vmem:[%s4765] ss:$4 sm:$0xff] %v4597
  %4843 = vst [vmem:[%s4767] ss:$4 sm:$0xff] %v4598
  %4844 = vst [vmem:[%s4769] ss:$4 sm:$0xff] %v4599
  %4845 = vst [vmem:[%s4771] ss:$4 sm:$0xff] %v4600
  %4846 = vst [vmem:[%s4773] ss:$4 sm:$0xff] %v4601
  %4847 = vst [vmem:[%s4775] ss:$4 sm:$0xff] %v4602
  %4848 = vst [vmem:[%s4777] ss:$4 sm:$0xff] %v4603
  %v4849 = vld.sshfl [vmem:[#allocation1] sm:$0xff pattern:$0x73625140]
  %v4850 = vld.sshfl [vmem:[#allocation1 + $0x20] sm:$0xff pattern:$0x73625140]
  %4851 = vst [vmem:[#allocation1] ss:$4 sm:$0xff] %v4228
  %4852 = vst [vmem:[%s4765] ss:$4 sm:$0xff] %v4229
  %4853 = vst [vmem:[%s4767] ss:$4 sm:$0xff] %v4230
  %4854 = vst [vmem:[%s4769] ss:$4 sm:$0xff] %v4231
  %4855 = vst [vmem:[%s4771] ss:$4 sm:$0xff] %v4232
  %4856 = vst [vmem:[%s4773] ss:$4 sm:$0xff] %v4233
  %4857 = vst [vmem:[%s4775] ss:$4 sm:$0xff] %v4234
  %4858 = vst [vmem:[%s4777] ss:$4 sm:$0xff] %v4235
  %v4859 = vld.sshfl [vmem:[#allocation1] sm:$0xff pattern:$0x73625140]
  %v4860 = vld.sshfl [vmem:[#allocation1 + $0x20] sm:$0xff pattern:$0x73625140]
  %4861 = vst [vmem:[#allocation1] ss:$4 sm:$0xff] %v4604
  %4862 = vst [vmem:[%s4765] ss:$4 sm:$0xff] %v4605
  %4863 = vst [vmem:[%s4767] ss:$4 sm:$0xff] %v4606
  %4864 = vst [vmem:[%s4769] ss:$4 sm:$0xff] %v4607
  %4865 = vst [vmem:[%s4771] ss:$4 sm:$0xff] %v4608
  %4866 = vst [vmem:[%s4773] ss:$4 sm:$0xff] %v4609
  %4867 = vst [vmem:[%s4775] ss:$4 sm:$0xff] %v4610
  %4868 = vst [vmem:[%s4777] ss:$4 sm:$0xff] %v4611
  %v4869 = vld.sshfl [vmem:[#allocation1] sm:$0xff pattern:$0x73625140]
  %v4870 = vld.sshfl [vmem:[#allocation1 + $0x20] sm:$0xff pattern:$0x73625140]
  %4871 = vst [vmem:[#allocation1] ss:$4 sm:$0xff] %v4236
  %4872 = vst [vmem:[%s4765] ss:$4 sm:$0xff] %v4237
  %4873 = vst [vmem:[%s4767] ss:$4 sm:$0xff] %v4238
  %4874 = vst [vmem:[%s4769] ss:$4 sm:$0xff] %v4239
  %4875 = vst [vmem:[%s4771] ss:$4 sm:$0xff] %v4240
  %4876 = vst [vmem:[%s4773] ss:$4 sm:$0xff] %v4241
  %4877 = vst [vmem:[%s4775] ss:$4 sm:$0xff] %v4242
  %4878 = vst [vmem:[%s4777] ss:$4 sm:$0xff] %v4243
  %v4879 = vld.sshfl [vmem:[#allocation1] sm:$0xff pattern:$0x73625140]
  %v4880 = vld.sshfl [vmem:[#allocation1 + $0x20] sm:$0xff pattern:$0x73625140]
  %4881 = vst [vmem:[#allocation1] ss:$4 sm:$0xff] %v4612
  %4882 = vst [vmem:[%s4765] ss:$4 sm:$0xff] %v4613
  %4883 = vst [vmem:[%s4767] ss:$4 sm:$0xff] %v4614
  %4884 = vst [vmem:[%s4769] ss:$4 sm:$0xff] %v4615
  %4885 = vst [vmem:[%s4771] ss:$4 sm:$0xff] %v4616
  %4886 = vst [vmem:[%s4773] ss:$4 sm:$0xff] %v4617
  %4887 = vst [vmem:[%s4775] ss:$4 sm:$0xff] %v4618
  %4888 = vst [vmem:[%s4777] ss:$4 sm:$0xff] %v4619
  %v4889 = vld.sshfl [vmem:[#allocation1] sm:$0xff pattern:$0x73625140]
  %v4890 = vld.sshfl [vmem:[#allocation1 + $0x20] sm:$0xff pattern:$0x73625140]
  %4891 = vst [vmem:[#allocation1] ss:$4 sm:$0xff] %v4244
  %4892 = vst [vmem:[%s4765] ss:$4 sm:$0xff] %v4245
  %4893 = vst [vmem:[%s4767] ss:$4 sm:$0xff] %v4246
  %4894 = vst [vmem:[%s4769] ss:$4 sm:$0xff] %v4247
  %4895 = vst [vmem:[%s4771] ss:$4 sm:$0xff] %v4248
  %4896 = vst [vmem:[%s4773] ss:$4 sm:$0xff] %v4249
  %4897 = vst [vmem:[%s4775] ss:$4 sm:$0xff] %v4250
  %4898 = vst [vmem:[%s4777] ss:$4 sm:$0xff] %v4251
  %v4899 = vld.sshfl [vmem:[#allocation1] sm:$0xff pattern:$0x73625140]
  %v4900 = vld.sshfl [vmem:[#allocation1 + $0x20] sm:$0xff pattern:$0x73625140]
  %4901 = vst [vmem:[#allocation1] ss:$4 sm:$0xff] %v4620
  %4902 = vst [vmem:[%s4765] ss:$4 sm:$0xff] %v4621
  %4903 = vst [vmem:[%s4767] ss:$4 sm:$0xff] %v4622
  %4904 = vst [vmem:[%s4769] ss:$4 sm:$0xff] %v4623
  %4905 = vst [vmem:[%s4771] ss:$4 sm:$0xff] %v4624
  %4906 = vst [vmem:[%s4773] ss:$4 sm:$0xff] %v4625
  %4907 = vst [vmem:[%s4775] ss:$4 sm:$0xff] %v4626
  %4908 = vst [vmem:[%s4777] ss:$4 sm:$0xff] %v4627
  %v4909 = vld.sshfl [vmem:[#allocation1] sm:$0xff pattern:$0x73625140]
  %v4910 = vld.sshfl [vmem:[#allocation1 + $0x20] sm:$0xff pattern:$0x73625140]
  %4911 = vst [vmem:[#allocation1] ss:$4 sm:$0xff] %v4252
  %4912 = vst [vmem:[%s4765] ss:$4 sm:$0xff] %v4253
  %4913 = vst [vmem:[%s4767] ss:$4 sm:$0xff] %v4254
  %4914 = vst [vmem:[%s4769] ss:$4 sm:$0xff] %v4255
  %4915 = vst [vmem:[%s4771] ss:$4 sm:$0xff] %v4256
  %4916 = vst [vmem:[%s4773] ss:$4 sm:$0xff] %v4257
  %4917 = vst [vmem:[%s4775] ss:$4 sm:$0xff] %v4258
  %4918 = vst [vmem:[%s4777] ss:$4 sm:$0xff] %v4259
  %v4919 = vld.sshfl [vmem:[#allocation1] sm:$0xff pattern:$0x73625140]
  %v4920 = vld.sshfl [vmem:[#allocation1 + $0x20] sm:$0xff pattern:$0x73625140]
  %4921 = vst [vmem:[#allocation1] ss:$4 sm:$0xff] %v4628
  %4922 = vst [vmem:[%s4765] ss:$4 sm:$0xff] %v4629
  %4923 = vst [vmem:[%s4767] ss:$4 sm:$0xff] %v4630
  %4924 = vst [vmem:[%s4769] ss:$4 sm:$0xff] %v4631
  %4925 = vst [vmem:[%s4771] ss:$4 sm:$0xff] %v4632
  %4926 = vst [vmem:[%s4773] ss:$4 sm:$0xff] %v4633
  %4927 = vst [vmem:[%s4775] ss:$4 sm:$0xff] %v4634
  %4928 = vst [vmem:[%s4777] ss:$4 sm:$0xff] %v4635
  %v4929 = vld.sshfl [vmem:[#allocation1] sm:$0xff pattern:$0x73625140]
  %v4930 = vld.sshfl [vmem:[#allocation1 + $0x20] sm:$0xff pattern:$0x73625140]
  %vm4963 = vcmask 48128
  %4964 = vst.msk [vmem:[%s7] sm:$0xff] %vm4963, %v4779
  %4965 = vst.msk [vmem:[%s7 + $0x8] sm:$0xff] %vm4963, %v4780
  %4966 = vst.msk [vmem:[%s7 + $0x10] sm:$0xff] %vm4963, %v4789
  %4967 = vst.msk [vmem:[%s7 + $0x18] sm:$0xff] %vm4963, %v4790
  %4968 = vst.msk [vmem:[%s7 + $0x20] sm:$0xff] %vm4963, %v4799
  %4969 = vst.msk [vmem:[%s7 + $0x28] sm:$0xff] %vm4963, %v4800
  %4970 = vst.msk [vmem:[%s7 + $0x30] sm:$0xff] %vm4963, %v4809
  %4971 = vst.msk [vmem:[%s7 + $0x38] sm:$0xff] %vm4963, %v4810
  %4972 = vst.msk [vmem:[%s7 + $0x40] sm:$0xff] %vm4963, %v4819
  %4973 = vst.msk [vmem:[%s7 + $0x48] sm:$0xff] %vm4963, %v4820
  %4974 = vst.msk [vmem:[%s7 + $0x50] sm:$0xff] %vm4963, %v4829
  %4975 = vst.msk [vmem:[%s7 + $0x58] sm:$0xff] %vm4963, %v4830
  %4976 = vst.msk [vmem:[%s7 + $0x60] sm:$0xff] %vm4963, %v4839
  %4977 = vst.msk [vmem:[%s7 + $0x68] sm:$0xff] %vm4963, %v4840
  %4978 = vst.msk [vmem:[%s7 + $0x70] sm:$0xff] %vm4963, %v4849
  %4979 = vst.msk [vmem:[%s7 + $0x78] sm:$0xff] %vm4963, %v4850
  %4980 = vst.msk [vmem:[%s7 + $0x80] sm:$0xff] %vm4963, %v4859
  %4981 = vst.msk [vmem:[%s7 + $0x88] sm:$0xff] %vm4963, %v4860
  %4982 = vst.msk [vmem:[%s7 + $0x90] sm:$0xff] %vm4963, %v4869
  %4983 = vst.msk [vmem:[%s7 + $0x98] sm:$0xff] %vm4963, %v4870
  %4984 = vst.msk [vmem:[%s7 + $0xa0] sm:$0xff] %vm4963, %v4879
  %4985 = vst.msk [vmem:[%s7 + $0xa8] sm:$0xff] %vm4963, %v4880
  %4986 = vst.msk [vmem:[%s7 + $0xb0] sm:$0xff] %vm4963, %v4889
  %4987 = vst.msk [vmem:[%s7 + $0xb8] sm:$0xff] %vm4963, %v4890
  %4988 = vst.msk [vmem:[%s7 + $0xc0] sm:$0xff] %vm4963, %v4899
  %4989 = vst.msk [vmem:[%s7 + $0xc8] sm:$0xff] %vm4963, %v4900
  %4990 = vst.msk [vmem:[%s7 + $0xd0] sm:$0xff] %vm4963, %v4909
  %4991 = vst.msk [vmem:[%s7 + $0xd8] sm:$0xff] %vm4963, %v4910
  %4992 = vst.msk [vmem:[%s7 + $0xe0] sm:$0xff] %vm4963, %v4919
  %4993 = vst.msk [vmem:[%s7 + $0xe8] sm:$0xff] %vm4963, %v4920
  %4994 = vst.msk [vmem:[%s7 + $0xf0] sm:$0xff] %vm4963, %v4929
  %4995 = vst.msk [vmem:[%s7 + $0xf8] sm:$0xff] %vm4963, %v4930
  // Predicated region
  $region30: #{rn_forward.1} parent=0 // pred_check
    _
  $region31: #{rn_forward.1} parent=0 // pred_check_branch
    %4997 = sbr.rel (0) target = $region33
  $region32: #{rn_forward.1} parent=0 // pred_region
    _
  $region33: #{rn_forward.1} parent=0 // pred_fallthru
    _
  // Predicated region
  $region34: #{rn_forward.1} parent=0 // pred_check
    _
  $region35: #{rn_forward.1} parent=0 // pred_check_branch
    %4999 = sbr.rel (0) target = $region37
  $region36: #{rn_forward.1} parent=0 // pred_region
    _
  $region37: #{rn_forward.1} parent=0 // pred_fallthru
    _

</llo_original>
